<compile_context>
chip_gen: v6e
topology: v6e:2x2x1
jax: 0.10.0
libtpu: 0.0.40
codegen_flags: <defaults>
</compile_context>

<pallas_src>
import functools

import jax
import jax.numpy as jnp
from jax.experimental import pallas as pl
from jax.experimental.pallas import tpu as pltpu

LANES = 128  # TPU lane width; all channel / contraction dims padded to this.


# ----------------------------- fused kernel ------------------------------- #
def _fused_net_kernel(xcol1_ref, w1_ref, b1_ref, w2_ref, b2_ref, out_ref,
                      a1_ref, *, ho1, ho2, wo2, k2):
    """One batch element per grid step.

    xcol1_ref: (ho1, wo1, 128)   conv1 im2col patches, (kh,kw,cin) zero-padded
    w1_ref:    (128, 128)        conv1 weights, rows=K1(75), cols=Cout1(10), padded
    b1_ref:    (1, 128)
    w2_ref:    (k2*k2, 128, 128) conv2 weights per (kh,kw) tap, (Cin1, Cout2) padded
    b2_ref:    (1, 128)
    out_ref:   (ho2*wo2, 128)    lane-dense conv2 output slab
    a1_ref:    (ho1, wo1, 128)   VMEM scratch holding the conv1 activation
    """
    w1 = w1_ref[...]
    b1 = b1_ref[...]

    # conv1 + ReLU: one output row (wo1, 128) at a time -> keeps every operand
    # lane-dense and avoids sublane-crossing reshapes. Padded output channels
    # come out exactly zero (zero weight cols / zero bias pad), which makes the
    # 128-wide conv2 contraction below exact.
    for oh in range(ho1):
        row = jnp.dot(xcol1_ref[oh], w1, preferred_element_type=jnp.float32)
        a1_ref[oh] = jnp.maximum(row + b1, 0.0)

    # conv2 + ReLU: accumulate the k2*k2 (kh,kw) taps straight out of the
    # VMEM-resident activation. Each (ho2, wo2, 128) patch reshapes
    # tile-trivially to (ho2*wo2, 128) because wo2 rows x 128 lanes are whole
    # (8,128) vreg tiles.
    m2 = ho2 * wo2
    acc = jnp.zeros((m2, LANES), jnp.float32)
    for kh in range(k2):
        for kw in range(k2):
            patch = a1_ref[kh:kh + ho2, kw:kw + wo2, :].reshape(m2, LANES)
            acc = acc + jnp.dot(patch, w2_ref[kh * k2 + kw],
                                preferred_element_type=jnp.float32)

    out_ref[...] = jnp.maximum(acc + b2_ref[...], 0.0).astype(out_ref.dtype)


# ------------------------------- wrapper ----------------------------------- #
def _pad_last(a, target):
    return jnp.pad(a, [(0, 0)] * (a.ndim - 1) + [(0, target - a.shape[-1])])


@jax.jit
def net_forward(params, x_nchw):
    """Forward pass matching the PyTorch Net. Input/output are NCHW (f32)."""
    w1, b1 = params["w1"], params["b1"]   # (5,5,3,10), (10,)
    w2, b2 = params["w2"], params["b2"]   # (5,5,10,20), (20,)
    N, _, H, W = x_nchw.shape
    K1, _, Cin, C1 = w1.shape
    K2, _, _, C2 = w2.shape
    ho1, wo1 = H - K1 + 1, W - K1 + 1
    ho2, wo2 = ho1 - K2 + 1, wo1 - K2 + 1
    m2 = ho2 * wo2

    # --- host-side (XLA) prep: NCHW->NHWC fused into the im2col gather ------
    x = jnp.transpose(x_nchw, (0, 2, 3, 1)).astype(jnp.float32)   # (N,H,W,Cin)
    patches = [x[:, kh:kh + ho1, kw:kw + wo1, :]
               for kh in range(K1) for kw in range(K1)]
    xcol1 = _pad_last(jnp.concatenate(patches, axis=-1), LANES)   # (N,ho1,wo1,128)

    # weights / biases packed once into lane-dense 128-wide slabs (zero pad).
    w1mat = jnp.zeros((LANES, LANES), jnp.float32)
    w1mat = w1mat.at[:K1 * K1 * Cin, :C1].set(w1.reshape(K1 * K1 * Cin, C1))
    b1row = _pad_last(b1.reshape(1, C1).astype(jnp.float32), LANES)
    w2slab = jnp.zeros((K2 * K2, LANES, LANES), jnp.float32)
    w2slab = w2slab.at[:, :C1, :C2].set(w2.reshape(K2 * K2, C1, C2))
    b2row = _pad_last(b2.reshape(1, C2).astype(jnp.float32), LANES)

    kernel = functools.partial(_fused_net_kernel,
                               ho1=ho1, ho2=ho2, wo2=wo2, k2=K2)

    out = pl.pallas_call(
        kernel,
        out_shape=jax.ShapeDtypeStruct((N, m2, LANES), jnp.float32),
        grid=(N,),
        in_specs=[
            pl.BlockSpec((None, ho1, wo1, LANES), lambda n: (n, 0, 0, 0)),
            pl.BlockSpec((LANES, LANES), lambda n: (0, 0)),
            pl.BlockSpec((1, LANES), lambda n: (0, 0)),
            pl.BlockSpec((K2 * K2, LANES, LANES), lambda n: (0, 0, 0)),
            pl.BlockSpec((1, LANES), lambda n: (0, 0)),
        ],
        out_specs=pl.BlockSpec((None, m2, LANES), lambda n: (n, 0, 0)),
        scratch_shapes=[pltpu.VMEM((ho1, wo1, LANES), jnp.float32)],
        compiler_params=pltpu.CompilerParams(
            dimension_semantics=("parallel",)),
    )(xcol1, w1mat, b1row, w2slab, b2row)

    # TODO(synk): nn.Dropout2d is stochastic channel dropout in training mode;
    # implemented here as eval-mode identity for determinism.
    out = out[:, :, :C2]                                   # drop lane padding
    return jnp.transpose(out, (0, 2, 1)).reshape(N, C2, ho2, wo2)   # -> NCHW


# ------------------------------- "Module" ---------------------------------- #
def init_params(key):
    k1, k2, k3, k4 = jax.random.split(key, 4)
    # conv1: Conv2d(3, 10, kernel_size=5); conv2: Conv2d(10, 20, kernel_size=5)
    # Stored HWIO: (KH, KW, Cin, Cout).
    w1 = jax.random.normal(k1, (5, 5, 3, 10), jnp.float32) * 0.1
    b1 = jax.random.normal(k2, (10,), jnp.float32) * 0.1
    w2 = jax.random.normal(k3, (5, 5, 10, 20), jnp.float32) * 0.1
    b2 = jax.random.normal(k4, (20,), jnp.float32) * 0.1
    return dict(w1=w1, b1=b1, w2=w2, b2=b2)


# --------------------------- pure-JAX reference ----------------------------- #
def _ref_forward(params, x_nchw):
    dn = jax.lax.conv_dimension_numbers(x_nchw.shape, (10, 3, 5, 5),
                                        ("NCHW", "OIHW", "NCHW"))
    w1 = jnp.transpose(params["w1"], (3, 2, 0, 1))  # HWIO -> OIHW
    w2 = jnp.transpose(params["w2"], (3, 2, 0, 1))
    x = jax.lax.conv_general_dilated(x_nchw, w1, (1, 1), "VALID",
                                     dimension_numbers=dn)
    x = jnp.maximum(x + params["b1"][None, :, None, None], 0.0)
    dn2 = jax.lax.conv_dimension_numbers(x.shape, (20, 10, 5, 5),
                                         ("NCHW", "OIHW", "NCHW"))
    x = jax.lax.conv_general_dilated(x, w2, (1, 1), "VALID",
                                     dimension_numbers=dn2)
    x = jnp.maximum(x + params["b2"][None, :, None, None], 0.0)
    return x


if __name__ == "__main__":
    key = jax.random.PRNGKey(0)
    pkey, xkey = jax.random.split(key)
    params = init_params(pkey)

    # Input (NCHW, like PyTorch): batch=2, channels=3, spatial=16x16.
    x = jax.random.normal(xkey, (2, 3, 16, 16), jnp.float32)

    out = jax.block_until_ready(net_forward(params, x))
    assert out.shape == (2, 20, 8, 8), out.shape

    ref = _ref_forward(params, x)
    assert jnp.allclose(out, ref, atol=1e-3, rtol=1e-3), "mismatch vs reference"

    print("KERNEL_OK")
</pallas_src>

<mosaic_0001>
module attributes {stable_mosaic.version = 11 : i64} {
  func.func @_fused_net_kernel(%arg0: i32, %arg1: memref<1x12x12x128xf32, #tpu.memory_space<vmem>>, %arg2: memref<128x128xf32, #tpu.memory_space<vmem>>, %arg3: memref<1x128xf32, #tpu.memory_space<vmem>>, %arg4: memref<25x128x128xf32, #tpu.memory_space<vmem>>, %arg5: memref<1x128xf32, #tpu.memory_space<vmem>>, %arg6: memref<1x64x128xf32, #tpu.memory_space<vmem>>, %arg7: memref<12x12x128xf32, #tpu.memory_space<vmem>>) attributes {dimension_semantics = [#tpu.dimension_semantics<parallel>], iteration_bounds = array<i64: 2>, scalar_prefetch = 0 : i64, scratch_operands = 1 : i64, tpu.core_type = #tpu.core_type<tc>, window_params = [{transform_indices = @transform_0, window_bounds = array<i64: 1, 12, 12, 128>}, {pipeline_mode = #tpu.pipeline_mode<synchronous>, transform_indices = @transform_1, window_bounds = array<i64: 128, 128>}, {pipeline_mode = #tpu.pipeline_mode<synchronous>, transform_indices = @transform_2, window_bounds = array<i64: 1, 128>}, {pipeline_mode = #tpu.pipeline_mode<synchronous>, transform_indices = @transform_3, window_bounds = array<i64: 25, 128, 128>}, {pipeline_mode = #tpu.pipeline_mode<synchronous>, transform_indices = @transform_4, window_bounds = array<i64: 1, 128>}, {transform_indices = @transform_5, window_bounds = array<i64: 1, 64, 128>}]} {
    %c0 = arith.constant 0 : index
    %c0_0 = arith.constant 0 : index
    %0 = vector.load %arg2[%c0, %c0_0] : memref<128x128xf32, #tpu.memory_space<vmem>>, vector<128x128xf32>
    %c0_1 = arith.constant 0 : index
    %c0_2 = arith.constant 0 : index
    %1 = vector.load %arg3[%c0_1, %c0_2] : memref<1x128xf32, #tpu.memory_space<vmem>>, vector<1x128xf32>
    %c0_3 = arith.constant 0 : index
    %c0_4 = arith.constant 0 : index
    %c0_5 = arith.constant 0 : index
    %c0_6 = arith.constant 0 : index
    %2 = vector.load %arg1[%c0_3, %c0_4, %c0_5, %c0_6] : memref<1x12x12x128xf32, #tpu.memory_space<vmem>>, vector<1x1x12x128xf32>
    %3 = vector.shape_cast %2 : vector<1x1x12x128xf32> to vector<12x128xf32>
    %cst = arith.constant dense<0.000000e+00> : vector<12x128xf32>
    %4 = tpu.matmul %3, %0, %cst {dimension_numbers = #tpu.dot_dimension_numbers<[1], [0], [0], [1], [0, 0, 1, 1], [], []>} : vector<12x128xf32>, vector<128x128xf32>, vector<12x128xf32> -> vector<12x128xf32>
    %5 = vector.broadcast %1 : vector<1x128xf32> to vector<12x128xf32>
    %6 = arith.addf %4, %5 : vector<12x128xf32>
    %cst_7 = arith.constant 0.000000e+00 : f32
    %7 = vector.broadcast %cst_7 : f32 to vector<12x128xf32>
    %8 = arith.maximumf %6, %7 : vector<12x128xf32>
    %c0_8 = arith.constant 0 : index
    %c0_9 = arith.constant 0 : index
    %c0_10 = arith.constant 0 : index
    %9 = vector.load %arg7[%c0_8, %c0_9, %c0_10] : memref<12x12x128xf32, #tpu.memory_space<vmem>>, vector<1x12x128xf32>
    %10 = vector.shape_cast %9 : vector<1x12x128xf32> to vector<12x128xf32>
    %11 = vector.shape_cast %8 : vector<12x128xf32> to vector<1x12x128xf32>
    tpu.vector_store %arg7[%c0_8, %c0_9, %c0_10], %11 {strides = array<i32>} : memref<12x12x128xf32, #tpu.memory_space<vmem>>, vector<1x12x128xf32>,
    %c0_11 = arith.constant 0 : index
    %c1 = arith.constant 1 : index
    %c0_12 = arith.constant 0 : index
    %c0_13 = arith.constant 0 : index
    %12 = vector.load %arg1[%c0_11, %c1, %c0_12, %c0_13] : memref<1x12x12x128xf32, #tpu.memory_space<vmem>>, vector<1x1x12x128xf32>
    %13 = vector.shape_cast %12 : vector<1x1x12x128xf32> to vector<12x128xf32>
    %cst_14 = arith.constant dense<0.000000e+00> : vector<12x128xf32>
    %14 = tpu.matmul %13, %0, %cst_14 {dimension_numbers = #tpu.dot_dimension_numbers<[1], [0], [0], [1], [0, 0, 1, 1], [], []>} : vector<12x128xf32>, vector<128x128xf32>, vector<12x128xf32> -> vector<12x128xf32>
    %15 = vector.broadcast %1 : vector<1x128xf32> to vector<12x128xf32>
    %16 = arith.addf %14, %15 : vector<12x128xf32>
    %cst_15 = arith.constant 0.000000e+00 : f32
    %17 = vector.broadcast %cst_15 : f32 to vector<12x128xf32>
    %18 = arith.maximumf %16, %17 : vector<12x128xf32>
    %c1_16 = arith.constant 1 : index
    %c0_17 = arith.constant 0 : index
    %c0_18 = arith.constant 0 : index
    %19 = vector.load %arg7[%c1_16, %c0_17, %c0_18] : memref<12x12x128xf32, #tpu.memory_space<vmem>>, vector<1x12x128xf32>
    %20 = vector.shape_cast %19 : vector<1x12x128xf32> to vector<12x128xf32>
    %21 = vector.shape_cast %18 : vector<12x128xf32> to vector<1x12x128xf32>
    tpu.vector_store %arg7[%c1_16, %c0_17, %c0_18], %21 {strides = array<i32>} : memref<12x12x128xf32, #tpu.memory_space<vmem>>, vector<1x12x128xf32>,
    %c0_19 = arith.constant 0 : index
    %c2 = arith.constant 2 : index
    %c0_20 = arith.constant 0 : index
    %c0_21 = arith.constant 0 : index
    %22 = vector.load %arg1[%c0_19, %c2, %c0_20, %c0_21] : memref<1x12x12x128xf32, #tpu.memory_space<vmem>>, vector<1x1x12x128xf32>
    %23 = vector.shape_cast %22 : vector<1x1x12x128xf32> to vector<12x128xf32>
    %cst_22 = arith.constant dense<0.000000e+00> : vector<12x128xf32>
    %24 = tpu.matmul %23, %0, %cst_22 {dimension_numbers = #tpu.dot_dimension_numbers<[1], [0], [0], [1], [0, 0, 1, 1], [], []>} : vector<12x128xf32>, vector<128x128xf32>, vector<12x128xf32> -> vector<12x128xf32>
    %25 = vector.broadcast %1 : vector<1x128xf32> to vector<12x128xf32>
    %26 = arith.addf %24, %25 : vector<12x128xf32>
    %cst_23 = arith.constant 0.000000e+00 : f32
    %27 = vector.broadcast %cst_23 : f32 to vector<12x128xf32>
    %28 = arith.maximumf %26, %27 : vector<12x128xf32>
    %c2_24 = arith.constant 2 : index
    %c0_25 = arith.constant 0 : index
    %c0_26 = arith.constant 0 : index
    %29 = vector.load %arg7[%c2_24, %c0_25, %c0_26] : memref<12x12x128xf32, #tpu.memory_space<vmem>>, vector<1x12x128xf32>
    %30 = vector.shape_cast %29 : vector<1x12x128xf32> to vector<12x128xf32>
    %31 = vector.shape_cast %28 : vector<12x128xf32> to vector<1x12x128xf32>
    tpu.vector_store %arg7[%c2_24, %c0_25, %c0_26], %31 {strides = array<i32>} : memref<12x12x128xf32, #tpu.memory_space<vmem>>, vector<1x12x128xf32>,
    %c0_27 = arith.constant 0 : index
    %c3 = arith.constant 3 : index
    %c0_28 = arith.constant 0 : index
    %c0_29 = arith.constant 0 : index
    %32 = vector.load %arg1[%c0_27, %c3, %c0_28, %c0_29] : memref<1x12x12x128xf32, #tpu.memory_space<vmem>>, vector<1x1x12x128xf32>
    %33 = vector.shape_cast %32 : vector<1x1x12x128xf32> to vector<12x128xf32>
    %cst_30 = arith.constant dense<0.000000e+00> : vector<12x128xf32>
    %34 = tpu.matmul %33, %0, %cst_30 {dimension_numbers = #tpu.dot_dimension_numbers<[1], [0], [0], [1], [0, 0, 1, 1], [], []>} : vector<12x128xf32>, vector<128x128xf32>, vector<12x128xf32> -> vector<12x128xf32>
    %35 = vector.broadcast %1 : vector<1x128xf32> to vector<12x128xf32>
    %36 = arith.addf %34, %35 : vector<12x128xf32>
    %cst_31 = arith.constant 0.000000e+00 : f32
    %37 = vector.broadcast %cst_31 : f32 to vector<12x128xf32>
    %38 = arith.maximumf %36, %37 : vector<12x128xf32>
    %c3_32 = arith.constant 3 : index
    %c0_33 = arith.constant 0 : index
    %c0_34 = arith.constant 0 : index
    %39 = vector.load %arg7[%c3_32, %c0_33, %c0_34] : memref<12x12x128xf32, #tpu.memory_space<vmem>>, vector<1x12x128xf32>
    %40 = vector.shape_cast %39 : vector<1x12x128xf32> to vector<12x128xf32>
    %41 = vector.shape_cast %38 : vector<12x128xf32> to vector<1x12x128xf32>
    tpu.vector_store %arg7[%c3_32, %c0_33, %c0_34], %41 {strides = array<i32>} : memref<12x12x128xf32, #tpu.memory_space<vmem>>, vector<1x12x128xf32>,
    %c0_35 = arith.constant 0 : index
    %c4 = arith.constant 4 : index
    %c0_36 = arith.constant 0 : index
    %c0_37 = arith.constant 0 : index
    %42 = vector.load %arg1[%c0_35, %c4, %c0_36, %c0_37] : memref<1x12x12x128xf32, #tpu.memory_space<vmem>>, vector<1x1x12x128xf32>
    %43 = vector.shape_cast %42 : vector<1x1x12x128xf32> to vector<12x128xf32>
    %cst_38 = arith.constant dense<0.000000e+00> : vector<12x128xf32>
    %44 = tpu.matmul %43, %0, %cst_38 {dimension_numbers = #tpu.dot_dimension_numbers<[1], [0], [0], [1], [0, 0, 1, 1], [], []>} : vector<12x128xf32>, vector<128x128xf32>, vector<12x128xf32> -> vector<12x128xf32>
    %45 = vector.broadcast %1 : vector<1x128xf32> to vector<12x128xf32>
    %46 = arith.addf %44, %45 : vector<12x128xf32>
    %cst_39 = arith.constant 0.000000e+00 : f32
    %47 = vector.broadcast %cst_39 : f32 to vector<12x128xf32>
    %48 = arith.maximumf %46, %47 : vector<12x128xf32>
    %c4_40 = arith.constant 4 : index
    %c0_41 = arith.constant 0 : index
    %c0_42 = arith.constant 0 : index
    %49 = vector.load %arg7[%c4_40, %c0_41, %c0_42] : memref<12x12x128xf32, #tpu.memory_space<vmem>>, vector<1x12x128xf32>
    %50 = vector.shape_cast %49 : vector<1x12x128xf32> to vector<12x128xf32>
    %51 = vector.shape_cast %48 : vector<12x128xf32> to vector<1x12x128xf32>
    tpu.vector_store %arg7[%c4_40, %c0_41, %c0_42], %51 {strides = array<i32>} : memref<12x12x128xf32, #tpu.memory_space<vmem>>, vector<1x12x128xf32>,
    %c0_43 = arith.constant 0 : index
    %c5 = arith.constant 5 : index
    %c0_44 = arith.constant 0 : index
    %c0_45 = arith.constant 0 : index
    %52 = vector.load %arg1[%c0_43, %c5, %c0_44, %c0_45] : memref<1x12x12x128xf32, #tpu.memory_space<vmem>>, vector<1x1x12x128xf32>
    %53 = vector.shape_cast %52 : vector<1x1x12x128xf32> to vector<12x128xf32>
    %cst_46 = arith.constant dense<0.000000e+00> : vector<12x128xf32>
    %54 = tpu.matmul %53, %0, %cst_46 {dimension_numbers = #tpu.dot_dimension_numbers<[1], [0], [0], [1], [0, 0, 1, 1], [], []>} : vector<12x128xf32>, vector<128x128xf32>, vector<12x128xf32> -> vector<12x128xf32>
    %55 = vector.broadcast %1 : vector<1x128xf32> to vector<12x128xf32>
    %56 = arith.addf %54, %55 : vector<12x128xf32>
    %cst_47 = arith.constant 0.000000e+00 : f32
    %57 = vector.broadcast %cst_47 : f32 to vector<12x128xf32>
    %58 = arith.maximumf %56, %57 : vector<12x128xf32>
    %c5_48 = arith.constant 5 : index
    %c0_49 = arith.constant 0 : index
    %c0_50 = arith.constant 0 : index
    %59 = vector.load %arg7[%c5_48, %c0_49, %c0_50] : memref<12x12x128xf32, #tpu.memory_space<vmem>>, vector<1x12x128xf32>
    %60 = vector.shape_cast %59 : vector<1x12x128xf32> to vector<12x128xf32>
    %61 = vector.shape_cast %58 : vector<12x128xf32> to vector<1x12x128xf32>
    tpu.vector_store %arg7[%c5_48, %c0_49, %c0_50], %61 {strides = array<i32>} : memref<12x12x128xf32, #tpu.memory_space<vmem>>, vector<1x12x128xf32>,
    %c0_51 = arith.constant 0 : index
    %c6 = arith.constant 6 : index
    %c0_52 = arith.constant 0 : index
    %c0_53 = arith.constant 0 : index
    %62 = vector.load %arg1[%c0_51, %c6, %c0_52, %c0_53] : memref<1x12x12x128xf32, #tpu.memory_space<vmem>>, vector<1x1x12x128xf32>
    %63 = vector.shape_cast %62 : vector<1x1x12x128xf32> to vector<12x128xf32>
    %cst_54 = arith.constant dense<0.000000e+00> : vector<12x128xf32>
    %64 = tpu.matmul %63, %0, %cst_54 {dimension_numbers = #tpu.dot_dimension_numbers<[1], [0], [0], [1], [0, 0, 1, 1], [], []>} : vector<12x128xf32>, vector<128x128xf32>, vector<12x128xf32> -> vector<12x128xf32>
    %65 = vector.broadcast %1 : vector<1x128xf32> to vector<12x128xf32>
    %66 = arith.addf %64, %65 : vector<12x128xf32>
    %cst_55 = arith.constant 0.000000e+00 : f32
    %67 = vector.broadcast %cst_55 : f32 to vector<12x128xf32>
    %68 = arith.maximumf %66, %67 : vector<12x128xf32>
    %c6_56 = arith.constant 6 : index
    %c0_57 = arith.constant 0 : index
    %c0_58 = arith.constant 0 : index
    %69 = vector.load %arg7[%c6_56, %c0_57, %c0_58] : memref<12x12x128xf32, #tpu.memory_space<vmem>>, vector<1x12x128xf32>
    %70 = vector.shape_cast %69 : vector<1x12x128xf32> to vector<12x128xf32>
    %71 = vector.shape_cast %68 : vector<12x128xf32> to vector<1x12x128xf32>
    tpu.vector_store %arg7[%c6_56, %c0_57, %c0_58], %71 {strides = array<i32>} : memref<12x12x128xf32, #tpu.memory_space<vmem>>, vector<1x12x128xf32>,
    %c0_59 = arith.constant 0 : index
    %c7 = arith.constant 7 : index
    %c0_60 = arith.constant 0 : index
    %c0_61 = arith.constant 0 : index
    %72 = vector.load %arg1[%c0_59, %c7, %c0_60, %c0_61] : memref<1x12x12x128xf32, #tpu.memory_space<vmem>>, vector<1x1x12x128xf32>
    %73 = vector.shape_cast %72 : vector<1x1x12x128xf32> to vector<12x128xf32>
    %cst_62 = arith.constant dense<0.000000e+00> : vector<12x128xf32>
    %74 = tpu.matmul %73, %0, %cst_62 {dimension_numbers = #tpu.dot_dimension_numbers<[1], [0], [0], [1], [0, 0, 1, 1], [], []>} : vector<12x128xf32>, vector<128x128xf32>, vector<12x128xf32> -> vector<12x128xf32>
    %75 = vector.broadcast %1 : vector<1x128xf32> to vector<12x128xf32>
    %76 = arith.addf %74, %75 : vector<12x128xf32>
    %cst_63 = arith.constant 0.000000e+00 : f32
    %77 = vector.broadcast %cst_63 : f32 to vector<12x128xf32>
    %78 = arith.maximumf %76, %77 : vector<12x128xf32>
    %c7_64 = arith.constant 7 : index
    %c0_65 = arith.constant 0 : index
    %c0_66 = arith.constant 0 : index
    %79 = vector.load %arg7[%c7_64, %c0_65, %c0_66] : memref<12x12x128xf32, #tpu.memory_space<vmem>>, vector<1x12x128xf32>
    %80 = vector.shape_cast %79 : vector<1x12x128xf32> to vector<12x128xf32>
    %81 = vector.shape_cast %78 : vector<12x128xf32> to vector<1x12x128xf32>
    tpu.vector_store %arg7[%c7_64, %c0_65, %c0_66], %81 {strides = array<i32>} : memref<12x12x128xf32, #tpu.memory_space<vmem>>, vector<1x12x128xf32>,
    %c0_67 = arith.constant 0 : index
    %c8 = arith.constant 8 : index
    %c0_68 = arith.constant 0 : index
    %c0_69 = arith.constant 0 : index
    %82 = vector.load %arg1[%c0_67, %c8, %c0_68, %c0_69] : memref<1x12x12x128xf32, #tpu.memory_space<vmem>>, vector<1x1x12x128xf32>
    %83 = vector.shape_cast %82 : vector<1x1x12x128xf32> to vector<12x128xf32>
    %cst_70 = arith.constant dense<0.000000e+00> : vector<12x128xf32>
    %84 = tpu.matmul %83, %0, %cst_70 {dimension_numbers = #tpu.dot_dimension_numbers<[1], [0], [0], [1], [0, 0, 1, 1], [], []>} : vector<12x128xf32>, vector<128x128xf32>, vector<12x128xf32> -> vector<12x128xf32>
    %85 = vector.broadcast %1 : vector<1x128xf32> to vector<12x128xf32>
    %86 = arith.addf %84, %85 : vector<12x128xf32>
    %cst_71 = arith.constant 0.000000e+00 : f32
    %87 = vector.broadcast %cst_71 : f32 to vector<12x128xf32>
    %88 = arith.maximumf %86, %87 : vector<12x128xf32>
    %c8_72 = arith.constant 8 : index
    %c0_73 = arith.constant 0 : index
    %c0_74 = arith.constant 0 : index
    %89 = vector.load %arg7[%c8_72, %c0_73, %c0_74] : memref<12x12x128xf32, #tpu.memory_space<vmem>>, vector<1x12x128xf32>
    %90 = vector.shape_cast %89 : vector<1x12x128xf32> to vector<12x128xf32>
    %91 = vector.shape_cast %88 : vector<12x128xf32> to vector<1x12x128xf32>
    tpu.vector_store %arg7[%c8_72, %c0_73, %c0_74], %91 {strides = array<i32>} : memref<12x12x128xf32, #tpu.memory_space<vmem>>, vector<1x12x128xf32>,
    %c0_75 = arith.constant 0 : index
    %c9 = arith.constant 9 : index
    %c0_76 = arith.constant 0 : index
    %c0_77 = arith.constant 0 : index
    %92 = vector.load %arg1[%c0_75, %c9, %c0_76, %c0_77] : memref<1x12x12x128xf32, #tpu.memory_space<vmem>>, vector<1x1x12x128xf32>
    %93 = vector.shape_cast %92 : vector<1x1x12x128xf32> to vector<12x128xf32>
    %cst_78 = arith.constant dense<0.000000e+00> : vector<12x128xf32>
    %94 = tpu.matmul %93, %0, %cst_78 {dimension_numbers = #tpu.dot_dimension_numbers<[1], [0], [0], [1], [0, 0, 1, 1], [], []>} : vector<12x128xf32>, vector<128x128xf32>, vector<12x128xf32> -> vector<12x128xf32>
    %95 = vector.broadcast %1 : vector<1x128xf32> to vector<12x128xf32>
    %96 = arith.addf %94, %95 : vector<12x128xf32>
    %cst_79 = arith.constant 0.000000e+00 : f32
    %97 = vector.broadcast %cst_79 : f32 to vector<12x128xf32>
    %98 = arith.maximumf %96, %97 : vector<12x128xf32>
    %c9_80 = arith.constant 9 : index
    %c0_81 = arith.constant 0 : index
    %c0_82 = arith.constant 0 : index
    %99 = vector.load %arg7[%c9_80, %c0_81, %c0_82] : memref<12x12x128xf32, #tpu.memory_space<vmem>>, vector<1x12x128xf32>
    %100 = vector.shape_cast %99 : vector<1x12x128xf32> to vector<12x128xf32>
    %101 = vector.shape_cast %98 : vector<12x128xf32> to vector<1x12x128xf32>
    tpu.vector_store %arg7[%c9_80, %c0_81, %c0_82], %101 {strides = array<i32>} : memref<12x12x128xf32, #tpu.memory_space<vmem>>, vector<1x12x128xf32>,
    %c0_83 = arith.constant 0 : index
    %c10 = arith.constant 10 : index
    %c0_84 = arith.constant 0 : index
    %c0_85 = arith.constant 0 : index
    %102 = vector.load %arg1[%c0_83, %c10, %c0_84, %c0_85] : memref<1x12x12x128xf32, #tpu.memory_space<vmem>>, vector<1x1x12x128xf32>
    %103 = vector.shape_cast %102 : vector<1x1x12x128xf32> to vector<12x128xf32>
    %cst_86 = arith.constant dense<0.000000e+00> : vector<12x128xf32>
    %104 = tpu.matmul %103, %0, %cst_86 {dimension_numbers = #tpu.dot_dimension_numbers<[1], [0], [0], [1], [0, 0, 1, 1], [], []>} : vector<12x128xf32>, vector<128x128xf32>, vector<12x128xf32> -> vector<12x128xf32>
    %105 = vector.broadcast %1 : vector<1x128xf32> to vector<12x128xf32>
    %106 = arith.addf %104, %105 : vector<12x128xf32>
    %cst_87 = arith.constant 0.000000e+00 : f32
    %107 = vector.broadcast %cst_87 : f32 to vector<12x128xf32>
    %108 = arith.maximumf %106, %107 : vector<12x128xf32>
    %c10_88 = arith.constant 10 : index
    %c0_89 = arith.constant 0 : index
    %c0_90 = arith.constant 0 : index
    %109 = vector.load %arg7[%c10_88, %c0_89, %c0_90] : memref<12x12x128xf32, #tpu.memory_space<vmem>>, vector<1x12x128xf32>
    %110 = vector.shape_cast %109 : vector<1x12x128xf32> to vector<12x128xf32>
    %111 = vector.shape_cast %108 : vector<12x128xf32> to vector<1x12x128xf32>
    tpu.vector_store %arg7[%c10_88, %c0_89, %c0_90], %111 {strides = array<i32>} : memref<12x12x128xf32, #tpu.memory_space<vmem>>, vector<1x12x128xf32>,
    %c0_91 = arith.constant 0 : index
    %c11 = arith.constant 11 : index
    %c0_92 = arith.constant 0 : index
    %c0_93 = arith.constant 0 : index
    %112 = vector.load %arg1[%c0_91, %c11, %c0_92, %c0_93] : memref<1x12x12x128xf32, #tpu.memory_space<vmem>>, vector<1x1x12x128xf32>
    %113 = vector.shape_cast %112 : vector<1x1x12x128xf32> to vector<12x128xf32>
    %cst_94 = arith.constant dense<0.000000e+00> : vector<12x128xf32>
    %114 = tpu.matmul %113, %0, %cst_94 {dimension_numbers = #tpu.dot_dimension_numbers<[1], [0], [0], [1], [0, 0, 1, 1], [], []>} : vector<12x128xf32>, vector<128x128xf32>, vector<12x128xf32> -> vector<12x128xf32>
    %115 = vector.broadcast %1 : vector<1x128xf32> to vector<12x128xf32>
    %116 = arith.addf %114, %115 : vector<12x128xf32>
    %cst_95 = arith.constant 0.000000e+00 : f32
    %117 = vector.broadcast %cst_95 : f32 to vector<12x128xf32>
    %118 = arith.maximumf %116, %117 : vector<12x128xf32>
    %c11_96 = arith.constant 11 : index
    %c0_97 = arith.constant 0 : index
    %c0_98 = arith.constant 0 : index
    %119 = vector.load %arg7[%c11_96, %c0_97, %c0_98] : memref<12x12x128xf32, #tpu.memory_space<vmem>>, vector<1x12x128xf32>
    %120 = vector.shape_cast %119 : vector<1x12x128xf32> to vector<12x128xf32>
    %121 = vector.shape_cast %118 : vector<12x128xf32> to vector<1x12x128xf32>
    tpu.vector_store %arg7[%c11_96, %c0_97, %c0_98], %121 {strides = array<i32>} : memref<12x12x128xf32, #tpu.memory_space<vmem>>, vector<1x12x128xf32>,
    %cst_99 = arith.constant 0.000000e+00 : f32
    %122 = vector.broadcast %cst_99 : f32 to vector<64x128xf32>
    %c0_100 = arith.constant 0 : index
    %c0_101 = arith.constant 0 : index
    %c0_102 = arith.constant 0 : index
    %123 = vector.load %arg7[%c0_100, %c0_101, %c0_102] : memref<12x12x128xf32, #tpu.memory_space<vmem>>, vector<8x8x128xf32>
    %124 = vector.shape_cast %123 : vector<8x8x128xf32> to vector<64x128xf32>
    %c0_103 = arith.constant 0 : index
    %c0_104 = arith.constant 0 : index
    %c0_105 = arith.constant 0 : index
    %125 = vector.load %arg4[%c0_103, %c0_104, %c0_105] : memref<25x128x128xf32, #tpu.memory_space<vmem>>, vector<1x128x128xf32>
    %126 = vector.shape_cast %125 : vector<1x128x128xf32> to vector<128x128xf32>
    %cst_106 = arith.constant dense<0.000000e+00> : vector<64x128xf32>
    %127 = tpu.matmul %124, %126, %cst_106 {dimension_numbers = #tpu.dot_dimension_numbers<[1], [0], [0], [1], [0, 0, 1, 1], [], []>} : vector<64x128xf32>, vector<128x128xf32>, vector<64x128xf32> -> vector<64x128xf32>
    %128 = arith.addf %122, %127 : vector<64x128xf32>
    %c0_107 = arith.constant 0 : index
    %c1_108 = arith.constant 1 : index
    %c0_109 = arith.constant 0 : index
    %129 = vector.load %arg7[%c0_107, %c1_108, %c0_109] : memref<12x12x128xf32, #tpu.memory_space<vmem>>, vector<8x8x128xf32>
    %130 = vector.shape_cast %129 : vector<8x8x128xf32> to vector<64x128xf32>
    %c1_110 = arith.constant 1 : index
    %c0_111 = arith.constant 0 : index
    %c0_112 = arith.constant 0 : index
    %131 = vector.load %arg4[%c1_110, %c0_111, %c0_112] : memref<25x128x128xf32, #tpu.memory_space<vmem>>, vector<1x128x128xf32>
    %132 = vector.shape_cast %131 : vector<1x128x128xf32> to vector<128x128xf32>
    %cst_113 = arith.constant dense<0.000000e+00> : vector<64x128xf32>
    %133 = tpu.matmul %130, %132, %cst_113 {dimension_numbers = #tpu.dot_dimension_numbers<[1], [0], [0], [1], [0, 0, 1, 1], [], []>} : vector<64x128xf32>, vector<128x128xf32>, vector<64x128xf32> -> vector<64x128xf32>
    %134 = arith.addf %128, %133 : vector<64x128xf32>
    %c0_114 = arith.constant 0 : index
    %c2_115 = arith.constant 2 : index
    %c0_116 = arith.constant 0 : index
    %135 = vector.load %arg7[%c0_114, %c2_115, %c0_116] : memref<12x12x128xf32, #tpu.memory_space<vmem>>, vector<8x8x128xf32>
    %136 = vector.shape_cast %135 : vector<8x8x128xf32> to vector<64x128xf32>
    %c2_117 = arith.constant 2 : index
    %c0_118 = arith.constant 0 : index
    %c0_119 = arith.constant 0 : index
    %137 = vector.load %arg4[%c2_117, %c0_118, %c0_119] : memref<25x128x128xf32, #tpu.memory_space<vmem>>, vector<1x128x128xf32>
    %138 = vector.shape_cast %137 : vector<1x128x128xf32> to vector<128x128xf32>
    %cst_120 = arith.constant dense<0.000000e+00> : vector<64x128xf32>
    %139 = tpu.matmul %136, %138, %cst_120 {dimension_numbers = #tpu.dot_dimension_numbers<[1], [0], [0], [1], [0, 0, 1, 1], [], []>} : vector<64x128xf32>, vector<128x128xf32>, vector<64x128xf32> -> vector<64x128xf32>
    %140 = arith.addf %134, %139 : vector<64x128xf32>
    %c0_121 = arith.constant 0 : index
    %c3_122 = arith.constant 3 : index
    %c0_123 = arith.constant 0 : index
    %141 = vector.load %arg7[%c0_121, %c3_122, %c0_123] : memref<12x12x128xf32, #tpu.memory_space<vmem>>, vector<8x8x128xf32>
    %142 = vector.shape_cast %141 : vector<8x8x128xf32> to vector<64x128xf32>
    %c3_124 = arith.constant 3 : index
    %c0_125 = arith.constant 0 : index
    %c0_126 = arith.constant 0 : index
    %143 = vector.load %arg4[%c3_124, %c0_125, %c0_126] : memref<25x128x128xf32, #tpu.memory_space<vmem>>, vector<1x128x128xf32>
    %144 = vector.shape_cast %143 : vector<1x128x128xf32> to vector<128x128xf32>
    %cst_127 = arith.constant dense<0.000000e+00> : vector<64x128xf32>
    %145 = tpu.matmul %142, %144, %cst_127 {dimension_numbers = #tpu.dot_dimension_numbers<[1], [0], [0], [1], [0, 0, 1, 1], [], []>} : vector<64x128xf32>, vector<128x128xf32>, vector<64x128xf32> -> vector<64x128xf32>
    %146 = arith.addf %140, %145 : vector<64x128xf32>
    %c0_128 = arith.constant 0 : index
    %c4_129 = arith.constant 4 : index
    %c0_130 = arith.constant 0 : index
    %147 = vector.load %arg7[%c0_128, %c4_129, %c0_130] : memref<12x12x128xf32, #tpu.memory_space<vmem>>, vector<8x8x128xf32>
    %148 = vector.shape_cast %147 : vector<8x8x128xf32> to vector<64x128xf32>
    %c4_131 = arith.constant 4 : index
    %c0_132 = arith.constant 0 : index
    %c0_133 = arith.constant 0 : index
    %149 = vector.load %arg4[%c4_131, %c0_132, %c0_133] : memref<25x128x128xf32, #tpu.memory_space<vmem>>, vector<1x128x128xf32>
    %150 = vector.shape_cast %149 : vector<1x128x128xf32> to vector<128x128xf32>
    %cst_134 = arith.constant dense<0.000000e+00> : vector<64x128xf32>
    %151 = tpu.matmul %148, %150, %cst_134 {dimension_numbers = #tpu.dot_dimension_numbers<[1], [0], [0], [1], [0, 0, 1, 1], [], []>} : vector<64x128xf32>, vector<128x128xf32>, vector<64x128xf32> -> vector<64x128xf32>
    %152 = arith.addf %146, %151 : vector<64x128xf32>
    %c1_135 = arith.constant 1 : index
    %c0_136 = arith.constant 0 : index
    %c0_137 = arith.constant 0 : index
    %153 = vector.load %arg7[%c1_135, %c0_136, %c0_137] : memref<12x12x128xf32, #tpu.memory_space<vmem>>, vector<8x8x128xf32>
    %154 = vector.shape_cast %153 : vector<8x8x128xf32> to vector<64x128xf32>
    %c5_138 = arith.constant 5 : index
    %c0_139 = arith.constant 0 : index
    %c0_140 = arith.constant 0 : index
    %155 = vector.load %arg4[%c5_138, %c0_139, %c0_140] : memref<25x128x128xf32, #tpu.memory_space<vmem>>, vector<1x128x128xf32>
    %156 = vector.shape_cast %155 : vector<1x128x128xf32> to vector<128x128xf32>
    %cst_141 = arith.constant dense<0.000000e+00> : vector<64x128xf32>
    %157 = tpu.matmul %154, %156, %cst_141 {dimension_numbers = #tpu.dot_dimension_numbers<[1], [0], [0], [1], [0, 0, 1, 1], [], []>} : vector<64x128xf32>, vector<128x128xf32>, vector<64x128xf32> -> vector<64x128xf32>
    %158 = arith.addf %152, %157 : vector<64x128xf32>
    %c1_142 = arith.constant 1 : index
    %c1_143 = arith.constant 1 : index
    %c0_144 = arith.constant 0 : index
    %159 = vector.load %arg7[%c1_142, %c1_143, %c0_144] : memref<12x12x128xf32, #tpu.memory_space<vmem>>, vector<8x8x128xf32>
    %160 = vector.shape_cast %159 : vector<8x8x128xf32> to vector<64x128xf32>
    %c6_145 = arith.constant 6 : index
    %c0_146 = arith.constant 0 : index
    %c0_147 = arith.constant 0 : index
    %161 = vector.load %arg4[%c6_145, %c0_146, %c0_147] : memref<25x128x128xf32, #tpu.memory_space<vmem>>, vector<1x128x128xf32>
    %162 = vector.shape_cast %161 : vector<1x128x128xf32> to vector<128x128xf32>
    %cst_148 = arith.constant dense<0.000000e+00> : vector<64x128xf32>
    %163 = tpu.matmul %160, %162, %cst_148 {dimension_numbers = #tpu.dot_dimension_numbers<[1], [0], [0], [1], [0, 0, 1, 1], [], []>} : vector<64x128xf32>, vector<128x128xf32>, vector<64x128xf32> -> vector<64x128xf32>
    %164 = arith.addf %158, %163 : vector<64x128xf32>
    %c1_149 = arith.constant 1 : index
    %c2_150 = arith.constant 2 : index
    %c0_151 = arith.constant 0 : index
    %165 = vector.load %arg7[%c1_149, %c2_150, %c0_151] : memref<12x12x128xf32, #tpu.memory_space<vmem>>, vector<8x8x128xf32>
    %166 = vector.shape_cast %165 : vector<8x8x128xf32> to vector<64x128xf32>
    %c7_152 = arith.constant 7 : index
    %c0_153 = arith.constant 0 : index
    %c0_154 = arith.constant 0 : index
    %167 = vector.load %arg4[%c7_152, %c0_153, %c0_154] : memref<25x128x128xf32, #tpu.memory_space<vmem>>, vector<1x128x128xf32>
    %168 = vector.shape_cast %167 : vector<1x128x128xf32> to vector<128x128xf32>
    %cst_155 = arith.constant dense<0.000000e+00> : vector<64x128xf32>
    %169 = tpu.matmul %166, %168, %cst_155 {dimension_numbers = #tpu.dot_dimension_numbers<[1], [0], [0], [1], [0, 0, 1, 1], [], []>} : vector<64x128xf32>, vector<128x128xf32>, vector<64x128xf32> -> vector<64x128xf32>
    %170 = arith.addf %164, %169 : vector<64x128xf32>
    %c1_156 = arith.constant 1 : index
    %c3_157 = arith.constant 3 : index
    %c0_158 = arith.constant 0 : index
    %171 = vector.load %arg7[%c1_156, %c3_157, %c0_158] : memref<12x12x128xf32, #tpu.memory_space<vmem>>, vector<8x8x128xf32>
    %172 = vector.shape_cast %171 : vector<8x8x128xf32> to vector<64x128xf32>
    %c8_159 = arith.constant 8 : index
    %c0_160 = arith.constant 0 : index
    %c0_161 = arith.constant 0 : index
    %173 = vector.load %arg4[%c8_159, %c0_160, %c0_161] : memref<25x128x128xf32, #tpu.memory_space<vmem>>, vector<1x128x128xf32>
    %174 = vector.shape_cast %173 : vector<1x128x128xf32> to vector<128x128xf32>
    %cst_162 = arith.constant dense<0.000000e+00> : vector<64x128xf32>
    %175 = tpu.matmul %172, %174, %cst_162 {dimension_numbers = #tpu.dot_dimension_numbers<[1], [0], [0], [1], [0, 0, 1, 1], [], []>} : vector<64x128xf32>, vector<128x128xf32>, vector<64x128xf32> -> vector<64x128xf32>
    %176 = arith.addf %170, %175 : vector<64x128xf32>
    %c1_163 = arith.constant 1 : index
    %c4_164 = arith.constant 4 : index
    %c0_165 = arith.constant 0 : index
    %177 = vector.load %arg7[%c1_163, %c4_164, %c0_165] : memref<12x12x128xf32, #tpu.memory_space<vmem>>, vector<8x8x128xf32>
    %178 = vector.shape_cast %177 : vector<8x8x128xf32> to vector<64x128xf32>
    %c9_166 = arith.constant 9 : index
    %c0_167 = arith.constant 0 : index
    %c0_168 = arith.constant 0 : index
    %179 = vector.load %arg4[%c9_166, %c0_167, %c0_168] : memref<25x128x128xf32, #tpu.memory_space<vmem>>, vector<1x128x128xf32>
    %180 = vector.shape_cast %179 : vector<1x128x128xf32> to vector<128x128xf32>
    %cst_169 = arith.constant dense<0.000000e+00> : vector<64x128xf32>
    %181 = tpu.matmul %178, %180, %cst_169 {dimension_numbers = #tpu.dot_dimension_numbers<[1], [0], [0], [1], [0, 0, 1, 1], [], []>} : vector<64x128xf32>, vector<128x128xf32>, vector<64x128xf32> -> vector<64x128xf32>
    %182 = arith.addf %176, %181 : vector<64x128xf32>
    %c2_170 = arith.constant 2 : index
    %c0_171 = arith.constant 0 : index
    %c0_172 = arith.constant 0 : index
    %183 = vector.load %arg7[%c2_170, %c0_171, %c0_172] : memref<12x12x128xf32, #tpu.memory_space<vmem>>, vector<8x8x128xf32>
    %184 = vector.shape_cast %183 : vector<8x8x128xf32> to vector<64x128xf32>
    %c10_173 = arith.constant 10 : index
    %c0_174 = arith.constant 0 : index
    %c0_175 = arith.constant 0 : index
    %185 = vector.load %arg4[%c10_173, %c0_174, %c0_175] : memref<25x128x128xf32, #tpu.memory_space<vmem>>, vector<1x128x128xf32>
    %186 = vector.shape_cast %185 : vector<1x128x128xf32> to vector<128x128xf32>
    %cst_176 = arith.constant dense<0.000000e+00> : vector<64x128xf32>
    %187 = tpu.matmul %184, %186, %cst_176 {dimension_numbers = #tpu.dot_dimension_numbers<[1], [0], [0], [1], [0, 0, 1, 1], [], []>} : vector<64x128xf32>, vector<128x128xf32>, vector<64x128xf32> -> vector<64x128xf32>
    %188 = arith.addf %182, %187 : vector<64x128xf32>
    %c2_177 = arith.constant 2 : index
    %c1_178 = arith.constant 1 : index
    %c0_179 = arith.constant 0 : index
    %189 = vector.load %arg7[%c2_177, %c1_178, %c0_179] : memref<12x12x128xf32, #tpu.memory_space<vmem>>, vector<8x8x128xf32>
    %190 = vector.shape_cast %189 : vector<8x8x128xf32> to vector<64x128xf32>
    %c11_180 = arith.constant 11 : index
    %c0_181 = arith.constant 0 : index
    %c0_182 = arith.constant 0 : index
    %191 = vector.load %arg4[%c11_180, %c0_181, %c0_182] : memref<25x128x128xf32, #tpu.memory_space<vmem>>, vector<1x128x128xf32>
    %192 = vector.shape_cast %191 : vector<1x128x128xf32> to vector<128x128xf32>
    %cst_183 = arith.constant dense<0.000000e+00> : vector<64x128xf32>
    %193 = tpu.matmul %190, %192, %cst_183 {dimension_numbers = #tpu.dot_dimension_numbers<[1], [0], [0], [1], [0, 0, 1, 1], [], []>} : vector<64x128xf32>, vector<128x128xf32>, vector<64x128xf32> -> vector<64x128xf32>
    %194 = arith.addf %188, %193 : vector<64x128xf32>
    %c2_184 = arith.constant 2 : index
    %c2_185 = arith.constant 2 : index
    %c0_186 = arith.constant 0 : index
    %195 = vector.load %arg7[%c2_184, %c2_185, %c0_186] : memref<12x12x128xf32, #tpu.memory_space<vmem>>, vector<8x8x128xf32>
    %196 = vector.shape_cast %195 : vector<8x8x128xf32> to vector<64x128xf32>
    %c12 = arith.constant 12 : index
    %c0_187 = arith.constant 0 : index
    %c0_188 = arith.constant 0 : index
    %197 = vector.load %arg4[%c12, %c0_187, %c0_188] : memref<25x128x128xf32, #tpu.memory_space<vmem>>, vector<1x128x128xf32>
    %198 = vector.shape_cast %197 : vector<1x128x128xf32> to vector<128x128xf32>
    %cst_189 = arith.constant dense<0.000000e+00> : vector<64x128xf32>
    %199 = tpu.matmul %196, %198, %cst_189 {dimension_numbers = #tpu.dot_dimension_numbers<[1], [0], [0], [1], [0, 0, 1, 1], [], []>} : vector<64x128xf32>, vector<128x128xf32>, vector<64x128xf32> -> vector<64x128xf32>
    %200 = arith.addf %194, %199 : vector<64x128xf32>
    %c2_190 = arith.constant 2 : index
    %c3_191 = arith.constant 3 : index
    %c0_192 = arith.constant 0 : index
    %201 = vector.load %arg7[%c2_190, %c3_191, %c0_192] : memref<12x12x128xf32, #tpu.memory_space<vmem>>, vector<8x8x128xf32>
    %202 = vector.shape_cast %201 : vector<8x8x128xf32> to vector<64x128xf32>
    %c13 = arith.constant 13 : index
    %c0_193 = arith.constant 0 : index
    %c0_194 = arith.constant 0 : index
    %203 = vector.load %arg4[%c13, %c0_193, %c0_194] : memref<25x128x128xf32, #tpu.memory_space<vmem>>, vector<1x128x128xf32>
    %204 = vector.shape_cast %203 : vector<1x128x128xf32> to vector<128x128xf32>
    %cst_195 = arith.constant dense<0.000000e+00> : vector<64x128xf32>
    %205 = tpu.matmul %202, %204, %cst_195 {dimension_numbers = #tpu.dot_dimension_numbers<[1], [0], [0], [1], [0, 0, 1, 1], [], []>} : vector<64x128xf32>, vector<128x128xf32>, vector<64x128xf32> -> vector<64x128xf32>
    %206 = arith.addf %200, %205 : vector<64x128xf32>
    %c2_196 = arith.constant 2 : index
    %c4_197 = arith.constant 4 : index
    %c0_198 = arith.constant 0 : index
    %207 = vector.load %arg7[%c2_196, %c4_197, %c0_198] : memref<12x12x128xf32, #tpu.memory_space<vmem>>, vector<8x8x128xf32>
    %208 = vector.shape_cast %207 : vector<8x8x128xf32> to vector<64x128xf32>
    %c14 = arith.constant 14 : index
    %c0_199 = arith.constant 0 : index
    %c0_200 = arith.constant 0 : index
    %209 = vector.load %arg4[%c14, %c0_199, %c0_200] : memref<25x128x128xf32, #tpu.memory_space<vmem>>, vector<1x128x128xf32>
    %210 = vector.shape_cast %209 : vector<1x128x128xf32> to vector<128x128xf32>
    %cst_201 = arith.constant dense<0.000000e+00> : vector<64x128xf32>
    %211 = tpu.matmul %208, %210, %cst_201 {dimension_numbers = #tpu.dot_dimension_numbers<[1], [0], [0], [1], [0, 0, 1, 1], [], []>} : vector<64x128xf32>, vector<128x128xf32>, vector<64x128xf32> -> vector<64x128xf32>
    %212 = arith.addf %206, %211 : vector<64x128xf32>
    %c3_202 = arith.constant 3 : index
    %c0_203 = arith.constant 0 : index
    %c0_204 = arith.constant 0 : index
    %213 = vector.load %arg7[%c3_202, %c0_203, %c0_204] : memref<12x12x128xf32, #tpu.memory_space<vmem>>, vector<8x8x128xf32>
    %214 = vector.shape_cast %213 : vector<8x8x128xf32> to vector<64x128xf32>
    %c15 = arith.constant 15 : index
    %c0_205 = arith.constant 0 : index
    %c0_206 = arith.constant 0 : index
    %215 = vector.load %arg4[%c15, %c0_205, %c0_206] : memref<25x128x128xf32, #tpu.memory_space<vmem>>, vector<1x128x128xf32>
    %216 = vector.shape_cast %215 : vector<1x128x128xf32> to vector<128x128xf32>
    %cst_207 = arith.constant dense<0.000000e+00> : vector<64x128xf32>
    %217 = tpu.matmul %214, %216, %cst_207 {dimension_numbers = #tpu.dot_dimension_numbers<[1], [0], [0], [1], [0, 0, 1, 1], [], []>} : vector<64x128xf32>, vector<128x128xf32>, vector<64x128xf32> -> vector<64x128xf32>
    %218 = arith.addf %212, %217 : vector<64x128xf32>
    %c3_208 = arith.constant 3 : index
    %c1_209 = arith.constant 1 : index
    %c0_210 = arith.constant 0 : index
    %219 = vector.load %arg7[%c3_208, %c1_209, %c0_210] : memref<12x12x128xf32, #tpu.memory_space<vmem>>, vector<8x8x128xf32>
    %220 = vector.shape_cast %219 : vector<8x8x128xf32> to vector<64x128xf32>
    %c16 = arith.constant 16 : index
    %c0_211 = arith.constant 0 : index
    %c0_212 = arith.constant 0 : index
    %221 = vector.load %arg4[%c16, %c0_211, %c0_212] : memref<25x128x128xf32, #tpu.memory_space<vmem>>, vector<1x128x128xf32>
    %222 = vector.shape_cast %221 : vector<1x128x128xf32> to vector<128x128xf32>
    %cst_213 = arith.constant dense<0.000000e+00> : vector<64x128xf32>
    %223 = tpu.matmul %220, %222, %cst_213 {dimension_numbers = #tpu.dot_dimension_numbers<[1], [0], [0], [1], [0, 0, 1, 1], [], []>} : vector<64x128xf32>, vector<128x128xf32>, vector<64x128xf32> -> vector<64x128xf32>
    %224 = arith.addf %218, %223 : vector<64x128xf32>
    %c3_214 = arith.constant 3 : index
    %c2_215 = arith.constant 2 : index
    %c0_216 = arith.constant 0 : index
    %225 = vector.load %arg7[%c3_214, %c2_215, %c0_216] : memref<12x12x128xf32, #tpu.memory_space<vmem>>, vector<8x8x128xf32>
    %226 = vector.shape_cast %225 : vector<8x8x128xf32> to vector<64x128xf32>
    %c17 = arith.constant 17 : index
    %c0_217 = arith.constant 0 : index
    %c0_218 = arith.constant 0 : index
    %227 = vector.load %arg4[%c17, %c0_217, %c0_218] : memref<25x128x128xf32, #tpu.memory_space<vmem>>, vector<1x128x128xf32>
    %228 = vector.shape_cast %227 : vector<1x128x128xf32> to vector<128x128xf32>
    %cst_219 = arith.constant dense<0.000000e+00> : vector<64x128xf32>
    %229 = tpu.matmul %226, %228, %cst_219 {dimension_numbers = #tpu.dot_dimension_numbers<[1], [0], [0], [1], [0, 0, 1, 1], [], []>} : vector<64x128xf32>, vector<128x128xf32>, vector<64x128xf32> -> vector<64x128xf32>
    %230 = arith.addf %224, %229 : vector<64x128xf32>
    %c3_220 = arith.constant 3 : index
    %c3_221 = arith.constant 3 : index
    %c0_222 = arith.constant 0 : index
    %231 = vector.load %arg7[%c3_220, %c3_221, %c0_222] : memref<12x12x128xf32, #tpu.memory_space<vmem>>, vector<8x8x128xf32>
    %232 = vector.shape_cast %231 : vector<8x8x128xf32> to vector<64x128xf32>
    %c18 = arith.constant 18 : index
    %c0_223 = arith.constant 0 : index
    %c0_224 = arith.constant 0 : index
    %233 = vector.load %arg4[%c18, %c0_223, %c0_224] : memref<25x128x128xf32, #tpu.memory_space<vmem>>, vector<1x128x128xf32>
    %234 = vector.shape_cast %233 : vector<1x128x128xf32> to vector<128x128xf32>
    %cst_225 = arith.constant dense<0.000000e+00> : vector<64x128xf32>
    %235 = tpu.matmul %232, %234, %cst_225 {dimension_numbers = #tpu.dot_dimension_numbers<[1], [0], [0], [1], [0, 0, 1, 1], [], []>} : vector<64x128xf32>, vector<128x128xf32>, vector<64x128xf32> -> vector<64x128xf32>
    %236 = arith.addf %230, %235 : vector<64x128xf32>
    %c3_226 = arith.constant 3 : index
    %c4_227 = arith.constant 4 : index
    %c0_228 = arith.constant 0 : index
    %237 = vector.load %arg7[%c3_226, %c4_227, %c0_228] : memref<12x12x128xf32, #tpu.memory_space<vmem>>, vector<8x8x128xf32>
    %238 = vector.shape_cast %237 : vector<8x8x128xf32> to vector<64x128xf32>
    %c19 = arith.constant 19 : index
    %c0_229 = arith.constant 0 : index
    %c0_230 = arith.constant 0 : index
    %239 = vector.load %arg4[%c19, %c0_229, %c0_230] : memref<25x128x128xf32, #tpu.memory_space<vmem>>, vector<1x128x128xf32>
    %240 = vector.shape_cast %239 : vector<1x128x128xf32> to vector<128x128xf32>
    %cst_231 = arith.constant dense<0.000000e+00> : vector<64x128xf32>
    %241 = tpu.matmul %238, %240, %cst_231 {dimension_numbers = #tpu.dot_dimension_numbers<[1], [0], [0], [1], [0, 0, 1, 1], [], []>} : vector<64x128xf32>, vector<128x128xf32>, vector<64x128xf32> -> vector<64x128xf32>
    %242 = arith.addf %236, %241 : vector<64x128xf32>
    %c4_232 = arith.constant 4 : index
    %c0_233 = arith.constant 0 : index
    %c0_234 = arith.constant 0 : index
    %243 = vector.load %arg7[%c4_232, %c0_233, %c0_234] : memref<12x12x128xf32, #tpu.memory_space<vmem>>, vector<8x8x128xf32>
    %244 = vector.shape_cast %243 : vector<8x8x128xf32> to vector<64x128xf32>
    %c20 = arith.constant 20 : index
    %c0_235 = arith.constant 0 : index
    %c0_236 = arith.constant 0 : index
    %245 = vector.load %arg4[%c20, %c0_235, %c0_236] : memref<25x128x128xf32, #tpu.memory_space<vmem>>, vector<1x128x128xf32>
    %246 = vector.shape_cast %245 : vector<1x128x128xf32> to vector<128x128xf32>
    %cst_237 = arith.constant dense<0.000000e+00> : vector<64x128xf32>
    %247 = tpu.matmul %244, %246, %cst_237 {dimension_numbers = #tpu.dot_dimension_numbers<[1], [0], [0], [1], [0, 0, 1, 1], [], []>} : vector<64x128xf32>, vector<128x128xf32>, vector<64x128xf32> -> vector<64x128xf32>
    %248 = arith.addf %242, %247 : vector<64x128xf32>
    %c4_238 = arith.constant 4 : index
    %c1_239 = arith.constant 1 : index
    %c0_240 = arith.constant 0 : index
    %249 = vector.load %arg7[%c4_238, %c1_239, %c0_240] : memref<12x12x128xf32, #tpu.memory_space<vmem>>, vector<8x8x128xf32>
    %250 = vector.shape_cast %249 : vector<8x8x128xf32> to vector<64x128xf32>
    %c21 = arith.constant 21 : index
    %c0_241 = arith.constant 0 : index
    %c0_242 = arith.constant 0 : index
    %251 = vector.load %arg4[%c21, %c0_241, %c0_242] : memref<25x128x128xf32, #tpu.memory_space<vmem>>, vector<1x128x128xf32>
    %252 = vector.shape_cast %251 : vector<1x128x128xf32> to vector<128x128xf32>
    %cst_243 = arith.constant dense<0.000000e+00> : vector<64x128xf32>
    %253 = tpu.matmul %250, %252, %cst_243 {dimension_numbers = #tpu.dot_dimension_numbers<[1], [0], [0], [1], [0, 0, 1, 1], [], []>} : vector<64x128xf32>, vector<128x128xf32>, vector<64x128xf32> -> vector<64x128xf32>
    %254 = arith.addf %248, %253 : vector<64x128xf32>
    %c4_244 = arith.constant 4 : index
    %c2_245 = arith.constant 2 : index
    %c0_246 = arith.constant 0 : index
    %255 = vector.load %arg7[%c4_244, %c2_245, %c0_246] : memref<12x12x128xf32, #tpu.memory_space<vmem>>, vector<8x8x128xf32>
    %256 = vector.shape_cast %255 : vector<8x8x128xf32> to vector<64x128xf32>
    %c22 = arith.constant 22 : index
    %c0_247 = arith.constant 0 : index
    %c0_248 = arith.constant 0 : index
    %257 = vector.load %arg4[%c22, %c0_247, %c0_248] : memref<25x128x128xf32, #tpu.memory_space<vmem>>, vector<1x128x128xf32>
    %258 = vector.shape_cast %257 : vector<1x128x128xf32> to vector<128x128xf32>
    %cst_249 = arith.constant dense<0.000000e+00> : vector<64x128xf32>
    %259 = tpu.matmul %256, %258, %cst_249 {dimension_numbers = #tpu.dot_dimension_numbers<[1], [0], [0], [1], [0, 0, 1, 1], [], []>} : vector<64x128xf32>, vector<128x128xf32>, vector<64x128xf32> -> vector<64x128xf32>
    %260 = arith.addf %254, %259 : vector<64x128xf32>
    %c4_250 = arith.constant 4 : index
    %c3_251 = arith.constant 3 : index
    %c0_252 = arith.constant 0 : index
    %261 = vector.load %arg7[%c4_250, %c3_251, %c0_252] : memref<12x12x128xf32, #tpu.memory_space<vmem>>, vector<8x8x128xf32>
    %262 = vector.shape_cast %261 : vector<8x8x128xf32> to vector<64x128xf32>
    %c23 = arith.constant 23 : index
    %c0_253 = arith.constant 0 : index
    %c0_254 = arith.constant 0 : index
    %263 = vector.load %arg4[%c23, %c0_253, %c0_254] : memref<25x128x128xf32, #tpu.memory_space<vmem>>, vector<1x128x128xf32>
    %264 = vector.shape_cast %263 : vector<1x128x128xf32> to vector<128x128xf32>
    %cst_255 = arith.constant dense<0.000000e+00> : vector<64x128xf32>
    %265 = tpu.matmul %262, %264, %cst_255 {dimension_numbers = #tpu.dot_dimension_numbers<[1], [0], [0], [1], [0, 0, 1, 1], [], []>} : vector<64x128xf32>, vector<128x128xf32>, vector<64x128xf32> -> vector<64x128xf32>
    %266 = arith.addf %260, %265 : vector<64x128xf32>
    %c4_256 = arith.constant 4 : index
    %c4_257 = arith.constant 4 : index
    %c0_258 = arith.constant 0 : index
    %267 = vector.load %arg7[%c4_256, %c4_257, %c0_258] : memref<12x12x128xf32, #tpu.memory_space<vmem>>, vector<8x8x128xf32>
    %268 = vector.shape_cast %267 : vector<8x8x128xf32> to vector<64x128xf32>
    %c24 = arith.constant 24 : index
    %c0_259 = arith.constant 0 : index
    %c0_260 = arith.constant 0 : index
    %269 = vector.load %arg4[%c24, %c0_259, %c0_260] : memref<25x128x128xf32, #tpu.memory_space<vmem>>, vector<1x128x128xf32>
    %270 = vector.shape_cast %269 : vector<1x128x128xf32> to vector<128x128xf32>
    %cst_261 = arith.constant dense<0.000000e+00> : vector<64x128xf32>
    %271 = tpu.matmul %268, %270, %cst_261 {dimension_numbers = #tpu.dot_dimension_numbers<[1], [0], [0], [1], [0, 0, 1, 1], [], []>} : vector<64x128xf32>, vector<128x128xf32>, vector<64x128xf32> -> vector<64x128xf32>
    %272 = arith.addf %266, %271 : vector<64x128xf32>
    %c0_262 = arith.constant 0 : index
    %c0_263 = arith.constant 0 : index
    %273 = vector.load %arg5[%c0_262, %c0_263] : memref<1x128xf32, #tpu.memory_space<vmem>>, vector<1x128xf32>
    %274 = vector.broadcast %273 : vector<1x128xf32> to vector<64x128xf32>
    %275 = arith.addf %272, %274 : vector<64x128xf32>
    %cst_264 = arith.constant 0.000000e+00 : f32
    %276 = vector.broadcast %cst_264 : f32 to vector<64x128xf32>
    %277 = arith.maximumf %275, %276 : vector<64x128xf32>
    %c0_265 = arith.constant 0 : index
    %c0_266 = arith.constant 0 : index
    %c0_267 = arith.constant 0 : index
    %278 = vector.load %arg6[%c0_265, %c0_266, %c0_267] : memref<1x64x128xf32, #tpu.memory_space<vmem>>, vector<1x64x128xf32>
    %279 = vector.shape_cast %278 : vector<1x64x128xf32> to vector<64x128xf32>
    %280 = vector.shape_cast %277 : vector<64x128xf32> to vector<1x64x128xf32>
    tpu.vector_store %arg6[%c0_265, %c0_266, %c0_267], %280 {strides = array<i32>} : memref<1x64x128xf32, #tpu.memory_space<vmem>>, vector<1x64x128xf32>,
    return
  }
  func.func @transform_0(%arg0: i32) -> (i32, i32, i32, i32) {
    %c0_i32 = arith.constant 0 : i32
    %c0_i32_0 = arith.constant 0 : i32
    %c0_i32_1 = arith.constant 0 : i32
    %c0_i32_2 = arith.constant 0 : i32
    return %arg0, %c0_i32, %c0_i32_0, %c0_i32_1 : i32, i32, i32, i32
  }
  func.func @transform_1(%arg0: i32) -> (i32, i32) {
    %c0_i32 = arith.constant 0 : i32
    %c0_i32_0 = arith.constant 0 : i32
    %c0_i32_1 = arith.constant 0 : i32
    return %c0_i32, %c0_i32_0 : i32, i32
  }
  func.func @transform_2(%arg0: i32) -> (i32, i32) {
    %c0_i32 = arith.constant 0 : i32
    %c0_i32_0 = arith.constant 0 : i32
    %c0_i32_1 = arith.constant 0 : i32
    return %c0_i32, %c0_i32_0 : i32, i32
  }
  func.func @transform_3(%arg0: i32) -> (i32, i32, i32) {
    %c0_i32 = arith.constant 0 : i32
    %c0_i32_0 = arith.constant 0 : i32
    %c0_i32_1 = arith.constant 0 : i32
    %c0_i32_2 = arith.constant 0 : i32
    return %c0_i32, %c0_i32_0, %c0_i32_1 : i32, i32, i32
  }
  func.func @transform_4(%arg0: i32) -> (i32, i32) {
    %c0_i32 = arith.constant 0 : i32
    %c0_i32_0 = arith.constant 0 : i32
    %c0_i32_1 = arith.constant 0 : i32
    return %c0_i32, %c0_i32_0 : i32, i32
  }
  func.func @transform_5(%arg0: i32) -> (i32, i32, i32) {
    %c0_i32 = arith.constant 0 : i32
    %c0_i32_0 = arith.constant 0 : i32
    %c0_i32_1 = arith.constant 0 : i32
    return %arg0, %c0_i32, %c0_i32_0 : i32, i32, i32
  }
}

</mosaic_0001>

<llo_original>
// kernel: net_forward.1
$region0: #{net_forward.1}
  #allocation0 [shape = 'u32[]', space=smem, size = 0x4, offset = 0x4, fixed_abs, tag = 'smem constant byte address 0x4 - core index']
  #allocation1 [shape = 'u32[144,128]{1,0:T(1,128)}', space=vmem, size = 0x12000, scoped, tag = 'internal scratch']
  #allocation2 [shape = 'f32[12,12,128]{2,1,0:T(8,128)}', space=vmem, size = 0x18000, scoped, tag = 'scratch operand']
  %s0 = inlined_call_operand.vmem [shape: f32[2,12,12,128], index: 0, kind: input, shape index: {}]
  %s1 = inlined_call_operand.vmem [shape: f32[128,128], index: 1, kind: input, shape index: {}]
  %s2 = inlined_call_operand.vmem [shape: f32[1,128], index: 2, kind: input, shape index: {}]
  %s3 = inlined_call_operand.vmem [shape: f32[25,128,128], index: 3, kind: input, shape index: {}]
  %s4 = inlined_call_operand.vmem [shape: f32[1,128], index: 4, kind: input, shape index: {}]
  %s5 = inlined_call_operand.vmem [shape: f32[2,64,128], index: 5, kind: output, shape index: {}]
  %s6 = sld [smem:[#allocation0]]
  $region53: #{net_forward.1} parent=0
    _
  %s8 = ssub.s32 1, %s6
  %s9 = scalar_select 0, %s8, %s6
  loop: start=0, step=1, limit=4
  $region2: #{net_forward.1} parent=0 // loop_pre_header
    _
  $region3: #{net_forward.1} parent=0 // loop_header
    %s11 = sphi 0, %s15
    %p12 = scmp.ge.s32.totalorder %s11, 4
    %s21 = sphi 0, %s23
    %s24 = sphi 0, %s21
    %s25 = sphi 0, %s24
    %s41 = sphi 0, %s25
    %s45 = sphi 0, %s45
    %s47 = sphi 0, %s45
    %s48 = sphi 0, %s47
    %s62 = sphi 0, %s48
    %s66 = sphi 0, %s66
    %s68 = sphi 0, %s66
    %s69 = sphi 0, %s68
    %s83 = sphi 0, %s69
    %s87 = sphi 0, %s87
    %s89 = sphi 0, %s87
    %s90 = sphi 0, %s89
    %s104 = sphi 0, %s90
    %s108 = sphi 0, %s108
    %s110 = sphi 0, %s108
    %s111 = sphi 0, %s110
    %s125 = sphi 0, %s111
    %s131 = sphi 0, %s133
    %s134 = sphi 0, %s131
    %s135 = sphi 0, %s134
    %s151 = sphi 0, %s135
  $region4: #{net_forward.1} parent=0 // loop_header_branch
    %14 = sbr.rel (%p12) target = $region8
  $region5: #{net_forward.1} parent=0 // loop_body
    %s16 = ssub.s32 %s11, 1
    %s17 = ssub.s32 %s11, 2
    %s18 = sadd.s32 %s11, 1
    %s19 = ssub.s32 %s11, %s18
    %p20 = scmp.eq.s32.totalorder %s19, 0
    %s22 = sadd.s32 %s21, 1
    %s23 = scalar_select %p20, %s21, %s22
    %p26 = pneg %p20
    %p27 = scmp.eq.s32.totalorder %s11, 1
    %p28 = por %p26, %p27
    %p29 = scmp.ne.s32.totalorder %s21, %s24
    %p30 = scmp.eq.s32.totalorder %s11, 0
    %p31 = por %p29, %p30
    %p32 = scmp.ne.s32.totalorder %s21, %s24
    %p33 = scmp.eq.s32.totalorder %s16, 1
    %p34 = por %p32, %p33
    %p35 = scmp.ne.s32.totalorder %s24, %s25
    %p36 = scmp.eq.s32.totalorder %s16, 0
    %p37 = por %p35, %p36
    %p38 = scmp.ne.s32.totalorder %s24, %s25
    %p39 = scmp.eq.s32.totalorder %s17, 1
    %p40 = por %p38, %p39
    %p42 = scmp.ne.s32.totalorder %s25, %s41
    %p43 = scmp.eq.s32.totalorder %s17, 0
    %p44 = por %p42, %p43
    %s46 = sadd.s32 %s45, 1
    %p49 = scmp.eq.s32.totalorder %s11, 1
    %p50 = scmp.ne.s32.totalorder %s45, %s47
    %p51 = scmp.eq.s32.totalorder %s11, 0
    %p52 = por %p50, %p51
    %p53 = scmp.ne.s32.totalorder %s45, %s47
    %p54 = scmp.eq.s32.totalorder %s16, 1
    %p55 = por %p53, %p54
    %p56 = scmp.ne.s32.totalorder %s47, %s48
    %p57 = scmp.eq.s32.totalorder %s16, 0
    %p58 = por %p56, %p57
    %p59 = scmp.ne.s32.totalorder %s47, %s48
    %p60 = scmp.eq.s32.totalorder %s17, 1
    %p61 = por %p59, %p60
    %p63 = scmp.ne.s32.totalorder %s48, %s62
    %p64 = scmp.eq.s32.totalorder %s17, 0
    %p65 = por %p63, %p64
    %s67 = sadd.s32 %s66, 1
    %p70 = scmp.eq.s32.totalorder %s11, 1
    %p71 = scmp.ne.s32.totalorder %s66, %s68
    %p72 = scmp.eq.s32.totalorder %s11, 0
    %p73 = por %p71, %p72
    %p74 = scmp.ne.s32.totalorder %s66, %s68
    %p75 = scmp.eq.s32.totalorder %s16, 1
    %p76 = por %p74, %p75
    %p77 = scmp.ne.s32.totalorder %s68, %s69
    %p78 = scmp.eq.s32.totalorder %s16, 0
    %p79 = por %p77, %p78
    %p80 = scmp.ne.s32.totalorder %s68, %s69
    %p81 = scmp.eq.s32.totalorder %s17, 1
    %p82 = por %p80, %p81
    %p84 = scmp.ne.s32.totalorder %s69, %s83
    %p85 = scmp.eq.s32.totalorder %s17, 0
    %p86 = por %p84, %p85
    %s88 = sadd.s32 %s87, 1
    %p91 = scmp.eq.s32.totalorder %s11, 1
    %p92 = scmp.ne.s32.totalorder %s87, %s89
    %p93 = scmp.eq.s32.totalorder %s11, 0
    %p94 = por %p92, %p93
    %p95 = scmp.ne.s32.totalorder %s87, %s89
    %p96 = scmp.eq.s32.totalorder %s16, 1
    %p97 = por %p95, %p96
    %p98 = scmp.ne.s32.totalorder %s89, %s90
    %p99 = scmp.eq.s32.totalorder %s16, 0
    %p100 = por %p98, %p99
    %p101 = scmp.ne.s32.totalorder %s89, %s90
    %p102 = scmp.eq.s32.totalorder %s17, 1
    %p103 = por %p101, %p102
    %p105 = scmp.ne.s32.totalorder %s90, %s104
    %p106 = scmp.eq.s32.totalorder %s17, 0
    %p107 = por %p105, %p106
    %s109 = sadd.s32 %s108, 1
    %p112 = scmp.eq.s32.totalorder %s11, 1
    %p113 = scmp.ne.s32.totalorder %s108, %s110
    %p114 = scmp.eq.s32.totalorder %s11, 0
    %p115 = por %p113, %p114
    %p116 = scmp.ne.s32.totalorder %s108, %s110
    %p117 = scmp.eq.s32.totalorder %s16, 1
    %p118 = por %p116, %p117
    %p119 = scmp.ne.s32.totalorder %s110, %s111
    %p120 = scmp.eq.s32.totalorder %s16, 0
    %p121 = por %p119, %p120
    %p122 = scmp.ne.s32.totalorder %s110, %s111
    %p123 = scmp.eq.s32.totalorder %s17, 1
    %p124 = por %p122, %p123
    %p126 = scmp.ne.s32.totalorder %s111, %s125
    %p127 = scmp.eq.s32.totalorder %s17, 0
    %p128 = por %p126, %p127
    %s129 = ssub.s32 %s11, %s18
    %p130 = scmp.eq.s32.totalorder %s129, 0
    %s132 = sadd.s32 %s131, 1
    %s133 = scalar_select %p130, %s131, %s132
    %p136 = pneg %p130
    %p137 = scmp.eq.s32.totalorder %s11, 1
    %p138 = por %p136, %p137
    %p139 = scmp.ne.s32.totalorder %s131, %s134
    %p140 = scmp.eq.s32.totalorder %s11, 0
    %p141 = por %p139, %p140
    %p142 = scmp.ne.s32.totalorder %s131, %s134
    %p143 = scmp.eq.s32.totalorder %s16, 1
    %p144 = por %p142, %p143
    %p145 = scmp.ne.s32.totalorder %s134, %s135
    %p146 = scmp.eq.s32.totalorder %s16, 0
    %p147 = por %p145, %p146
    %p148 = scmp.ne.s32.totalorder %s134, %s135
    %p149 = scmp.eq.s32.totalorder %s17, 1
    %p150 = por %p148, %p149
    %p152 = scmp.ne.s32.totalorder %s135, %s151
    %p153 = scmp.eq.s32.totalorder %s17, 0
    %p154 = por %p152, %p153
    %p155 = scmp.le.s32.totalorder 1, %s11
    %p156 = scmp.lt.s32.totalorder %s11, 3
    %p157 = pnand %p155, %p156
    %p158 = pneg %p157
    // Predicated region
    $region9: #{net_forward.1} parent=5 // pred_check
      _
    $region10: #{net_forward.1} parent=5 // pred_check_branch
      %160 = sbr.rel (%p157) target = $region12
    $region11: #{net_forward.1} parent=5 // pred_region
      %s161 = ssub.s32 %s11, 1
      // Predicated region
      $region13: #{net_forward.1} parent=11 // pred_check
        %p162 = pneg %p58
      $region14: #{net_forward.1} parent=11 // pred_check_branch
        %164 = sbr.rel (%p162) target = $region16
      $region15: #{net_forward.1} parent=11 // pred_region
        _
      $region16: #{net_forward.1} parent=11 // pred_fallthru
        _
      // Predicated region
      $region17: #{net_forward.1} parent=11 // pred_check
        %p165 = pneg %p79
      $region18: #{net_forward.1} parent=11 // pred_check_branch
        %167 = sbr.rel (%p165) target = $region20
      $region19: #{net_forward.1} parent=11 // pred_region
        _
      $region20: #{net_forward.1} parent=11 // pred_fallthru
        _
      // Predicated region
      $region21: #{net_forward.1} parent=11 // pred_check
        %p168 = pneg %p100
      $region22: #{net_forward.1} parent=11 // pred_check_branch
        %170 = sbr.rel (%p168) target = $region24
      $region23: #{net_forward.1} parent=11 // pred_region
        _
      $region24: #{net_forward.1} parent=11 // pred_fallthru
        _
      // Predicated region
      $region25: #{net_forward.1} parent=11 // pred_check
        %p171 = pneg %p121
      $region26: #{net_forward.1} parent=11 // pred_check_branch
        %173 = sbr.rel (%p171) target = $region28
      $region27: #{net_forward.1} parent=11 // pred_region
        _
      $region28: #{net_forward.1} parent=11 // pred_fallthru
        _
    $region12: #{net_forward.1} parent=5 // pred_fallthru
      _
    %p174 = scmp.lt.s32.totalorder %s11, 2
    // Predicated region
    $region29: #{net_forward.1} parent=5 // pred_check
      %p175 = pneg %p174
    $region30: #{net_forward.1} parent=5 // pred_check_branch
      %177 = sbr.rel (%p175) target = $region32
    $region31: #{net_forward.1} parent=5 // pred_region
      // Predicated region
      $region33: #{net_forward.1} parent=31 // pred_check
        %p178 = pneg %p31
      $region34: #{net_forward.1} parent=31 // pred_check_branch
        %180 = sbr.rel (%p178) target = $region36
      $region35: #{net_forward.1} parent=31 // pred_region
        %p181 = scmp.lt.s32.totalorder %s11, 1
        %s182 = scalar_select %p181, %s11, 1
        %s183 = smul.addr %s182, 24
        %s184 = smul.addr %s183, 8
        %s185 = scalar_lea.vmem %s0, %s184
      $region36: #{net_forward.1} parent=31 // pred_fallthru
        _
    $region32: #{net_forward.1} parent=5 // pred_fallthru
      _
    %p186 = scmp.le.s32.totalorder 1, %s11
    %p187 = scmp.lt.s32.totalorder %s11, 3
    %p188 = pnand %p186, %p187
    %p189 = pneg %p188
    // Predicated region
    $region37: #{net_forward.1} parent=5 // pred_check
      _
    $region38: #{net_forward.1} parent=5 // pred_check_branch
      %191 = sbr.rel (%p188) target = $region40
    $region39: #{net_forward.1} parent=5 // pred_region
      %s192 = ssub.s32 %s11, 1
      %p193 = scmp.lt.s32.totalorder %s16, 1
      %s194 = scalar_select %p193, %s16, 1
      %s195 = smul.addr %s194, 24
      %s196 = smul.addr %s195, 8
      %s197 = scalar_lea.vmem %s0, %s196
      %p198 = pneg %p37
      %p199 = pneg %p34
      %p200 = pneg %p58
      %p201 = pneg %p55
      %p202 = pneg %p79
      %p203 = pneg %p76
      %p204 = pneg %p100
      %p205 = pneg %p97
      %p206 = pneg %p121
      %p207 = pneg %p118
      %p208 = pneg %p147
      %p209 = pneg %p144
      %p210 = scmp.lt.s32.totalorder %s16, 1
      %s211 = scalar_select %p210, %s16, 1
      %s212 = smul.addr %s211, 8
      %s213 = smul.addr %s212, 8
      %s214 = scalar_lea.vmem %s5, %s213
      %p215 = scmp.lt.s32.totalorder %s16, 1
      %s216 = scalar_select %p215, %s16, 1
      %s217 = smul.addr %s216, 24
      %s218 = smul.addr %s217, 8
      %s219 = scalar_lea.vmem %s0, %s218
      %p220 = scmp.lt.s32.totalorder %s16, 1
      %s221 = scalar_select %p220, %s16, 1
      %s222 = smul.addr %s221, 8
      %s223 = smul.addr %s222, 8
      %s224 = scalar_lea.vmem %s5, %s223
      %v225 = vld [vmem:[%s1] sm:$0xff]
      %v226 = vld [vmem:[%s1 + $0x8] sm:$0xff]
      %v227 = vld [vmem:[%s1 + $0x10] sm:$0xff]
      %v228 = vld [vmem:[%s1 + $0x18] sm:$0xff]
      %v229 = vld [vmem:[%s1 + $0x20] sm:$0xff]
      %v230 = vld [vmem:[%s1 + $0x28] sm:$0xff]
      %v231 = vld [vmem:[%s1 + $0x30] sm:$0xff]
      %v232 = vld [vmem:[%s1 + $0x38] sm:$0xff]
      %v233 = vld [vmem:[%s1 + $0x40] sm:$0xff]
      %v234 = vld [vmem:[%s1 + $0x48] sm:$0xff]
      %v235 = vld [vmem:[%s1 + $0x50] sm:$0xff]
      %v236 = vld [vmem:[%s1 + $0x58] sm:$0xff]
      %v237 = vld [vmem:[%s1 + $0x60] sm:$0xff]
      %v238 = vld [vmem:[%s1 + $0x68] sm:$0xff]
      %v239 = vld [vmem:[%s1 + $0x70] sm:$0xff]
      %v240 = vld [vmem:[%s1 + $0x78] sm:$0xff]
      %v241 = vld [vmem:[%s2] sm:$0x1]
      %v242 = vld [vmem:[%s219] sm:$0xff]
      %v243 = vld [vmem:[%s219 + $0x8] sm:$0xf]
      %v245 = vlaneseq
      %v246 = vshrl.u32 %v245, 7
      %v247 = vsub.s32 0, %v246
      %v248 = vrot.slane %v241, %v247
      %250 = vmatprep.subr.mxu0 0.0
      %251 = vmatpush1.msra.mxu0 %v240
      %252 = vmatprep.subr.mxu0 0.0
      %253 = vmatpush1.msra.mxu0 %v239
      %254 = vmatprep.subr.mxu0 0.0
      %255 = vmatpush1.msra.mxu0 %v238
      %256 = vmatprep.subr.mxu0 0.0
      %257 = vmatpush1.msra.mxu0 %v237
      %258 = vmatprep.subr.mxu0 0.0
      %259 = vmatpush1.msra.mxu0 %v236
      %260 = vmatprep.subr.mxu0 0.0
      %261 = vmatpush1.msra.mxu0 %v235
      %262 = vmatprep.subr.mxu0 0.0
      %263 = vmatpush1.msra.mxu0 %v234
      %264 = vmatprep.subr.mxu0 0.0
      %265 = vmatpush1.msra.mxu0 %v233
      %266 = vmatprep.subr.mxu0 0.0
      %267 = vmatpush1.msra.mxu0 %v232
      %268 = vmatprep.subr.mxu0 0.0
      %269 = vmatpush1.msra.mxu0 %v231
      %270 = vmatprep.subr.mxu0 0.0
      %271 = vmatpush1.msra.mxu0 %v230
      %272 = vmatprep.subr.mxu0 0.0
      %273 = vmatpush1.msra.mxu0 %v229
      %274 = vmatprep.subr.mxu0 0.0
      %275 = vmatpush1.msra.mxu0 %v228
      %276 = vmatprep.subr.mxu0 0.0
      %277 = vmatpush1.msra.mxu0 %v227
      %278 = vmatprep.subr.mxu0 0.0
      %279 = vmatpush1.msra.mxu0 %v226
      %280 = vmatprep.subr.mxu0 0.0
      %281 = vmatpush1.msra.mxu0 %v225
      %282 = vmatprep.subr.mxu0 0.0
      %283 = vmatpush2.msra.mxu0 0.0
      %284 = vmatprep.subr.mxu0 0.0
      %285 = vmatpush2.msra.mxu0 0.0
      %286 = vmatprep.subr.mxu0 0.0
      %287 = vmatpush2.msra.mxu0 0.0
      %288 = vmatprep.subr.mxu0 0.0
      %289 = vmatpush2.msra.mxu0 0.0
      %290 = vmatprep.subr.mxu0 0.0
      %291 = vmatpush2.msra.mxu0 0.0
      %292 = vmatprep.subr.mxu0 0.0
      %293 = vmatpush2.msra.mxu0 0.0
      %294 = vmatprep.subr.mxu0 0.0
      %295 = vmatpush2.msra.mxu0 0.0
      %296 = vmatprep.subr.mxu0 0.0
      %297 = vmatpush2.msra.mxu0 0.0
      %298 = vmatprep.subr.mxu0 0.0
      %299 = vmatpush2.msra.mxu0 0.0
      %300 = vmatprep.subr.mxu0 0.0
      %301 = vmatpush2.msra.mxu0 0.0
      %302 = vmatprep.subr.mxu0 0.0
      %303 = vmatpush2.msra.mxu0 0.0
      %304 = vmatprep.subr.mxu0 0.0
      %305 = vmatpush2.msra.mxu0 0.0
      %306 = vmatprep.subr.mxu0 0.0
      %307 = vmatpush2.msra.mxu0 0.0
      %308 = vmatprep.subr.mxu0 0.0
      %309 = vmatpush2.msra.mxu0 0.0
      %310 = vmatprep.subr.mxu0 0.0
      %311 = vmatpush2.msra.mxu0 0.0
      %312 = vmatprep.subr.mxu0 0.0
      %313 = vmatpush2.msra.mxu0 0.0
      %314 = vmatprep.mubr.f32.mxu0 0.0
      %315 = vmatmul.mubr.f32.gmra.mxu0 %v242
      %v316 = vpop.f32.mrf.mxu0
      %v317 = vadd.f32 %v248, %v316
      %v318 = vpop.f32.mrf.mxu0
      %319 = vmatprep.mubr.f32.mxu0 0.0
      %320 = vmatmul.mubr.f32.gmra.mxu0 %v243
      %v321 = vpop.f32.mrf.mxu0
      %v322 = vadd.f32 %v248, %v321
      %v323 = vpop.f32.mrf.mxu0
      %324 = vdwg.mxu0
      %v325 = vmax.f32 %v317, 0.0
      %v326 = vmax.f32 %v322, 0.0
      %327 = vst [vmem:[#allocation2] sm:$0xff] %v325
      %328 = vst [vmem:[#allocation2 + $0x8] sm:$0xf] %v326
      %s329 = scalar_lea.vmem %s219, 16
      %v330 = vld [vmem:[%s329] sm:$0xff]
      %v331 = vld [vmem:[%s329 + $0x8] sm:$0xf]
      %332 = vmatprep.subr.mxu0 0.0
      %333 = vmatpush1.msra.mxu0 %v240
      %334 = vmatprep.subr.mxu0 0.0
      %335 = vmatpush1.msra.mxu0 %v239
      %336 = vmatprep.subr.mxu0 0.0
      %337 = vmatpush1.msra.mxu0 %v238
      %338 = vmatprep.subr.mxu0 0.0
      %339 = vmatpush1.msra.mxu0 %v237
      %340 = vmatprep.subr.mxu0 0.0
      %341 = vmatpush1.msra.mxu0 %v236
      %342 = vmatprep.subr.mxu0 0.0
      %343 = vmatpush1.msra.mxu0 %v235
      %344 = vmatprep.subr.mxu0 0.0
      %345 = vmatpush1.msra.mxu0 %v234
      %346 = vmatprep.subr.mxu0 0.0
      %347 = vmatpush1.msra.mxu0 %v233
      %348 = vmatprep.subr.mxu0 0.0
      %349 = vmatpush1.msra.mxu0 %v232
      %350 = vmatprep.subr.mxu0 0.0
      %351 = vmatpush1.msra.mxu0 %v231
      %352 = vmatprep.subr.mxu0 0.0
      %353 = vmatpush1.msra.mxu0 %v230
      %354 = vmatprep.subr.mxu0 0.0
      %355 = vmatpush1.msra.mxu0 %v229
      %356 = vmatprep.subr.mxu0 0.0
      %357 = vmatpush1.msra.mxu0 %v228
      %358 = vmatprep.subr.mxu0 0.0
      %359 = vmatpush1.msra.mxu0 %v227
      %360 = vmatprep.subr.mxu0 0.0
      %361 = vmatpush1.msra.mxu0 %v226
      %362 = vmatprep.subr.mxu0 0.0
      %363 = vmatpush1.msra.mxu0 %v225
      %364 = vmatprep.subr.mxu0 0.0
      %365 = vmatpush2.msra.mxu0 0.0
      %366 = vmatprep.subr.mxu0 0.0
      %367 = vmatpush2.msra.mxu0 0.0
      %368 = vmatprep.subr.mxu0 0.0
      %369 = vmatpush2.msra.mxu0 0.0
      %370 = vmatprep.subr.mxu0 0.0
      %371 = vmatpush2.msra.mxu0 0.0
      %372 = vmatprep.subr.mxu0 0.0
      %373 = vmatpush2.msra.mxu0 0.0
      %374 = vmatprep.subr.mxu0 0.0
      %375 = vmatpush2.msra.mxu0 0.0
      %376 = vmatprep.subr.mxu0 0.0
      %377 = vmatpush2.msra.mxu0 0.0
      %378 = vmatprep.subr.mxu0 0.0
      %379 = vmatpush2.msra.mxu0 0.0
      %380 = vmatprep.subr.mxu0 0.0
      %381 = vmatpush2.msra.mxu0 0.0
      %382 = vmatprep.subr.mxu0 0.0
      %383 = vmatpush2.msra.mxu0 0.0
      %384 = vmatprep.subr.mxu0 0.0
      %385 = vmatpush2.msra.mxu0 0.0
      %386 = vmatprep.subr.mxu0 0.0
      %387 = vmatpush2.msra.mxu0 0.0
      %388 = vmatprep.subr.mxu0 0.0
      %389 = vmatpush2.msra.mxu0 0.0
      %390 = vmatprep.subr.mxu0 0.0
      %391 = vmatpush2.msra.mxu0 0.0
      %392 = vmatprep.subr.mxu0 0.0
      %393 = vmatpush2.msra.mxu0 0.0
      %394 = vmatprep.subr.mxu0 0.0
      %395 = vmatpush2.msra.mxu0 0.0
      %396 = vmatprep.mubr.f32.mxu0 0.0
      %397 = vmatmul.mubr.f32.gmra.mxu0 %v330
      %v398 = vpop.f32.mrf.mxu0
      %v399 = vadd.f32 %v248, %v398
      %v400 = vpop.f32.mrf.mxu0
      %401 = vmatprep.mubr.f32.mxu0 0.0
      %402 = vmatmul.mubr.f32.gmra.mxu0 %v331
      %v403 = vpop.f32.mrf.mxu0
      %v404 = vadd.f32 %v248, %v403
      %v405 = vpop.f32.mrf.mxu0
      %406 = vdwg.mxu0
      %v407 = vmax.f32 %v399, 0.0
      %v408 = vmax.f32 %v404, 0.0
      %s409 = scalar_lea.vmem [#allocation2], 16
      %410 = vst [vmem:[%s409] sm:$0xff] %v407
      %411 = vst [vmem:[%s409 + $0x8] sm:$0xf] %v408
      %s412 = scalar_lea.vmem %s219, 32
      %v413 = vld [vmem:[%s412] sm:$0xff]
      %v414 = vld [vmem:[%s412 + $0x8] sm:$0xf]
      %415 = vmatprep.subr.mxu0 0.0
      %416 = vmatpush1.msra.mxu0 %v240
      %417 = vmatprep.subr.mxu0 0.0
      %418 = vmatpush1.msra.mxu0 %v239
      %419 = vmatprep.subr.mxu0 0.0
      %420 = vmatpush1.msra.mxu0 %v238
      %421 = vmatprep.subr.mxu0 0.0
      %422 = vmatpush1.msra.mxu0 %v237
      %423 = vmatprep.subr.mxu0 0.0
      %424 = vmatpush1.msra.mxu0 %v236
      %425 = vmatprep.subr.mxu0 0.0
      %426 = vmatpush1.msra.mxu0 %v235
      %427 = vmatprep.subr.mxu0 0.0
      %428 = vmatpush1.msra.mxu0 %v234
      %429 = vmatprep.subr.mxu0 0.0
      %430 = vmatpush1.msra.mxu0 %v233
      %431 = vmatprep.subr.mxu0 0.0
      %432 = vmatpush1.msra.mxu0 %v232
      %433 = vmatprep.subr.mxu0 0.0
      %434 = vmatpush1.msra.mxu0 %v231
      %435 = vmatprep.subr.mxu0 0.0
      %436 = vmatpush1.msra.mxu0 %v230
      %437 = vmatprep.subr.mxu0 0.0
      %438 = vmatpush1.msra.mxu0 %v229
      %439 = vmatprep.subr.mxu0 0.0
      %440 = vmatpush1.msra.mxu0 %v228
      %441 = vmatprep.subr.mxu0 0.0
      %442 = vmatpush1.msra.mxu0 %v227
      %443 = vmatprep.subr.mxu0 0.0
      %444 = vmatpush1.msra.mxu0 %v226
      %445 = vmatprep.subr.mxu0 0.0
      %446 = vmatpush1.msra.mxu0 %v225
      %447 = vmatprep.subr.mxu0 0.0
      %448 = vmatpush2.msra.mxu0 0.0
      %449 = vmatprep.subr.mxu0 0.0
      %450 = vmatpush2.msra.mxu0 0.0
      %451 = vmatprep.subr.mxu0 0.0
      %452 = vmatpush2.msra.mxu0 0.0
      %453 = vmatprep.subr.mxu0 0.0
      %454 = vmatpush2.msra.mxu0 0.0
      %455 = vmatprep.subr.mxu0 0.0
      %456 = vmatpush2.msra.mxu0 0.0
      %457 = vmatprep.subr.mxu0 0.0
      %458 = vmatpush2.msra.mxu0 0.0
      %459 = vmatprep.subr.mxu0 0.0
      %460 = vmatpush2.msra.mxu0 0.0
      %461 = vmatprep.subr.mxu0 0.0
      %462 = vmatpush2.msra.mxu0 0.0
      %463 = vmatprep.subr.mxu0 0.0
      %464 = vmatpush2.msra.mxu0 0.0
      %465 = vmatprep.subr.mxu0 0.0
      %466 = vmatpush2.msra.mxu0 0.0
      %467 = vmatprep.subr.mxu0 0.0
      %468 = vmatpush2.msra.mxu0 0.0
      %469 = vmatprep.subr.mxu0 0.0
      %470 = vmatpush2.msra.mxu0 0.0
      %471 = vmatprep.subr.mxu0 0.0
      %472 = vmatpush2.msra.mxu0 0.0
      %473 = vmatprep.subr.mxu0 0.0
      %474 = vmatpush2.msra.mxu0 0.0
      %475 = vmatprep.subr.mxu0 0.0
      %476 = vmatpush2.msra.mxu0 0.0
      %477 = vmatprep.subr.mxu0 0.0
      %478 = vmatpush2.msra.mxu0 0.0
      %479 = vmatprep.mubr.f32.mxu0 0.0
      %480 = vmatmul.mubr.f32.gmra.mxu0 %v413
      %v481 = vpop.f32.mrf.mxu0
      %v482 = vadd.f32 %v248, %v481
      %v483 = vpop.f32.mrf.mxu0
      %484 = vmatprep.mubr.f32.mxu0 0.0
      %485 = vmatmul.mubr.f32.gmra.mxu0 %v414
      %v486 = vpop.f32.mrf.mxu0
      %v487 = vadd.f32 %v248, %v486
      %v488 = vpop.f32.mrf.mxu0
      %489 = vdwg.mxu0
      %v490 = vmax.f32 %v482, 0.0
      %v491 = vmax.f32 %v487, 0.0
      %s492 = scalar_lea.vmem [#allocation2], 32
      %493 = vst [vmem:[%s492] sm:$0xff] %v490
      %494 = vst [vmem:[%s492 + $0x8] sm:$0xf] %v491
      %s495 = scalar_lea.vmem %s219, 48
      %v496 = vld [vmem:[%s495] sm:$0xff]
      %v497 = vld [vmem:[%s495 + $0x8] sm:$0xf]
      %498 = vmatprep.subr.mxu0 0.0
      %499 = vmatpush1.msra.mxu0 %v240
      %500 = vmatprep.subr.mxu0 0.0
      %501 = vmatpush1.msra.mxu0 %v239
      %502 = vmatprep.subr.mxu0 0.0
      %503 = vmatpush1.msra.mxu0 %v238
      %504 = vmatprep.subr.mxu0 0.0
      %505 = vmatpush1.msra.mxu0 %v237
      %506 = vmatprep.subr.mxu0 0.0
      %507 = vmatpush1.msra.mxu0 %v236
      %508 = vmatprep.subr.mxu0 0.0
      %509 = vmatpush1.msra.mxu0 %v235
      %510 = vmatprep.subr.mxu0 0.0
      %511 = vmatpush1.msra.mxu0 %v234
      %512 = vmatprep.subr.mxu0 0.0
      %513 = vmatpush1.msra.mxu0 %v233
      %514 = vmatprep.subr.mxu0 0.0
      %515 = vmatpush1.msra.mxu0 %v232
      %516 = vmatprep.subr.mxu0 0.0
      %517 = vmatpush1.msra.mxu0 %v231
      %518 = vmatprep.subr.mxu0 0.0
      %519 = vmatpush1.msra.mxu0 %v230
      %520 = vmatprep.subr.mxu0 0.0
      %521 = vmatpush1.msra.mxu0 %v229
      %522 = vmatprep.subr.mxu0 0.0
      %523 = vmatpush1.msra.mxu0 %v228
      %524 = vmatprep.subr.mxu0 0.0
      %525 = vmatpush1.msra.mxu0 %v227
      %526 = vmatprep.subr.mxu0 0.0
      %527 = vmatpush1.msra.mxu0 %v226
      %528 = vmatprep.subr.mxu0 0.0
      %529 = vmatpush1.msra.mxu0 %v225
      %530 = vmatprep.subr.mxu0 0.0
      %531 = vmatpush2.msra.mxu0 0.0
      %532 = vmatprep.subr.mxu0 0.0
      %533 = vmatpush2.msra.mxu0 0.0
      %534 = vmatprep.subr.mxu0 0.0
      %535 = vmatpush2.msra.mxu0 0.0
      %536 = vmatprep.subr.mxu0 0.0
      %537 = vmatpush2.msra.mxu0 0.0
      %538 = vmatprep.subr.mxu0 0.0
      %539 = vmatpush2.msra.mxu0 0.0
      %540 = vmatprep.subr.mxu0 0.0
      %541 = vmatpush2.msra.mxu0 0.0
      %542 = vmatprep.subr.mxu0 0.0
      %543 = vmatpush2.msra.mxu0 0.0
      %544 = vmatprep.subr.mxu0 0.0
      %545 = vmatpush2.msra.mxu0 0.0
      %546 = vmatprep.subr.mxu0 0.0
      %547 = vmatpush2.msra.mxu0 0.0
      %548 = vmatprep.subr.mxu0 0.0
      %549 = vmatpush2.msra.mxu0 0.0
      %550 = vmatprep.subr.mxu0 0.0
      %551 = vmatpush2.msra.mxu0 0.0
      %552 = vmatprep.subr.mxu0 0.0
      %553 = vmatpush2.msra.mxu0 0.0
      %554 = vmatprep.subr.mxu0 0.0
      %555 = vmatpush2.msra.mxu0 0.0
      %556 = vmatprep.subr.mxu0 0.0
      %557 = vmatpush2.msra.mxu0 0.0
      %558 = vmatprep.subr.mxu0 0.0
      %559 = vmatpush2.msra.mxu0 0.0
      %560 = vmatprep.subr.mxu0 0.0
      %561 = vmatpush2.msra.mxu0 0.0
      %562 = vmatprep.mubr.f32.mxu0 0.0
      %563 = vmatmul.mubr.f32.gmra.mxu0 %v496
      %v564 = vpop.f32.mrf.mxu0
      %v565 = vadd.f32 %v248, %v564
      %v566 = vpop.f32.mrf.mxu0
      %567 = vmatprep.mubr.f32.mxu0 0.0
      %568 = vmatmul.mubr.f32.gmra.mxu0 %v497
      %v569 = vpop.f32.mrf.mxu0
      %v570 = vadd.f32 %v248, %v569
      %v571 = vpop.f32.mrf.mxu0
      %572 = vdwg.mxu0
      %v573 = vmax.f32 %v565, 0.0
      %v574 = vmax.f32 %v570, 0.0
      %s575 = scalar_lea.vmem [#allocation2], 48
      %576 = vst [vmem:[%s575] sm:$0xff] %v573
      %577 = vst [vmem:[%s575 + $0x8] sm:$0xf] %v574
      %s578 = scalar_lea.vmem %s219, 64
      %v579 = vld [vmem:[%s578] sm:$0xff]
      %v580 = vld [vmem:[%s578 + $0x8] sm:$0xf]
      %581 = vmatprep.subr.mxu0 0.0
      %582 = vmatpush1.msra.mxu0 %v240
      %583 = vmatprep.subr.mxu0 0.0
      %584 = vmatpush1.msra.mxu0 %v239
      %585 = vmatprep.subr.mxu0 0.0
      %586 = vmatpush1.msra.mxu0 %v238
      %587 = vmatprep.subr.mxu0 0.0
      %588 = vmatpush1.msra.mxu0 %v237
      %589 = vmatprep.subr.mxu0 0.0
      %590 = vmatpush1.msra.mxu0 %v236
      %591 = vmatprep.subr.mxu0 0.0
      %592 = vmatpush1.msra.mxu0 %v235
      %593 = vmatprep.subr.mxu0 0.0
      %594 = vmatpush1.msra.mxu0 %v234
      %595 = vmatprep.subr.mxu0 0.0
      %596 = vmatpush1.msra.mxu0 %v233
      %597 = vmatprep.subr.mxu0 0.0
      %598 = vmatpush1.msra.mxu0 %v232
      %599 = vmatprep.subr.mxu0 0.0
      %600 = vmatpush1.msra.mxu0 %v231
      %601 = vmatprep.subr.mxu0 0.0
      %602 = vmatpush1.msra.mxu0 %v230
      %603 = vmatprep.subr.mxu0 0.0
      %604 = vmatpush1.msra.mxu0 %v229
      %605 = vmatprep.subr.mxu0 0.0
      %606 = vmatpush1.msra.mxu0 %v228
      %607 = vmatprep.subr.mxu0 0.0
      %608 = vmatpush1.msra.mxu0 %v227
      %609 = vmatprep.subr.mxu0 0.0
      %610 = vmatpush1.msra.mxu0 %v226
      %611 = vmatprep.subr.mxu0 0.0
      %612 = vmatpush1.msra.mxu0 %v225
      %613 = vmatprep.subr.mxu0 0.0
      %614 = vmatpush2.msra.mxu0 0.0
      %615 = vmatprep.subr.mxu0 0.0
      %616 = vmatpush2.msra.mxu0 0.0
      %617 = vmatprep.subr.mxu0 0.0
      %618 = vmatpush2.msra.mxu0 0.0
      %619 = vmatprep.subr.mxu0 0.0
      %620 = vmatpush2.msra.mxu0 0.0
      %621 = vmatprep.subr.mxu0 0.0
      %622 = vmatpush2.msra.mxu0 0.0
      %623 = vmatprep.subr.mxu0 0.0
      %624 = vmatpush2.msra.mxu0 0.0
      %625 = vmatprep.subr.mxu0 0.0
      %626 = vmatpush2.msra.mxu0 0.0
      %627 = vmatprep.subr.mxu0 0.0
      %628 = vmatpush2.msra.mxu0 0.0
      %629 = vmatprep.subr.mxu0 0.0
      %630 = vmatpush2.msra.mxu0 0.0
      %631 = vmatprep.subr.mxu0 0.0
      %632 = vmatpush2.msra.mxu0 0.0
      %633 = vmatprep.subr.mxu0 0.0
      %634 = vmatpush2.msra.mxu0 0.0
      %635 = vmatprep.subr.mxu0 0.0
      %636 = vmatpush2.msra.mxu0 0.0
      %637 = vmatprep.subr.mxu0 0.0
      %638 = vmatpush2.msra.mxu0 0.0
      %639 = vmatprep.subr.mxu0 0.0
      %640 = vmatpush2.msra.mxu0 0.0
      %641 = vmatprep.subr.mxu0 0.0
      %642 = vmatpush2.msra.mxu0 0.0
      %643 = vmatprep.subr.mxu0 0.0
      %644 = vmatpush2.msra.mxu0 0.0
      %645 = vmatprep.mubr.f32.mxu0 0.0
      %646 = vmatmul.mubr.f32.gmra.mxu0 %v579
      %v647 = vpop.f32.mrf.mxu0
      %v648 = vadd.f32 %v248, %v647
      %v649 = vpop.f32.mrf.mxu0
      %650 = vmatprep.mubr.f32.mxu0 0.0
      %651 = vmatmul.mubr.f32.gmra.mxu0 %v580
      %v652 = vpop.f32.mrf.mxu0
      %v653 = vadd.f32 %v248, %v652
      %v654 = vpop.f32.mrf.mxu0
      %655 = vdwg.mxu0
      %v656 = vmax.f32 %v648, 0.0
      %v657 = vmax.f32 %v653, 0.0
      %s658 = scalar_lea.vmem [#allocation2], 64
      %659 = vst [vmem:[%s658] sm:$0xff] %v656
      %660 = vst [vmem:[%s658 + $0x8] sm:$0xf] %v657
      %s661 = scalar_lea.vmem %s219, 80
      %v662 = vld [vmem:[%s661] sm:$0xff]
      %v663 = vld [vmem:[%s661 + $0x8] sm:$0xf]
      %664 = vmatprep.subr.mxu0 0.0
      %665 = vmatpush1.msra.mxu0 %v240
      %666 = vmatprep.subr.mxu0 0.0
      %667 = vmatpush1.msra.mxu0 %v239
      %668 = vmatprep.subr.mxu0 0.0
      %669 = vmatpush1.msra.mxu0 %v238
      %670 = vmatprep.subr.mxu0 0.0
      %671 = vmatpush1.msra.mxu0 %v237
      %672 = vmatprep.subr.mxu0 0.0
      %673 = vmatpush1.msra.mxu0 %v236
      %674 = vmatprep.subr.mxu0 0.0
      %675 = vmatpush1.msra.mxu0 %v235
      %676 = vmatprep.subr.mxu0 0.0
      %677 = vmatpush1.msra.mxu0 %v234
      %678 = vmatprep.subr.mxu0 0.0
      %679 = vmatpush1.msra.mxu0 %v233
      %680 = vmatprep.subr.mxu0 0.0
      %681 = vmatpush1.msra.mxu0 %v232
      %682 = vmatprep.subr.mxu0 0.0
      %683 = vmatpush1.msra.mxu0 %v231
      %684 = vmatprep.subr.mxu0 0.0
      %685 = vmatpush1.msra.mxu0 %v230
      %686 = vmatprep.subr.mxu0 0.0
      %687 = vmatpush1.msra.mxu0 %v229
      %688 = vmatprep.subr.mxu0 0.0
      %689 = vmatpush1.msra.mxu0 %v228
      %690 = vmatprep.subr.mxu0 0.0
      %691 = vmatpush1.msra.mxu0 %v227
      %692 = vmatprep.subr.mxu0 0.0
      %693 = vmatpush1.msra.mxu0 %v226
      %694 = vmatprep.subr.mxu0 0.0
      %695 = vmatpush1.msra.mxu0 %v225
      %696 = vmatprep.subr.mxu0 0.0
      %697 = vmatpush2.msra.mxu0 0.0
      %698 = vmatprep.subr.mxu0 0.0
      %699 = vmatpush2.msra.mxu0 0.0
      %700 = vmatprep.subr.mxu0 0.0
      %701 = vmatpush2.msra.mxu0 0.0
      %702 = vmatprep.subr.mxu0 0.0
      %703 = vmatpush2.msra.mxu0 0.0
      %704 = vmatprep.subr.mxu0 0.0
      %705 = vmatpush2.msra.mxu0 0.0
      %706 = vmatprep.subr.mxu0 0.0
      %707 = vmatpush2.msra.mxu0 0.0
      %708 = vmatprep.subr.mxu0 0.0
      %709 = vmatpush2.msra.mxu0 0.0
      %710 = vmatprep.subr.mxu0 0.0
      %711 = vmatpush2.msra.mxu0 0.0
      %712 = vmatprep.subr.mxu0 0.0
      %713 = vmatpush2.msra.mxu0 0.0
      %714 = vmatprep.subr.mxu0 0.0
      %715 = vmatpush2.msra.mxu0 0.0
      %716 = vmatprep.subr.mxu0 0.0
      %717 = vmatpush2.msra.mxu0 0.0
      %718 = vmatprep.subr.mxu0 0.0
      %719 = vmatpush2.msra.mxu0 0.0
      %720 = vmatprep.subr.mxu0 0.0
      %721 = vmatpush2.msra.mxu0 0.0
      %722 = vmatprep.subr.mxu0 0.0
      %723 = vmatpush2.msra.mxu0 0.0
      %724 = vmatprep.subr.mxu0 0.0
      %725 = vmatpush2.msra.mxu0 0.0
      %726 = vmatprep.subr.mxu0 0.0
      %727 = vmatpush2.msra.mxu0 0.0
      %728 = vmatprep.mubr.f32.mxu0 0.0
      %729 = vmatmul.mubr.f32.gmra.mxu0 %v662
      %v730 = vpop.f32.mrf.mxu0
      %v731 = vadd.f32 %v248, %v730
      %v732 = vpop.f32.mrf.mxu0
      %733 = vmatprep.mubr.f32.mxu0 0.0
      %734 = vmatmul.mubr.f32.gmra.mxu0 %v663
      %v735 = vpop.f32.mrf.mxu0
      %v736 = vadd.f32 %v248, %v735
      %v737 = vpop.f32.mrf.mxu0
      %738 = vdwg.mxu0
      %v739 = vmax.f32 %v731, 0.0
      %v740 = vmax.f32 %v736, 0.0
      %s741 = scalar_lea.vmem [#allocation2], 80
      %742 = vst [vmem:[%s741] sm:$0xff] %v739
      %743 = vst [vmem:[%s741 + $0x8] sm:$0xf] %v740
      %s744 = scalar_lea.vmem %s219, 96
      %v745 = vld [vmem:[%s744] sm:$0xff]
      %v746 = vld [vmem:[%s744 + $0x8] sm:$0xf]
      %747 = vmatprep.subr.mxu0 0.0
      %748 = vmatpush1.msra.mxu0 %v240
      %749 = vmatprep.subr.mxu0 0.0
      %750 = vmatpush1.msra.mxu0 %v239
      %751 = vmatprep.subr.mxu0 0.0
      %752 = vmatpush1.msra.mxu0 %v238
      %753 = vmatprep.subr.mxu0 0.0
      %754 = vmatpush1.msra.mxu0 %v237
      %755 = vmatprep.subr.mxu0 0.0
      %756 = vmatpush1.msra.mxu0 %v236
      %757 = vmatprep.subr.mxu0 0.0
      %758 = vmatpush1.msra.mxu0 %v235
      %759 = vmatprep.subr.mxu0 0.0
      %760 = vmatpush1.msra.mxu0 %v234
      %761 = vmatprep.subr.mxu0 0.0
      %762 = vmatpush1.msra.mxu0 %v233
      %763 = vmatprep.subr.mxu0 0.0
      %764 = vmatpush1.msra.mxu0 %v232
      %765 = vmatprep.subr.mxu0 0.0
      %766 = vmatpush1.msra.mxu0 %v231
      %767 = vmatprep.subr.mxu0 0.0
      %768 = vmatpush1.msra.mxu0 %v230
      %769 = vmatprep.subr.mxu0 0.0
      %770 = vmatpush1.msra.mxu0 %v229
      %771 = vmatprep.subr.mxu0 0.0
      %772 = vmatpush1.msra.mxu0 %v228
      %773 = vmatprep.subr.mxu0 0.0
      %774 = vmatpush1.msra.mxu0 %v227
      %775 = vmatprep.subr.mxu0 0.0
      %776 = vmatpush1.msra.mxu0 %v226
      %777 = vmatprep.subr.mxu0 0.0
      %778 = vmatpush1.msra.mxu0 %v225
      %779 = vmatprep.subr.mxu0 0.0
      %780 = vmatpush2.msra.mxu0 0.0
      %781 = vmatprep.subr.mxu0 0.0
      %782 = vmatpush2.msra.mxu0 0.0
      %783 = vmatprep.subr.mxu0 0.0
      %784 = vmatpush2.msra.mxu0 0.0
      %785 = vmatprep.subr.mxu0 0.0
      %786 = vmatpush2.msra.mxu0 0.0
      %787 = vmatprep.subr.mxu0 0.0
      %788 = vmatpush2.msra.mxu0 0.0
      %789 = vmatprep.subr.mxu0 0.0
      %790 = vmatpush2.msra.mxu0 0.0
      %791 = vmatprep.subr.mxu0 0.0
      %792 = vmatpush2.msra.mxu0 0.0
      %793 = vmatprep.subr.mxu0 0.0
      %794 = vmatpush2.msra.mxu0 0.0
      %795 = vmatprep.subr.mxu0 0.0
      %796 = vmatpush2.msra.mxu0 0.0
      %797 = vmatprep.subr.mxu0 0.0
      %798 = vmatpush2.msra.mxu0 0.0
      %799 = vmatprep.subr.mxu0 0.0
      %800 = vmatpush2.msra.mxu0 0.0
      %801 = vmatprep.subr.mxu0 0.0
      %802 = vmatpush2.msra.mxu0 0.0
      %803 = vmatprep.subr.mxu0 0.0
      %804 = vmatpush2.msra.mxu0 0.0
      %805 = vmatprep.subr.mxu0 0.0
      %806 = vmatpush2.msra.mxu0 0.0
      %807 = vmatprep.subr.mxu0 0.0
      %808 = vmatpush2.msra.mxu0 0.0
      %809 = vmatprep.subr.mxu0 0.0
      %810 = vmatpush2.msra.mxu0 0.0
      %811 = vmatprep.mubr.f32.mxu0 0.0
      %812 = vmatmul.mubr.f32.gmra.mxu0 %v745
      %v813 = vpop.f32.mrf.mxu0
      %v814 = vadd.f32 %v248, %v813
      %v815 = vpop.f32.mrf.mxu0
      %816 = vmatprep.mubr.f32.mxu0 0.0
      %817 = vmatmul.mubr.f32.gmra.mxu0 %v746
      %v818 = vpop.f32.mrf.mxu0
      %v819 = vadd.f32 %v248, %v818
      %v820 = vpop.f32.mrf.mxu0
      %821 = vdwg.mxu0
      %v822 = vmax.f32 %v814, 0.0
      %v823 = vmax.f32 %v819, 0.0
      %s824 = scalar_lea.vmem [#allocation2], 96
      %825 = vst [vmem:[%s824] sm:$0xff] %v822
      %826 = vst [vmem:[%s824 + $0x8] sm:$0xf] %v823
      %s827 = scalar_lea.vmem %s219, 112
      %v828 = vld [vmem:[%s827] sm:$0xff]
      %v829 = vld [vmem:[%s827 + $0x8] sm:$0xf]
      %830 = vmatprep.subr.mxu0 0.0
      %831 = vmatpush1.msra.mxu0 %v240
      %832 = vmatprep.subr.mxu0 0.0
      %833 = vmatpush1.msra.mxu0 %v239
      %834 = vmatprep.subr.mxu0 0.0
      %835 = vmatpush1.msra.mxu0 %v238
      %836 = vmatprep.subr.mxu0 0.0
      %837 = vmatpush1.msra.mxu0 %v237
      %838 = vmatprep.subr.mxu0 0.0
      %839 = vmatpush1.msra.mxu0 %v236
      %840 = vmatprep.subr.mxu0 0.0
      %841 = vmatpush1.msra.mxu0 %v235
      %842 = vmatprep.subr.mxu0 0.0
      %843 = vmatpush1.msra.mxu0 %v234
      %844 = vmatprep.subr.mxu0 0.0
      %845 = vmatpush1.msra.mxu0 %v233
      %846 = vmatprep.subr.mxu0 0.0
      %847 = vmatpush1.msra.mxu0 %v232
      %848 = vmatprep.subr.mxu0 0.0
      %849 = vmatpush1.msra.mxu0 %v231
      %850 = vmatprep.subr.mxu0 0.0
      %851 = vmatpush1.msra.mxu0 %v230
      %852 = vmatprep.subr.mxu0 0.0
      %853 = vmatpush1.msra.mxu0 %v229
      %854 = vmatprep.subr.mxu0 0.0
      %855 = vmatpush1.msra.mxu0 %v228
      %856 = vmatprep.subr.mxu0 0.0
      %857 = vmatpush1.msra.mxu0 %v227
      %858 = vmatprep.subr.mxu0 0.0
      %859 = vmatpush1.msra.mxu0 %v226
      %860 = vmatprep.subr.mxu0 0.0
      %861 = vmatpush1.msra.mxu0 %v225
      %862 = vmatprep.subr.mxu0 0.0
      %863 = vmatpush2.msra.mxu0 0.0
      %864 = vmatprep.subr.mxu0 0.0
      %865 = vmatpush2.msra.mxu0 0.0
      %866 = vmatprep.subr.mxu0 0.0
      %867 = vmatpush2.msra.mxu0 0.0
      %868 = vmatprep.subr.mxu0 0.0
      %869 = vmatpush2.msra.mxu0 0.0
      %870 = vmatprep.subr.mxu0 0.0
      %871 = vmatpush2.msra.mxu0 0.0
      %872 = vmatprep.subr.mxu0 0.0
      %873 = vmatpush2.msra.mxu0 0.0
      %874 = vmatprep.subr.mxu0 0.0
      %875 = vmatpush2.msra.mxu0 0.0
      %876 = vmatprep.subr.mxu0 0.0
      %877 = vmatpush2.msra.mxu0 0.0
      %878 = vmatprep.subr.mxu0 0.0
      %879 = vmatpush2.msra.mxu0 0.0
      %880 = vmatprep.subr.mxu0 0.0
      %881 = vmatpush2.msra.mxu0 0.0
      %882 = vmatprep.subr.mxu0 0.0
      %883 = vmatpush2.msra.mxu0 0.0
      %884 = vmatprep.subr.mxu0 0.0
      %885 = vmatpush2.msra.mxu0 0.0
      %886 = vmatprep.subr.mxu0 0.0
      %887 = vmatpush2.msra.mxu0 0.0
      %888 = vmatprep.subr.mxu0 0.0
      %889 = vmatpush2.msra.mxu0 0.0
      %890 = vmatprep.subr.mxu0 0.0
      %891 = vmatpush2.msra.mxu0 0.0
      %892 = vmatprep.subr.mxu0 0.0
      %893 = vmatpush2.msra.mxu0 0.0
      %894 = vmatprep.mubr.f32.mxu0 0.0
      %895 = vmatmul.mubr.f32.gmra.mxu0 %v828
      %v896 = vpop.f32.mrf.mxu0
      %v897 = vadd.f32 %v248, %v896
      %v898 = vpop.f32.mrf.mxu0
      %899 = vmatprep.mubr.f32.mxu0 0.0
      %900 = vmatmul.mubr.f32.gmra.mxu0 %v829
      %v901 = vpop.f32.mrf.mxu0
      %v902 = vadd.f32 %v248, %v901
      %v903 = vpop.f32.mrf.mxu0
      %904 = vdwg.mxu0
      %v905 = vmax.f32 %v897, 0.0
      %v906 = vmax.f32 %v902, 0.0
      %s907 = scalar_lea.vmem [#allocation2], 112
      %908 = vst [vmem:[%s907] sm:$0xff] %v905
      %909 = vst [vmem:[%s907 + $0x8] sm:$0xf] %v906
      %s910 = scalar_lea.vmem %s219, 128
      %v911 = vld [vmem:[%s910] sm:$0xff]
      %v912 = vld [vmem:[%s910 + $0x8] sm:$0xf]
      %913 = vmatprep.subr.mxu0 0.0
      %914 = vmatpush1.msra.mxu0 %v240
      %915 = vmatprep.subr.mxu0 0.0
      %916 = vmatpush1.msra.mxu0 %v239
      %917 = vmatprep.subr.mxu0 0.0
      %918 = vmatpush1.msra.mxu0 %v238
      %919 = vmatprep.subr.mxu0 0.0
      %920 = vmatpush1.msra.mxu0 %v237
      %921 = vmatprep.subr.mxu0 0.0
      %922 = vmatpush1.msra.mxu0 %v236
      %923 = vmatprep.subr.mxu0 0.0
      %924 = vmatpush1.msra.mxu0 %v235
      %925 = vmatprep.subr.mxu0 0.0
      %926 = vmatpush1.msra.mxu0 %v234
      %927 = vmatprep.subr.mxu0 0.0
      %928 = vmatpush1.msra.mxu0 %v233
      %929 = vmatprep.subr.mxu0 0.0
      %930 = vmatpush1.msra.mxu0 %v232
      %931 = vmatprep.subr.mxu0 0.0
      %932 = vmatpush1.msra.mxu0 %v231
      %933 = vmatprep.subr.mxu0 0.0
      %934 = vmatpush1.msra.mxu0 %v230
      %935 = vmatprep.subr.mxu0 0.0
      %936 = vmatpush1.msra.mxu0 %v229
      %937 = vmatprep.subr.mxu0 0.0
      %938 = vmatpush1.msra.mxu0 %v228
      %939 = vmatprep.subr.mxu0 0.0
      %940 = vmatpush1.msra.mxu0 %v227
      %941 = vmatprep.subr.mxu0 0.0
      %942 = vmatpush1.msra.mxu0 %v226
      %943 = vmatprep.subr.mxu0 0.0
      %944 = vmatpush1.msra.mxu0 %v225
      %945 = vmatprep.subr.mxu0 0.0
      %946 = vmatpush2.msra.mxu0 0.0
      %947 = vmatprep.subr.mxu0 0.0
      %948 = vmatpush2.msra.mxu0 0.0
      %949 = vmatprep.subr.mxu0 0.0
      %950 = vmatpush2.msra.mxu0 0.0
      %951 = vmatprep.subr.mxu0 0.0
      %952 = vmatpush2.msra.mxu0 0.0
      %953 = vmatprep.subr.mxu0 0.0
      %954 = vmatpush2.msra.mxu0 0.0
      %955 = vmatprep.subr.mxu0 0.0
      %956 = vmatpush2.msra.mxu0 0.0
      %957 = vmatprep.subr.mxu0 0.0
      %958 = vmatpush2.msra.mxu0 0.0
      %959 = vmatprep.subr.mxu0 0.0
      %960 = vmatpush2.msra.mxu0 0.0
      %961 = vmatprep.subr.mxu0 0.0
      %962 = vmatpush2.msra.mxu0 0.0
      %963 = vmatprep.subr.mxu0 0.0
      %964 = vmatpush2.msra.mxu0 0.0
      %965 = vmatprep.subr.mxu0 0.0
      %966 = vmatpush2.msra.mxu0 0.0
      %967 = vmatprep.subr.mxu0 0.0
      %968 = vmatpush2.msra.mxu0 0.0
      %969 = vmatprep.subr.mxu0 0.0
      %970 = vmatpush2.msra.mxu0 0.0
      %971 = vmatprep.subr.mxu0 0.0
      %972 = vmatpush2.msra.mxu0 0.0
      %973 = vmatprep.subr.mxu0 0.0
      %974 = vmatpush2.msra.mxu0 0.0
      %975 = vmatprep.subr.mxu0 0.0
      %976 = vmatpush2.msra.mxu0 0.0
      %977 = vmatprep.mubr.f32.mxu0 0.0
      %978 = vmatmul.mubr.f32.gmra.mxu0 %v911
      %v979 = vpop.f32.mrf.mxu0
      %v980 = vadd.f32 %v248, %v979
      %v981 = vpop.f32.mrf.mxu0
      %982 = vmatprep.mubr.f32.mxu0 0.0
      %983 = vmatmul.mubr.f32.gmra.mxu0 %v912
      %v984 = vpop.f32.mrf.mxu0
      %v985 = vadd.f32 %v248, %v984
      %v986 = vpop.f32.mrf.mxu0
      %987 = vdwg.mxu0
      %v988 = vmax.f32 %v980, 0.0
      %v989 = vmax.f32 %v985, 0.0
      %s990 = scalar_lea.vmem [#allocation2], 128
      %991 = vst [vmem:[%s990] sm:$0xff] %v988
      %992 = vst [vmem:[%s990 + $0x8] sm:$0xf] %v989
      %s993 = scalar_lea.vmem %s219, 144
      %v994 = vld [vmem:[%s993] sm:$0xff]
      %v995 = vld [vmem:[%s993 + $0x8] sm:$0xf]
      %996 = vmatprep.subr.mxu0 0.0
      %997 = vmatpush1.msra.mxu0 %v240
      %998 = vmatprep.subr.mxu0 0.0
      %999 = vmatpush1.msra.mxu0 %v239
      %1000 = vmatprep.subr.mxu0 0.0
      %1001 = vmatpush1.msra.mxu0 %v238
      %1002 = vmatprep.subr.mxu0 0.0
      %1003 = vmatpush1.msra.mxu0 %v237
      %1004 = vmatprep.subr.mxu0 0.0
      %1005 = vmatpush1.msra.mxu0 %v236
      %1006 = vmatprep.subr.mxu0 0.0
      %1007 = vmatpush1.msra.mxu0 %v235
      %1008 = vmatprep.subr.mxu0 0.0
      %1009 = vmatpush1.msra.mxu0 %v234
      %1010 = vmatprep.subr.mxu0 0.0
      %1011 = vmatpush1.msra.mxu0 %v233
      %1012 = vmatprep.subr.mxu0 0.0
      %1013 = vmatpush1.msra.mxu0 %v232
      %1014 = vmatprep.subr.mxu0 0.0
      %1015 = vmatpush1.msra.mxu0 %v231
      %1016 = vmatprep.subr.mxu0 0.0
      %1017 = vmatpush1.msra.mxu0 %v230
      %1018 = vmatprep.subr.mxu0 0.0
      %1019 = vmatpush1.msra.mxu0 %v229
      %1020 = vmatprep.subr.mxu0 0.0
      %1021 = vmatpush1.msra.mxu0 %v228
      %1022 = vmatprep.subr.mxu0 0.0
      %1023 = vmatpush1.msra.mxu0 %v227
      %1024 = vmatprep.subr.mxu0 0.0
      %1025 = vmatpush1.msra.mxu0 %v226
      %1026 = vmatprep.subr.mxu0 0.0
      %1027 = vmatpush1.msra.mxu0 %v225
      %1028 = vmatprep.subr.mxu0 0.0
      %1029 = vmatpush2.msra.mxu0 0.0
      %1030 = vmatprep.subr.mxu0 0.0
      %1031 = vmatpush2.msra.mxu0 0.0
      %1032 = vmatprep.subr.mxu0 0.0
      %1033 = vmatpush2.msra.mxu0 0.0
      %1034 = vmatprep.subr.mxu0 0.0
      %1035 = vmatpush2.msra.mxu0 0.0
      %1036 = vmatprep.subr.mxu0 0.0
      %1037 = vmatpush2.msra.mxu0 0.0
      %1038 = vmatprep.subr.mxu0 0.0
      %1039 = vmatpush2.msra.mxu0 0.0
      %1040 = vmatprep.subr.mxu0 0.0
      %1041 = vmatpush2.msra.mxu0 0.0
      %1042 = vmatprep.subr.mxu0 0.0
      %1043 = vmatpush2.msra.mxu0 0.0
      %1044 = vmatprep.subr.mxu0 0.0
      %1045 = vmatpush2.msra.mxu0 0.0
      %1046 = vmatprep.subr.mxu0 0.0
      %1047 = vmatpush2.msra.mxu0 0.0
      %1048 = vmatprep.subr.mxu0 0.0
      %1049 = vmatpush2.msra.mxu0 0.0
      %1050 = vmatprep.subr.mxu0 0.0
      %1051 = vmatpush2.msra.mxu0 0.0
      %1052 = vmatprep.subr.mxu0 0.0
      %1053 = vmatpush2.msra.mxu0 0.0
      %1054 = vmatprep.subr.mxu0 0.0
      %1055 = vmatpush2.msra.mxu0 0.0
      %1056 = vmatprep.subr.mxu0 0.0
      %1057 = vmatpush2.msra.mxu0 0.0
      %1058 = vmatprep.subr.mxu0 0.0
      %1059 = vmatpush2.msra.mxu0 0.0
      %1060 = vmatprep.mubr.f32.mxu0 0.0
      %1061 = vmatmul.mubr.f32.gmra.mxu0 %v994
      %v1062 = vpop.f32.mrf.mxu0
      %v1063 = vadd.f32 %v248, %v1062
      %v1064 = vpop.f32.mrf.mxu0
      %1065 = vmatprep.mubr.f32.mxu0 0.0
      %1066 = vmatmul.mubr.f32.gmra.mxu0 %v995
      %v1067 = vpop.f32.mrf.mxu0
      %v1068 = vadd.f32 %v248, %v1067
      %v1069 = vpop.f32.mrf.mxu0
      %1070 = vdwg.mxu0
      %v1071 = vmax.f32 %v1063, 0.0
      %v1072 = vmax.f32 %v1068, 0.0
      %s1073 = scalar_lea.vmem [#allocation2], 144
      %1074 = vst [vmem:[%s1073] sm:$0xff] %v1071
      %1075 = vst [vmem:[%s1073 + $0x8] sm:$0xf] %v1072
      %s1076 = scalar_lea.vmem %s219, 160
      %v1077 = vld [vmem:[%s1076] sm:$0xff]
      %v1078 = vld [vmem:[%s1076 + $0x8] sm:$0xf]
      %1079 = vmatprep.subr.mxu0 0.0
      %1080 = vmatpush1.msra.mxu0 %v240
      %1081 = vmatprep.subr.mxu0 0.0
      %1082 = vmatpush1.msra.mxu0 %v239
      %1083 = vmatprep.subr.mxu0 0.0
      %1084 = vmatpush1.msra.mxu0 %v238
      %1085 = vmatprep.subr.mxu0 0.0
      %1086 = vmatpush1.msra.mxu0 %v237
      %1087 = vmatprep.subr.mxu0 0.0
      %1088 = vmatpush1.msra.mxu0 %v236
      %1089 = vmatprep.subr.mxu0 0.0
      %1090 = vmatpush1.msra.mxu0 %v235
      %1091 = vmatprep.subr.mxu0 0.0
      %1092 = vmatpush1.msra.mxu0 %v234
      %1093 = vmatprep.subr.mxu0 0.0
      %1094 = vmatpush1.msra.mxu0 %v233
      %1095 = vmatprep.subr.mxu0 0.0
      %1096 = vmatpush1.msra.mxu0 %v232
      %1097 = vmatprep.subr.mxu0 0.0
      %1098 = vmatpush1.msra.mxu0 %v231
      %1099 = vmatprep.subr.mxu0 0.0
      %1100 = vmatpush1.msra.mxu0 %v230
      %1101 = vmatprep.subr.mxu0 0.0
      %1102 = vmatpush1.msra.mxu0 %v229
      %1103 = vmatprep.subr.mxu0 0.0
      %1104 = vmatpush1.msra.mxu0 %v228
      %1105 = vmatprep.subr.mxu0 0.0
      %1106 = vmatpush1.msra.mxu0 %v227
      %1107 = vmatprep.subr.mxu0 0.0
      %1108 = vmatpush1.msra.mxu0 %v226
      %1109 = vmatprep.subr.mxu0 0.0
      %1110 = vmatpush1.msra.mxu0 %v225
      %1111 = vmatprep.subr.mxu0 0.0
      %1112 = vmatpush2.msra.mxu0 0.0
      %1113 = vmatprep.subr.mxu0 0.0
      %1114 = vmatpush2.msra.mxu0 0.0
      %1115 = vmatprep.subr.mxu0 0.0
      %1116 = vmatpush2.msra.mxu0 0.0
      %1117 = vmatprep.subr.mxu0 0.0
      %1118 = vmatpush2.msra.mxu0 0.0
      %1119 = vmatprep.subr.mxu0 0.0
      %1120 = vmatpush2.msra.mxu0 0.0
      %1121 = vmatprep.subr.mxu0 0.0
      %1122 = vmatpush2.msra.mxu0 0.0
      %1123 = vmatprep.subr.mxu0 0.0
      %1124 = vmatpush2.msra.mxu0 0.0
      %1125 = vmatprep.subr.mxu0 0.0
      %1126 = vmatpush2.msra.mxu0 0.0
      %1127 = vmatprep.subr.mxu0 0.0
      %1128 = vmatpush2.msra.mxu0 0.0
      %1129 = vmatprep.subr.mxu0 0.0
      %1130 = vmatpush2.msra.mxu0 0.0
      %1131 = vmatprep.subr.mxu0 0.0
      %1132 = vmatpush2.msra.mxu0 0.0
      %1133 = vmatprep.subr.mxu0 0.0
      %1134 = vmatpush2.msra.mxu0 0.0
      %1135 = vmatprep.subr.mxu0 0.0
      %1136 = vmatpush2.msra.mxu0 0.0
      %1137 = vmatprep.subr.mxu0 0.0
      %1138 = vmatpush2.msra.mxu0 0.0
      %1139 = vmatprep.subr.mxu0 0.0
      %1140 = vmatpush2.msra.mxu0 0.0
      %1141 = vmatprep.subr.mxu0 0.0
      %1142 = vmatpush2.msra.mxu0 0.0
      %1143 = vmatprep.mubr.f32.mxu0 0.0
      %1144 = vmatmul.mubr.f32.gmra.mxu0 %v1077
      %v1145 = vpop.f32.mrf.mxu0
      %v1146 = vadd.f32 %v248, %v1145
      %v1147 = vpop.f32.mrf.mxu0
      %1148 = vmatprep.mubr.f32.mxu0 0.0
      %1149 = vmatmul.mubr.f32.gmra.mxu0 %v1078
      %v1150 = vpop.f32.mrf.mxu0
      %v1151 = vadd.f32 %v248, %v1150
      %v1152 = vpop.f32.mrf.mxu0
      %1153 = vdwg.mxu0
      %v1154 = vmax.f32 %v1146, 0.0
      %v1155 = vmax.f32 %v1151, 0.0
      %s1156 = scalar_lea.vmem [#allocation2], 160
      %1157 = vst [vmem:[%s1156] sm:$0xff] %v1154
      %1158 = vst [vmem:[%s1156 + $0x8] sm:$0xf] %v1155
      %s1159 = scalar_lea.vmem %s219, 176
      %v1160 = vld [vmem:[%s1159] sm:$0xff]
      %v1161 = vld [vmem:[%s1159 + $0x8] sm:$0xf]
      %1162 = vmatprep.subr.mxu0 0.0
      %1163 = vmatpush1.msra.mxu0 %v240
      %1164 = vmatprep.subr.mxu0 0.0
      %1165 = vmatpush1.msra.mxu0 %v239
      %1166 = vmatprep.subr.mxu0 0.0
      %1167 = vmatpush1.msra.mxu0 %v238
      %1168 = vmatprep.subr.mxu0 0.0
      %1169 = vmatpush1.msra.mxu0 %v237
      %1170 = vmatprep.subr.mxu0 0.0
      %1171 = vmatpush1.msra.mxu0 %v236
      %1172 = vmatprep.subr.mxu0 0.0
      %1173 = vmatpush1.msra.mxu0 %v235
      %1174 = vmatprep.subr.mxu0 0.0
      %1175 = vmatpush1.msra.mxu0 %v234
      %1176 = vmatprep.subr.mxu0 0.0
      %1177 = vmatpush1.msra.mxu0 %v233
      %1178 = vmatprep.subr.mxu0 0.0
      %1179 = vmatpush1.msra.mxu0 %v232
      %1180 = vmatprep.subr.mxu0 0.0
      %1181 = vmatpush1.msra.mxu0 %v231
      %1182 = vmatprep.subr.mxu0 0.0
      %1183 = vmatpush1.msra.mxu0 %v230
      %1184 = vmatprep.subr.mxu0 0.0
      %1185 = vmatpush1.msra.mxu0 %v229
      %1186 = vmatprep.subr.mxu0 0.0
      %1187 = vmatpush1.msra.mxu0 %v228
      %1188 = vmatprep.subr.mxu0 0.0
      %1189 = vmatpush1.msra.mxu0 %v227
      %1190 = vmatprep.subr.mxu0 0.0
      %1191 = vmatpush1.msra.mxu0 %v226
      %1192 = vmatprep.subr.mxu0 0.0
      %1193 = vmatpush1.msra.mxu0 %v225
      %1194 = vmatprep.subr.mxu0 0.0
      %1195 = vmatpush2.msra.mxu0 0.0
      %1196 = vmatprep.subr.mxu0 0.0
      %1197 = vmatpush2.msra.mxu0 0.0
      %1198 = vmatprep.subr.mxu0 0.0
      %1199 = vmatpush2.msra.mxu0 0.0
      %1200 = vmatprep.subr.mxu0 0.0
      %1201 = vmatpush2.msra.mxu0 0.0
      %1202 = vmatprep.subr.mxu0 0.0
      %1203 = vmatpush2.msra.mxu0 0.0
      %1204 = vmatprep.subr.mxu0 0.0
      %1205 = vmatpush2.msra.mxu0 0.0
      %1206 = vmatprep.subr.mxu0 0.0
      %1207 = vmatpush2.msra.mxu0 0.0
      %1208 = vmatprep.subr.mxu0 0.0
      %1209 = vmatpush2.msra.mxu0 0.0
      %1210 = vmatprep.subr.mxu0 0.0
      %1211 = vmatpush2.msra.mxu0 0.0
      %1212 = vmatprep.subr.mxu0 0.0
      %1213 = vmatpush2.msra.mxu0 0.0
      %1214 = vmatprep.subr.mxu0 0.0
      %1215 = vmatpush2.msra.mxu0 0.0
      %1216 = vmatprep.subr.mxu0 0.0
      %1217 = vmatpush2.msra.mxu0 0.0
      %1218 = vmatprep.subr.mxu0 0.0
      %1219 = vmatpush2.msra.mxu0 0.0
      %1220 = vmatprep.subr.mxu0 0.0
      %1221 = vmatpush2.msra.mxu0 0.0
      %1222 = vmatprep.subr.mxu0 0.0
      %1223 = vmatpush2.msra.mxu0 0.0
      %1224 = vmatprep.subr.mxu0 0.0
      %1225 = vmatpush2.msra.mxu0 0.0
      %1226 = vmatprep.mubr.f32.mxu0 0.0
      %1227 = vmatmul.mubr.f32.gmra.mxu0 %v1160
      %v1228 = vpop.f32.mrf.mxu0
      %v1229 = vadd.f32 %v248, %v1228
      %v1230 = vpop.f32.mrf.mxu0
      %1231 = vmatprep.mubr.f32.mxu0 0.0
      %1232 = vmatmul.mubr.f32.gmra.mxu0 %v1161
      %v1233 = vpop.f32.mrf.mxu0
      %v1234 = vadd.f32 %v248, %v1233
      %v1235 = vpop.f32.mrf.mxu0
      %1236 = vdwg.mxu0
      %v1237 = vmax.f32 %v1229, 0.0
      %v1238 = vmax.f32 %v1234, 0.0
      %s1239 = scalar_lea.vmem [#allocation2], 176
      %1240 = vst [vmem:[%s1239] sm:$0xff] %v1237
      %1241 = vst [vmem:[%s1239 + $0x8] sm:$0xf] %v1238
      %v1242 = vld [vmem:[#allocation2] sm:$0xff]
      %v1243 = vld [vmem:[#allocation2 + $0x10] sm:$0xff]
      %v1244 = vld [vmem:[#allocation2 + $0x20] sm:$0xff]
      %v1245 = vld [vmem:[#allocation2 + $0x30] sm:$0xff]
      %v1246 = vld [vmem:[#allocation2 + $0x40] sm:$0xff]
      %v1247 = vld [vmem:[#allocation2 + $0x50] sm:$0xff]
      %v1248 = vld [vmem:[#allocation2 + $0x60] sm:$0xff]
      %v1249 = vld [vmem:[#allocation2 + $0x70] sm:$0xff]
      %v1250 = vld [vmem:[%s3] sm:$0xff]
      %v1251 = vld [vmem:[%s3 + $0x8] sm:$0xff]
      %v1252 = vld [vmem:[%s3 + $0x10] sm:$0xff]
      %v1253 = vld [vmem:[%s3 + $0x18] sm:$0xff]
      %v1254 = vld [vmem:[%s3 + $0x20] sm:$0xff]
      %v1255 = vld [vmem:[%s3 + $0x28] sm:$0xff]
      %v1256 = vld [vmem:[%s3 + $0x30] sm:$0xff]
      %v1257 = vld [vmem:[%s3 + $0x38] sm:$0xff]
      %v1258 = vld [vmem:[%s3 + $0x40] sm:$0xff]
      %v1259 = vld [vmem:[%s3 + $0x48] sm:$0xff]
      %v1260 = vld [vmem:[%s3 + $0x50] sm:$0xff]
      %v1261 = vld [vmem:[%s3 + $0x58] sm:$0xff]
      %v1262 = vld [vmem:[%s3 + $0x60] sm:$0xff]
      %v1263 = vld [vmem:[%s3 + $0x68] sm:$0xff]
      %v1264 = vld [vmem:[%s3 + $0x70] sm:$0xff]
      %v1265 = vld [vmem:[%s3 + $0x78] sm:$0xff]
      %v1266 = vld [vmem:[#allocation2 + $0x1] sm:$0xff]
      %v1267 = vld [vmem:[#allocation2 + $0x11] sm:$0xff]
      %v1268 = vld [vmem:[#allocation2 + $0x21] sm:$0xff]
      %v1269 = vld [vmem:[#allocation2 + $0x31] sm:$0xff]
      %v1270 = vld [vmem:[#allocation2 + $0x41] sm:$0xff]
      %v1271 = vld [vmem:[#allocation2 + $0x51] sm:$0xff]
      %v1272 = vld [vmem:[#allocation2 + $0x61] sm:$0xff]
      %v1273 = vld [vmem:[#allocation2 + $0x71] sm:$0xff]
      %s1274 = scalar_lea.vmem %s3, 128
      %v1275 = vld [vmem:[%s1274] sm:$0xff]
      %v1276 = vld [vmem:[%s1274 + $0x8] sm:$0xff]
      %v1277 = vld [vmem:[%s1274 + $0x10] sm:$0xff]
      %v1278 = vld [vmem:[%s1274 + $0x18] sm:$0xff]
      %v1279 = vld [vmem:[%s1274 + $0x20] sm:$0xff]
      %v1280 = vld [vmem:[%s1274 + $0x28] sm:$0xff]
      %v1281 = vld [vmem:[%s1274 + $0x30] sm:$0xff]
      %v1282 = vld [vmem:[%s1274 + $0x38] sm:$0xff]
      %v1283 = vld [vmem:[%s1274 + $0x40] sm:$0xff]
      %v1284 = vld [vmem:[%s1274 + $0x48] sm:$0xff]
      %v1285 = vld [vmem:[%s1274 + $0x50] sm:$0xff]
      %v1286 = vld [vmem:[%s1274 + $0x58] sm:$0xff]
      %v1287 = vld [vmem:[%s1274 + $0x60] sm:$0xff]
      %v1288 = vld [vmem:[%s1274 + $0x68] sm:$0xff]
      %v1289 = vld [vmem:[%s1274 + $0x70] sm:$0xff]
      %v1290 = vld [vmem:[%s1274 + $0x78] sm:$0xff]
      %1291 = vmatprep.subr.mxu0 0.0
      %1292 = vmatpush1.msra.mxu0 %v1290
      %1293 = vmatprep.subr.mxu0 0.0
      %1294 = vmatpush1.msra.mxu0 %v1289
      %1295 = vmatprep.subr.mxu0 0.0
      %1296 = vmatpush1.msra.mxu0 %v1288
      %1297 = vmatprep.subr.mxu0 0.0
      %1298 = vmatpush1.msra.mxu0 %v1287
      %1299 = vmatprep.subr.mxu0 0.0
      %1300 = vmatpush1.msra.mxu0 %v1286
      %1301 = vmatprep.subr.mxu0 0.0
      %1302 = vmatpush1.msra.mxu0 %v1285
      %1303 = vmatprep.subr.mxu0 0.0
      %1304 = vmatpush1.msra.mxu0 %v1284
      %1305 = vmatprep.subr.mxu0 0.0
      %1306 = vmatpush1.msra.mxu0 %v1283
      %1307 = vmatprep.subr.mxu0 0.0
      %1308 = vmatpush1.msra.mxu0 %v1282
      %1309 = vmatprep.subr.mxu0 0.0
      %1310 = vmatpush1.msra.mxu0 %v1281
      %1311 = vmatprep.subr.mxu0 0.0
      %1312 = vmatpush1.msra.mxu0 %v1280
      %1313 = vmatprep.subr.mxu0 0.0
      %1314 = vmatpush1.msra.mxu0 %v1279
      %1315 = vmatprep.subr.mxu0 0.0
      %1316 = vmatpush1.msra.mxu0 %v1278
      %1317 = vmatprep.subr.mxu0 0.0
      %1318 = vmatpush1.msra.mxu0 %v1277
      %1319 = vmatprep.subr.mxu0 0.0
      %1320 = vmatpush1.msra.mxu0 %v1276
      %1321 = vmatprep.subr.mxu0 0.0
      %1322 = vmatpush1.msra.mxu0 %v1275
      %1323 = vmatprep.subr.mxu0 0.0
      %1324 = vmatpush2.msra.mxu0 0.0
      %1325 = vmatprep.subr.mxu0 0.0
      %1326 = vmatpush2.msra.mxu0 0.0
      %1327 = vmatprep.subr.mxu0 0.0
      %1328 = vmatpush2.msra.mxu0 0.0
      %1329 = vmatprep.subr.mxu0 0.0
      %1330 = vmatpush2.msra.mxu0 0.0
      %1331 = vmatprep.subr.mxu0 0.0
      %1332 = vmatpush2.msra.mxu0 0.0
      %1333 = vmatprep.subr.mxu0 0.0
      %1334 = vmatpush2.msra.mxu0 0.0
      %1335 = vmatprep.subr.mxu0 0.0
      %1336 = vmatpush2.msra.mxu0 0.0
      %1337 = vmatprep.subr.mxu0 0.0
      %1338 = vmatpush2.msra.mxu0 0.0
      %1339 = vmatprep.subr.mxu0 0.0
      %1340 = vmatpush2.msra.mxu0 0.0
      %1341 = vmatprep.subr.mxu0 0.0
      %1342 = vmatpush2.msra.mxu0 0.0
      %1343 = vmatprep.subr.mxu0 0.0
      %1344 = vmatpush2.msra.mxu0 0.0
      %1345 = vmatprep.subr.mxu0 0.0
      %1346 = vmatpush2.msra.mxu0 0.0
      %1347 = vmatprep.subr.mxu0 0.0
      %1348 = vmatpush2.msra.mxu0 0.0
      %1349 = vmatprep.subr.mxu0 0.0
      %1350 = vmatpush2.msra.mxu0 0.0
      %1351 = vmatprep.subr.mxu0 0.0
      %1352 = vmatpush2.msra.mxu0 0.0
      %1353 = vmatprep.subr.mxu0 0.0
      %1354 = vmatpush2.msra.mxu0 0.0
      %1355 = vmatprep.mubr.f32.mxu0 0.0
      %1356 = vmatmul.mubr.f32.gmra.mxu0 %v1266
      %v1357 = vpop.f32.mrf.mxu0
      %v1358 = vadd.f32 0.0, %v1357
      %v1359 = vpop.f32.mrf.mxu0
      %1360 = vmatprep.mubr.f32.mxu0 0.0
      %1361 = vmatmul.mubr.f32.gmra.mxu0 %v1267
      %v1362 = vpop.f32.mrf.mxu0
      %v1363 = vadd.f32 0.0, %v1362
      %v1364 = vpop.f32.mrf.mxu0
      %1365 = vmatprep.mubr.f32.mxu0 0.0
      %1366 = vmatmul.mubr.f32.gmra.mxu0 %v1268
      %v1367 = vpop.f32.mrf.mxu0
      %v1368 = vadd.f32 0.0, %v1367
      %v1369 = vpop.f32.mrf.mxu0
      %1370 = vmatprep.mubr.f32.mxu0 0.0
      %1371 = vmatmul.mubr.f32.gmra.mxu0 %v1269
      %v1372 = vpop.f32.mrf.mxu0
      %v1373 = vadd.f32 0.0, %v1372
      %v1374 = vpop.f32.mrf.mxu0
      %1375 = vmatprep.mubr.f32.mxu0 0.0
      %1376 = vmatmul.mubr.f32.gmra.mxu0 %v1270
      %v1377 = vpop.f32.mrf.mxu0
      %v1378 = vadd.f32 0.0, %v1377
      %v1379 = vpop.f32.mrf.mxu0
      %1380 = vmatprep.mubr.f32.mxu0 0.0
      %1381 = vmatmul.mubr.f32.gmra.mxu0 %v1271
      %v1382 = vpop.f32.mrf.mxu0
      %v1383 = vadd.f32 0.0, %v1382
      %v1384 = vpop.f32.mrf.mxu0
      %1385 = vmatprep.mubr.f32.mxu0 0.0
      %1386 = vmatmul.mubr.f32.gmra.mxu0 %v1272
      %v1387 = vpop.f32.mrf.mxu0
      %v1388 = vadd.f32 0.0, %v1387
      %v1389 = vpop.f32.mrf.mxu0
      %1390 = vmatprep.mubr.f32.mxu0 0.0
      %1391 = vmatmul.mubr.f32.gmra.mxu0 %v1273
      %v1392 = vpop.f32.mrf.mxu0
      %v1393 = vadd.f32 0.0, %v1392
      %v1394 = vpop.f32.mrf.mxu0
      %1395 = vdwg.mxu0
      %1396 = vmatprep.subr.mxu0 0.0
      %1397 = vmatpush1.msra.mxu0 %v1265
      %1398 = vmatprep.subr.mxu0 0.0
      %1399 = vmatpush1.msra.mxu0 %v1264
      %1400 = vmatprep.subr.mxu0 0.0
      %1401 = vmatpush1.msra.mxu0 %v1263
      %1402 = vmatprep.subr.mxu0 0.0
      %1403 = vmatpush1.msra.mxu0 %v1262
      %1404 = vmatprep.subr.mxu0 0.0
      %1405 = vmatpush1.msra.mxu0 %v1261
      %1406 = vmatprep.subr.mxu0 0.0
      %1407 = vmatpush1.msra.mxu0 %v1260
      %1408 = vmatprep.subr.mxu0 0.0
      %1409 = vmatpush1.msra.mxu0 %v1259
      %1410 = vmatprep.subr.mxu0 0.0
      %1411 = vmatpush1.msra.mxu0 %v1258
      %1412 = vmatprep.subr.mxu0 0.0
      %1413 = vmatpush1.msra.mxu0 %v1257
      %1414 = vmatprep.subr.mxu0 0.0
      %1415 = vmatpush1.msra.mxu0 %v1256
      %1416 = vmatprep.subr.mxu0 0.0
      %1417 = vmatpush1.msra.mxu0 %v1255
      %1418 = vmatprep.subr.mxu0 0.0
      %1419 = vmatpush1.msra.mxu0 %v1254
      %1420 = vmatprep.subr.mxu0 0.0
      %1421 = vmatpush1.msra.mxu0 %v1253
      %1422 = vmatprep.subr.mxu0 0.0
      %1423 = vmatpush1.msra.mxu0 %v1252
      %1424 = vmatprep.subr.mxu0 0.0
      %1425 = vmatpush1.msra.mxu0 %v1251
      %1426 = vmatprep.subr.mxu0 0.0
      %1427 = vmatpush1.msra.mxu0 %v1250
      %1428 = vmatprep.subr.mxu0 0.0
      %1429 = vmatpush2.msra.mxu0 0.0
      %1430 = vmatprep.subr.mxu0 0.0
      %1431 = vmatpush2.msra.mxu0 0.0
      %1432 = vmatprep.subr.mxu0 0.0
      %1433 = vmatpush2.msra.mxu0 0.0
      %1434 = vmatprep.subr.mxu0 0.0
      %1435 = vmatpush2.msra.mxu0 0.0
      %1436 = vmatprep.subr.mxu0 0.0
      %1437 = vmatpush2.msra.mxu0 0.0
      %1438 = vmatprep.subr.mxu0 0.0
      %1439 = vmatpush2.msra.mxu0 0.0
      %1440 = vmatprep.subr.mxu0 0.0
      %1441 = vmatpush2.msra.mxu0 0.0
      %1442 = vmatprep.subr.mxu0 0.0
      %1443 = vmatpush2.msra.mxu0 0.0
      %1444 = vmatprep.subr.mxu0 0.0
      %1445 = vmatpush2.msra.mxu0 0.0
      %1446 = vmatprep.subr.mxu0 0.0
      %1447 = vmatpush2.msra.mxu0 0.0
      %1448 = vmatprep.subr.mxu0 0.0
      %1449 = vmatpush2.msra.mxu0 0.0
      %1450 = vmatprep.subr.mxu0 0.0
      %1451 = vmatpush2.msra.mxu0 0.0
      %1452 = vmatprep.subr.mxu0 0.0
      %1453 = vmatpush2.msra.mxu0 0.0
      %1454 = vmatprep.subr.mxu0 0.0
      %1455 = vmatpush2.msra.mxu0 0.0
      %1456 = vmatprep.subr.mxu0 0.0
      %1457 = vmatpush2.msra.mxu0 0.0
      %1458 = vmatprep.subr.mxu0 0.0
      %1459 = vmatpush2.msra.mxu0 0.0
      %1460 = vmatprep.mubr.f32.mxu0 0.0
      %1461 = vmatmul.mubr.f32.gmra.mxu0 %v1242
      %v1462 = vpop.f32.mrf.mxu0
      %v1463 = vadd.f32 %v1358, %v1462
      %v1464 = vpop.f32.mrf.mxu0
      %1465 = vmatprep.mubr.f32.mxu0 0.0
      %1466 = vmatmul.mubr.f32.gmra.mxu0 %v1243
      %v1467 = vpop.f32.mrf.mxu0
      %v1468 = vadd.f32 %v1363, %v1467
      %v1469 = vpop.f32.mrf.mxu0
      %1470 = vmatprep.mubr.f32.mxu0 0.0
      %1471 = vmatmul.mubr.f32.gmra.mxu0 %v1244
      %v1472 = vpop.f32.mrf.mxu0
      %v1473 = vadd.f32 %v1368, %v1472
      %v1474 = vpop.f32.mrf.mxu0
      %1475 = vmatprep.mubr.f32.mxu0 0.0
      %1476 = vmatmul.mubr.f32.gmra.mxu0 %v1245
      %v1477 = vpop.f32.mrf.mxu0
      %v1478 = vadd.f32 %v1373, %v1477
      %v1479 = vpop.f32.mrf.mxu0
      %1480 = vmatprep.mubr.f32.mxu0 0.0
      %1481 = vmatmul.mubr.f32.gmra.mxu0 %v1246
      %v1482 = vpop.f32.mrf.mxu0
      %v1483 = vadd.f32 %v1378, %v1482
      %v1484 = vpop.f32.mrf.mxu0
      %1485 = vmatprep.mubr.f32.mxu0 0.0
      %1486 = vmatmul.mubr.f32.gmra.mxu0 %v1247
      %v1487 = vpop.f32.mrf.mxu0
      %v1488 = vadd.f32 %v1383, %v1487
      %v1489 = vpop.f32.mrf.mxu0
      %1490 = vmatprep.mubr.f32.mxu0 0.0
      %1491 = vmatmul.mubr.f32.gmra.mxu0 %v1248
      %v1492 = vpop.f32.mrf.mxu0
      %v1493 = vadd.f32 %v1388, %v1492
      %v1494 = vpop.f32.mrf.mxu0
      %1495 = vmatprep.mubr.f32.mxu0 0.0
      %1496 = vmatmul.mubr.f32.gmra.mxu0 %v1249
      %v1497 = vpop.f32.mrf.mxu0
      %v1498 = vadd.f32 %v1393, %v1497
      %v1499 = vpop.f32.mrf.mxu0
      %1500 = vdwg.mxu0
      %v1501 = vld [vmem:[#allocation2 + $0x2] sm:$0xff]
      %v1502 = vld [vmem:[#allocation2 + $0x12] sm:$0xff]
      %v1503 = vld [vmem:[#allocation2 + $0x22] sm:$0xff]
      %v1504 = vld [vmem:[#allocation2 + $0x32] sm:$0xff]
      %v1505 = vld [vmem:[#allocation2 + $0x42] sm:$0xff]
      %v1506 = vld [vmem:[#allocation2 + $0x52] sm:$0xff]
      %v1507 = vld [vmem:[#allocation2 + $0x62] sm:$0xff]
      %v1508 = vld [vmem:[#allocation2 + $0x72] sm:$0xff]
      %s1509 = scalar_lea.vmem %s3, 256
      %v1510 = vld [vmem:[%s1509] sm:$0xff]
      %v1511 = vld [vmem:[%s1509 + $0x8] sm:$0xff]
      %v1512 = vld [vmem:[%s1509 + $0x10] sm:$0xff]
      %v1513 = vld [vmem:[%s1509 + $0x18] sm:$0xff]
      %v1514 = vld [vmem:[%s1509 + $0x20] sm:$0xff]
      %v1515 = vld [vmem:[%s1509 + $0x28] sm:$0xff]
      %v1516 = vld [vmem:[%s1509 + $0x30] sm:$0xff]
      %v1517 = vld [vmem:[%s1509 + $0x38] sm:$0xff]
      %v1518 = vld [vmem:[%s1509 + $0x40] sm:$0xff]
      %v1519 = vld [vmem:[%s1509 + $0x48] sm:$0xff]
      %v1520 = vld [vmem:[%s1509 + $0x50] sm:$0xff]
      %v1521 = vld [vmem:[%s1509 + $0x58] sm:$0xff]
      %v1522 = vld [vmem:[%s1509 + $0x60] sm:$0xff]
      %v1523 = vld [vmem:[%s1509 + $0x68] sm:$0xff]
      %v1524 = vld [vmem:[%s1509 + $0x70] sm:$0xff]
      %v1525 = vld [vmem:[%s1509 + $0x78] sm:$0xff]
      %1526 = vmatprep.subr.mxu0 0.0
      %1527 = vmatpush1.msra.mxu0 %v1525
      %1528 = vmatprep.subr.mxu0 0.0
      %1529 = vmatpush1.msra.mxu0 %v1524
      %1530 = vmatprep.subr.mxu0 0.0
      %1531 = vmatpush1.msra.mxu0 %v1523
      %1532 = vmatprep.subr.mxu0 0.0
      %1533 = vmatpush1.msra.mxu0 %v1522
      %1534 = vmatprep.subr.mxu0 0.0
      %1535 = vmatpush1.msra.mxu0 %v1521
      %1536 = vmatprep.subr.mxu0 0.0
      %1537 = vmatpush1.msra.mxu0 %v1520
      %1538 = vmatprep.subr.mxu0 0.0
      %1539 = vmatpush1.msra.mxu0 %v1519
      %1540 = vmatprep.subr.mxu0 0.0
      %1541 = vmatpush1.msra.mxu0 %v1518
      %1542 = vmatprep.subr.mxu0 0.0
      %1543 = vmatpush1.msra.mxu0 %v1517
      %1544 = vmatprep.subr.mxu0 0.0
      %1545 = vmatpush1.msra.mxu0 %v1516
      %1546 = vmatprep.subr.mxu0 0.0
      %1547 = vmatpush1.msra.mxu0 %v1515
      %1548 = vmatprep.subr.mxu0 0.0
      %1549 = vmatpush1.msra.mxu0 %v1514
      %1550 = vmatprep.subr.mxu0 0.0
      %1551 = vmatpush1.msra.mxu0 %v1513
      %1552 = vmatprep.subr.mxu0 0.0
      %1553 = vmatpush1.msra.mxu0 %v1512
      %1554 = vmatprep.subr.mxu0 0.0
      %1555 = vmatpush1.msra.mxu0 %v1511
      %1556 = vmatprep.subr.mxu0 0.0
      %1557 = vmatpush1.msra.mxu0 %v1510
      %1558 = vmatprep.subr.mxu0 0.0
      %1559 = vmatpush2.msra.mxu0 0.0
      %1560 = vmatprep.subr.mxu0 0.0
      %1561 = vmatpush2.msra.mxu0 0.0
      %1562 = vmatprep.subr.mxu0 0.0
      %1563 = vmatpush2.msra.mxu0 0.0
      %1564 = vmatprep.subr.mxu0 0.0
      %1565 = vmatpush2.msra.mxu0 0.0
      %1566 = vmatprep.subr.mxu0 0.0
      %1567 = vmatpush2.msra.mxu0 0.0
      %1568 = vmatprep.subr.mxu0 0.0
      %1569 = vmatpush2.msra.mxu0 0.0
      %1570 = vmatprep.subr.mxu0 0.0
      %1571 = vmatpush2.msra.mxu0 0.0
      %1572 = vmatprep.subr.mxu0 0.0
      %1573 = vmatpush2.msra.mxu0 0.0
      %1574 = vmatprep.subr.mxu0 0.0
      %1575 = vmatpush2.msra.mxu0 0.0
      %1576 = vmatprep.subr.mxu0 0.0
      %1577 = vmatpush2.msra.mxu0 0.0
      %1578 = vmatprep.subr.mxu0 0.0
      %1579 = vmatpush2.msra.mxu0 0.0
      %1580 = vmatprep.subr.mxu0 0.0
      %1581 = vmatpush2.msra.mxu0 0.0
      %1582 = vmatprep.subr.mxu0 0.0
      %1583 = vmatpush2.msra.mxu0 0.0
      %1584 = vmatprep.subr.mxu0 0.0
      %1585 = vmatpush2.msra.mxu0 0.0
      %1586 = vmatprep.subr.mxu0 0.0
      %1587 = vmatpush2.msra.mxu0 0.0
      %1588 = vmatprep.subr.mxu0 0.0
      %1589 = vmatpush2.msra.mxu0 0.0
      %1590 = vmatprep.mubr.f32.mxu0 0.0
      %1591 = vmatmul.mubr.f32.gmra.mxu0 %v1501
      %v1592 = vpop.f32.mrf.mxu0
      %v1593 = vadd.f32 0.0, %v1592
      %v1594 = vpop.f32.mrf.mxu0
      %1595 = vmatprep.mubr.f32.mxu0 0.0
      %1596 = vmatmul.mubr.f32.gmra.mxu0 %v1502
      %v1597 = vpop.f32.mrf.mxu0
      %v1598 = vadd.f32 0.0, %v1597
      %v1599 = vpop.f32.mrf.mxu0
      %1600 = vmatprep.mubr.f32.mxu0 0.0
      %1601 = vmatmul.mubr.f32.gmra.mxu0 %v1503
      %v1602 = vpop.f32.mrf.mxu0
      %v1603 = vadd.f32 0.0, %v1602
      %v1604 = vpop.f32.mrf.mxu0
      %1605 = vmatprep.mubr.f32.mxu0 0.0
      %1606 = vmatmul.mubr.f32.gmra.mxu0 %v1504
      %v1607 = vpop.f32.mrf.mxu0
      %v1608 = vadd.f32 0.0, %v1607
      %v1609 = vpop.f32.mrf.mxu0
      %1610 = vmatprep.mubr.f32.mxu0 0.0
      %1611 = vmatmul.mubr.f32.gmra.mxu0 %v1505
      %v1612 = vpop.f32.mrf.mxu0
      %v1613 = vadd.f32 0.0, %v1612
      %v1614 = vpop.f32.mrf.mxu0
      %1615 = vmatprep.mubr.f32.mxu0 0.0
      %1616 = vmatmul.mubr.f32.gmra.mxu0 %v1506
      %v1617 = vpop.f32.mrf.mxu0
      %v1618 = vadd.f32 0.0, %v1617
      %v1619 = vpop.f32.mrf.mxu0
      %1620 = vmatprep.mubr.f32.mxu0 0.0
      %1621 = vmatmul.mubr.f32.gmra.mxu0 %v1507
      %v1622 = vpop.f32.mrf.mxu0
      %v1623 = vadd.f32 0.0, %v1622
      %v1624 = vpop.f32.mrf.mxu0
      %1625 = vmatprep.mubr.f32.mxu0 0.0
      %1626 = vmatmul.mubr.f32.gmra.mxu0 %v1508
      %v1627 = vpop.f32.mrf.mxu0
      %v1628 = vadd.f32 0.0, %v1627
      %v1629 = vpop.f32.mrf.mxu0
      %1630 = vdwg.mxu0
      %v1631 = vadd.f32 %v1463, %v1593
      %v1632 = vadd.f32 %v1468, %v1598
      %v1633 = vadd.f32 %v1473, %v1603
      %v1634 = vadd.f32 %v1478, %v1608
      %v1635 = vadd.f32 %v1483, %v1613
      %v1636 = vadd.f32 %v1488, %v1618
      %v1637 = vadd.f32 %v1493, %v1623
      %v1638 = vadd.f32 %v1498, %v1628
      %v1639 = vld [vmem:[#allocation2 + $0x3] sm:$0xff]
      %v1640 = vld [vmem:[#allocation2 + $0x13] sm:$0xff]
      %v1641 = vld [vmem:[#allocation2 + $0x23] sm:$0xff]
      %v1642 = vld [vmem:[#allocation2 + $0x33] sm:$0xff]
      %v1643 = vld [vmem:[#allocation2 + $0x43] sm:$0xff]
      %v1644 = vld [vmem:[#allocation2 + $0x53] sm:$0xff]
      %v1645 = vld [vmem:[#allocation2 + $0x63] sm:$0xff]
      %v1646 = vld [vmem:[#allocation2 + $0x73] sm:$0xff]
      %s1647 = scalar_lea.vmem %s3, 384
      %v1648 = vld [vmem:[%s1647] sm:$0xff]
      %v1649 = vld [vmem:[%s1647 + $0x8] sm:$0xff]
      %v1650 = vld [vmem:[%s1647 + $0x10] sm:$0xff]
      %v1651 = vld [vmem:[%s1647 + $0x18] sm:$0xff]
      %v1652 = vld [vmem:[%s1647 + $0x20] sm:$0xff]
      %v1653 = vld [vmem:[%s1647 + $0x28] sm:$0xff]
      %v1654 = vld [vmem:[%s1647 + $0x30] sm:$0xff]
      %v1655 = vld [vmem:[%s1647 + $0x38] sm:$0xff]
      %v1656 = vld [vmem:[%s1647 + $0x40] sm:$0xff]
      %v1657 = vld [vmem:[%s1647 + $0x48] sm:$0xff]
      %v1658 = vld [vmem:[%s1647 + $0x50] sm:$0xff]
      %v1659 = vld [vmem:[%s1647 + $0x58] sm:$0xff]
      %v1660 = vld [vmem:[%s1647 + $0x60] sm:$0xff]
      %v1661 = vld [vmem:[%s1647 + $0x68] sm:$0xff]
      %v1662 = vld [vmem:[%s1647 + $0x70] sm:$0xff]
      %v1663 = vld [vmem:[%s1647 + $0x78] sm:$0xff]
      %1664 = vmatprep.subr.mxu0 0.0
      %1665 = vmatpush1.msra.mxu0 %v1663
      %1666 = vmatprep.subr.mxu0 0.0
      %1667 = vmatpush1.msra.mxu0 %v1662
      %1668 = vmatprep.subr.mxu0 0.0
      %1669 = vmatpush1.msra.mxu0 %v1661
      %1670 = vmatprep.subr.mxu0 0.0
      %1671 = vmatpush1.msra.mxu0 %v1660
      %1672 = vmatprep.subr.mxu0 0.0
      %1673 = vmatpush1.msra.mxu0 %v1659
      %1674 = vmatprep.subr.mxu0 0.0
      %1675 = vmatpush1.msra.mxu0 %v1658
      %1676 = vmatprep.subr.mxu0 0.0
      %1677 = vmatpush1.msra.mxu0 %v1657
      %1678 = vmatprep.subr.mxu0 0.0
      %1679 = vmatpush1.msra.mxu0 %v1656
      %1680 = vmatprep.subr.mxu0 0.0
      %1681 = vmatpush1.msra.mxu0 %v1655
      %1682 = vmatprep.subr.mxu0 0.0
      %1683 = vmatpush1.msra.mxu0 %v1654
      %1684 = vmatprep.subr.mxu0 0.0
      %1685 = vmatpush1.msra.mxu0 %v1653
      %1686 = vmatprep.subr.mxu0 0.0
      %1687 = vmatpush1.msra.mxu0 %v1652
      %1688 = vmatprep.subr.mxu0 0.0
      %1689 = vmatpush1.msra.mxu0 %v1651
      %1690 = vmatprep.subr.mxu0 0.0
      %1691 = vmatpush1.msra.mxu0 %v1650
      %1692 = vmatprep.subr.mxu0 0.0
      %1693 = vmatpush1.msra.mxu0 %v1649
      %1694 = vmatprep.subr.mxu0 0.0
      %1695 = vmatpush1.msra.mxu0 %v1648
      %1696 = vmatprep.subr.mxu0 0.0
      %1697 = vmatpush2.msra.mxu0 0.0
      %1698 = vmatprep.subr.mxu0 0.0
      %1699 = vmatpush2.msra.mxu0 0.0
      %1700 = vmatprep.subr.mxu0 0.0
      %1701 = vmatpush2.msra.mxu0 0.0
      %1702 = vmatprep.subr.mxu0 0.0
      %1703 = vmatpush2.msra.mxu0 0.0
      %1704 = vmatprep.subr.mxu0 0.0
      %1705 = vmatpush2.msra.mxu0 0.0
      %1706 = vmatprep.subr.mxu0 0.0
      %1707 = vmatpush2.msra.mxu0 0.0
      %1708 = vmatprep.subr.mxu0 0.0
      %1709 = vmatpush2.msra.mxu0 0.0
      %1710 = vmatprep.subr.mxu0 0.0
      %1711 = vmatpush2.msra.mxu0 0.0
      %1712 = vmatprep.subr.mxu0 0.0
      %1713 = vmatpush2.msra.mxu0 0.0
      %1714 = vmatprep.subr.mxu0 0.0
      %1715 = vmatpush2.msra.mxu0 0.0
      %1716 = vmatprep.subr.mxu0 0.0
      %1717 = vmatpush2.msra.mxu0 0.0
      %1718 = vmatprep.subr.mxu0 0.0
      %1719 = vmatpush2.msra.mxu0 0.0
      %1720 = vmatprep.subr.mxu0 0.0
      %1721 = vmatpush2.msra.mxu0 0.0
      %1722 = vmatprep.subr.mxu0 0.0
      %1723 = vmatpush2.msra.mxu0 0.0
      %1724 = vmatprep.subr.mxu0 0.0
      %1725 = vmatpush2.msra.mxu0 0.0
      %1726 = vmatprep.subr.mxu0 0.0
      %1727 = vmatpush2.msra.mxu0 0.0
      %1728 = vmatprep.mubr.f32.mxu0 0.0
      %1729 = vmatmul.mubr.f32.gmra.mxu0 %v1639
      %v1730 = vpop.f32.mrf.mxu0
      %v1731 = vadd.f32 0.0, %v1730
      %v1732 = vpop.f32.mrf.mxu0
      %1733 = vmatprep.mubr.f32.mxu0 0.0
      %1734 = vmatmul.mubr.f32.gmra.mxu0 %v1640
      %v1735 = vpop.f32.mrf.mxu0
      %v1736 = vadd.f32 0.0, %v1735
      %v1737 = vpop.f32.mrf.mxu0
      %1738 = vmatprep.mubr.f32.mxu0 0.0
      %1739 = vmatmul.mubr.f32.gmra.mxu0 %v1641
      %v1740 = vpop.f32.mrf.mxu0
      %v1741 = vadd.f32 0.0, %v1740
      %v1742 = vpop.f32.mrf.mxu0
      %1743 = vmatprep.mubr.f32.mxu0 0.0
      %1744 = vmatmul.mubr.f32.gmra.mxu0 %v1642
      %v1745 = vpop.f32.mrf.mxu0
      %v1746 = vadd.f32 0.0, %v1745
      %v1747 = vpop.f32.mrf.mxu0
      %1748 = vmatprep.mubr.f32.mxu0 0.0
      %1749 = vmatmul.mubr.f32.gmra.mxu0 %v1643
      %v1750 = vpop.f32.mrf.mxu0
      %v1751 = vadd.f32 0.0, %v1750
      %v1752 = vpop.f32.mrf.mxu0
      %1753 = vmatprep.mubr.f32.mxu0 0.0
      %1754 = vmatmul.mubr.f32.gmra.mxu0 %v1644
      %v1755 = vpop.f32.mrf.mxu0
      %v1756 = vadd.f32 0.0, %v1755
      %v1757 = vpop.f32.mrf.mxu0
      %1758 = vmatprep.mubr.f32.mxu0 0.0
      %1759 = vmatmul.mubr.f32.gmra.mxu0 %v1645
      %v1760 = vpop.f32.mrf.mxu0
      %v1761 = vadd.f32 0.0, %v1760
      %v1762 = vpop.f32.mrf.mxu0
      %1763 = vmatprep.mubr.f32.mxu0 0.0
      %1764 = vmatmul.mubr.f32.gmra.mxu0 %v1646
      %v1765 = vpop.f32.mrf.mxu0
      %v1766 = vadd.f32 0.0, %v1765
      %v1767 = vpop.f32.mrf.mxu0
      %1768 = vdwg.mxu0
      %v1769 = vadd.f32 %v1631, %v1731
      %v1770 = vadd.f32 %v1632, %v1736
      %v1771 = vadd.f32 %v1633, %v1741
      %v1772 = vadd.f32 %v1634, %v1746
      %v1773 = vadd.f32 %v1635, %v1751
      %v1774 = vadd.f32 %v1636, %v1756
      %v1775 = vadd.f32 %v1637, %v1761
      %v1776 = vadd.f32 %v1638, %v1766
      %v1777 = vld [vmem:[#allocation2 + $0x4] sm:$0xff]
      %v1778 = vld [vmem:[#allocation2 + $0x14] sm:$0xff]
      %v1779 = vld [vmem:[#allocation2 + $0x24] sm:$0xff]
      %v1780 = vld [vmem:[#allocation2 + $0x34] sm:$0xff]
      %v1781 = vld [vmem:[#allocation2 + $0x44] sm:$0xff]
      %v1782 = vld [vmem:[#allocation2 + $0x54] sm:$0xff]
      %v1783 = vld [vmem:[#allocation2 + $0x64] sm:$0xff]
      %v1784 = vld [vmem:[#allocation2 + $0x74] sm:$0xff]
      %s1785 = scalar_lea.vmem %s3, 512
      %v1786 = vld [vmem:[%s1785] sm:$0xff]
      %v1787 = vld [vmem:[%s1785 + $0x8] sm:$0xff]
      %v1788 = vld [vmem:[%s1785 + $0x10] sm:$0xff]
      %v1789 = vld [vmem:[%s1785 + $0x18] sm:$0xff]
      %v1790 = vld [vmem:[%s1785 + $0x20] sm:$0xff]
      %v1791 = vld [vmem:[%s1785 + $0x28] sm:$0xff]
      %v1792 = vld [vmem:[%s1785 + $0x30] sm:$0xff]
      %v1793 = vld [vmem:[%s1785 + $0x38] sm:$0xff]
      %v1794 = vld [vmem:[%s1785 + $0x40] sm:$0xff]
      %v1795 = vld [vmem:[%s1785 + $0x48] sm:$0xff]
      %v1796 = vld [vmem:[%s1785 + $0x50] sm:$0xff]
      %v1797 = vld [vmem:[%s1785 + $0x58] sm:$0xff]
      %v1798 = vld [vmem:[%s1785 + $0x60] sm:$0xff]
      %v1799 = vld [vmem:[%s1785 + $0x68] sm:$0xff]
      %v1800 = vld [vmem:[%s1785 + $0x70] sm:$0xff]
      %v1801 = vld [vmem:[%s1785 + $0x78] sm:$0xff]
      %1802 = vmatprep.subr.mxu0 0.0
      %1803 = vmatpush1.msra.mxu0 %v1801
      %1804 = vmatprep.subr.mxu0 0.0
      %1805 = vmatpush1.msra.mxu0 %v1800
      %1806 = vmatprep.subr.mxu0 0.0
      %1807 = vmatpush1.msra.mxu0 %v1799
      %1808 = vmatprep.subr.mxu0 0.0
      %1809 = vmatpush1.msra.mxu0 %v1798
      %1810 = vmatprep.subr.mxu0 0.0
      %1811 = vmatpush1.msra.mxu0 %v1797
      %1812 = vmatprep.subr.mxu0 0.0
      %1813 = vmatpush1.msra.mxu0 %v1796
      %1814 = vmatprep.subr.mxu0 0.0
      %1815 = vmatpush1.msra.mxu0 %v1795
      %1816 = vmatprep.subr.mxu0 0.0
      %1817 = vmatpush1.msra.mxu0 %v1794
      %1818 = vmatprep.subr.mxu0 0.0
      %1819 = vmatpush1.msra.mxu0 %v1793
      %1820 = vmatprep.subr.mxu0 0.0
      %1821 = vmatpush1.msra.mxu0 %v1792
      %1822 = vmatprep.subr.mxu0 0.0
      %1823 = vmatpush1.msra.mxu0 %v1791
      %1824 = vmatprep.subr.mxu0 0.0
      %1825 = vmatpush1.msra.mxu0 %v1790
      %1826 = vmatprep.subr.mxu0 0.0
      %1827 = vmatpush1.msra.mxu0 %v1789
      %1828 = vmatprep.subr.mxu0 0.0
      %1829 = vmatpush1.msra.mxu0 %v1788
      %1830 = vmatprep.subr.mxu0 0.0
      %1831 = vmatpush1.msra.mxu0 %v1787
      %1832 = vmatprep.subr.mxu0 0.0
      %1833 = vmatpush1.msra.mxu0 %v1786
      %1834 = vmatprep.subr.mxu0 0.0
      %1835 = vmatpush2.msra.mxu0 0.0
      %1836 = vmatprep.subr.mxu0 0.0
      %1837 = vmatpush2.msra.mxu0 0.0
      %1838 = vmatprep.subr.mxu0 0.0
      %1839 = vmatpush2.msra.mxu0 0.0
      %1840 = vmatprep.subr.mxu0 0.0
      %1841 = vmatpush2.msra.mxu0 0.0
      %1842 = vmatprep.subr.mxu0 0.0
      %1843 = vmatpush2.msra.mxu0 0.0
      %1844 = vmatprep.subr.mxu0 0.0
      %1845 = vmatpush2.msra.mxu0 0.0
      %1846 = vmatprep.subr.mxu0 0.0
      %1847 = vmatpush2.msra.mxu0 0.0
      %1848 = vmatprep.subr.mxu0 0.0
      %1849 = vmatpush2.msra.mxu0 0.0
      %1850 = vmatprep.subr.mxu0 0.0
      %1851 = vmatpush2.msra.mxu0 0.0
      %1852 = vmatprep.subr.mxu0 0.0
      %1853 = vmatpush2.msra.mxu0 0.0
      %1854 = vmatprep.subr.mxu0 0.0
      %1855 = vmatpush2.msra.mxu0 0.0
      %1856 = vmatprep.subr.mxu0 0.0
      %1857 = vmatpush2.msra.mxu0 0.0
      %1858 = vmatprep.subr.mxu0 0.0
      %1859 = vmatpush2.msra.mxu0 0.0
      %1860 = vmatprep.subr.mxu0 0.0
      %1861 = vmatpush2.msra.mxu0 0.0
      %1862 = vmatprep.subr.mxu0 0.0
      %1863 = vmatpush2.msra.mxu0 0.0
      %1864 = vmatprep.subr.mxu0 0.0
      %1865 = vmatpush2.msra.mxu0 0.0
      %1866 = vmatprep.mubr.f32.mxu0 0.0
      %1867 = vmatmul.mubr.f32.gmra.mxu0 %v1777
      %v1868 = vpop.f32.mrf.mxu0
      %v1869 = vadd.f32 0.0, %v1868
      %v1870 = vpop.f32.mrf.mxu0
      %1871 = vmatprep.mubr.f32.mxu0 0.0
      %1872 = vmatmul.mubr.f32.gmra.mxu0 %v1778
      %v1873 = vpop.f32.mrf.mxu0
      %v1874 = vadd.f32 0.0, %v1873
      %v1875 = vpop.f32.mrf.mxu0
      %1876 = vmatprep.mubr.f32.mxu0 0.0
      %1877 = vmatmul.mubr.f32.gmra.mxu0 %v1779
      %v1878 = vpop.f32.mrf.mxu0
      %v1879 = vadd.f32 0.0, %v1878
      %v1880 = vpop.f32.mrf.mxu0
      %1881 = vmatprep.mubr.f32.mxu0 0.0
      %1882 = vmatmul.mubr.f32.gmra.mxu0 %v1780
      %v1883 = vpop.f32.mrf.mxu0
      %v1884 = vadd.f32 0.0, %v1883
      %v1885 = vpop.f32.mrf.mxu0
      %1886 = vmatprep.mubr.f32.mxu0 0.0
      %1887 = vmatmul.mubr.f32.gmra.mxu0 %v1781
      %v1888 = vpop.f32.mrf.mxu0
      %v1889 = vadd.f32 0.0, %v1888
      %v1890 = vpop.f32.mrf.mxu0
      %1891 = vmatprep.mubr.f32.mxu0 0.0
      %1892 = vmatmul.mubr.f32.gmra.mxu0 %v1782
      %v1893 = vpop.f32.mrf.mxu0
      %v1894 = vadd.f32 0.0, %v1893
      %v1895 = vpop.f32.mrf.mxu0
      %1896 = vmatprep.mubr.f32.mxu0 0.0
      %1897 = vmatmul.mubr.f32.gmra.mxu0 %v1783
      %v1898 = vpop.f32.mrf.mxu0
      %v1899 = vadd.f32 0.0, %v1898
      %v1900 = vpop.f32.mrf.mxu0
      %1901 = vmatprep.mubr.f32.mxu0 0.0
      %1902 = vmatmul.mubr.f32.gmra.mxu0 %v1784
      %v1903 = vpop.f32.mrf.mxu0
      %v1904 = vadd.f32 0.0, %v1903
      %v1905 = vpop.f32.mrf.mxu0
      %1906 = vdwg.mxu0
      %v1907 = vadd.f32 %v1769, %v1869
      %v1908 = vadd.f32 %v1770, %v1874
      %v1909 = vadd.f32 %v1771, %v1879
      %v1910 = vadd.f32 %v1772, %v1884
      %v1911 = vadd.f32 %v1773, %v1889
      %v1912 = vadd.f32 %v1774, %v1894
      %v1913 = vadd.f32 %v1775, %v1899
      %v1914 = vadd.f32 %v1776, %v1904
      %v1915 = vld [vmem:[%s409] sm:$0xff]
      %v1916 = vld [vmem:[%s409 + $0x10] sm:$0xff]
      %v1917 = vld [vmem:[%s409 + $0x20] sm:$0xff]
      %v1918 = vld [vmem:[%s409 + $0x30] sm:$0xff]
      %v1919 = vld [vmem:[%s409 + $0x40] sm:$0xff]
      %v1920 = vld [vmem:[%s409 + $0x50] sm:$0xff]
      %v1921 = vld [vmem:[%s409 + $0x60] sm:$0xff]
      %v1922 = vld [vmem:[%s409 + $0x70] sm:$0xff]
      %s1923 = scalar_lea.vmem %s3, 640
      %v1924 = vld [vmem:[%s1923] sm:$0xff]
      %v1925 = vld [vmem:[%s1923 + $0x8] sm:$0xff]
      %v1926 = vld [vmem:[%s1923 + $0x10] sm:$0xff]
      %v1927 = vld [vmem:[%s1923 + $0x18] sm:$0xff]
      %v1928 = vld [vmem:[%s1923 + $0x20] sm:$0xff]
      %v1929 = vld [vmem:[%s1923 + $0x28] sm:$0xff]
      %v1930 = vld [vmem:[%s1923 + $0x30] sm:$0xff]
      %v1931 = vld [vmem:[%s1923 + $0x38] sm:$0xff]
      %v1932 = vld [vmem:[%s1923 + $0x40] sm:$0xff]
      %v1933 = vld [vmem:[%s1923 + $0x48] sm:$0xff]
      %v1934 = vld [vmem:[%s1923 + $0x50] sm:$0xff]
      %v1935 = vld [vmem:[%s1923 + $0x58] sm:$0xff]
      %v1936 = vld [vmem:[%s1923 + $0x60] sm:$0xff]
      %v1937 = vld [vmem:[%s1923 + $0x68] sm:$0xff]
      %v1938 = vld [vmem:[%s1923 + $0x70] sm:$0xff]
      %v1939 = vld [vmem:[%s1923 + $0x78] sm:$0xff]
      %1940 = vmatprep.subr.mxu0 0.0
      %1941 = vmatpush1.msra.mxu0 %v1939
      %1942 = vmatprep.subr.mxu0 0.0
      %1943 = vmatpush1.msra.mxu0 %v1938
      %1944 = vmatprep.subr.mxu0 0.0
      %1945 = vmatpush1.msra.mxu0 %v1937
      %1946 = vmatprep.subr.mxu0 0.0
      %1947 = vmatpush1.msra.mxu0 %v1936
      %1948 = vmatprep.subr.mxu0 0.0
      %1949 = vmatpush1.msra.mxu0 %v1935
      %1950 = vmatprep.subr.mxu0 0.0
      %1951 = vmatpush1.msra.mxu0 %v1934
      %1952 = vmatprep.subr.mxu0 0.0
      %1953 = vmatpush1.msra.mxu0 %v1933
      %1954 = vmatprep.subr.mxu0 0.0
      %1955 = vmatpush1.msra.mxu0 %v1932
      %1956 = vmatprep.subr.mxu0 0.0
      %1957 = vmatpush1.msra.mxu0 %v1931
      %1958 = vmatprep.subr.mxu0 0.0
      %1959 = vmatpush1.msra.mxu0 %v1930
      %1960 = vmatprep.subr.mxu0 0.0
      %1961 = vmatpush1.msra.mxu0 %v1929
      %1962 = vmatprep.subr.mxu0 0.0
      %1963 = vmatpush1.msra.mxu0 %v1928
      %1964 = vmatprep.subr.mxu0 0.0
      %1965 = vmatpush1.msra.mxu0 %v1927
      %1966 = vmatprep.subr.mxu0 0.0
      %1967 = vmatpush1.msra.mxu0 %v1926
      %1968 = vmatprep.subr.mxu0 0.0
      %1969 = vmatpush1.msra.mxu0 %v1925
      %1970 = vmatprep.subr.mxu0 0.0
      %1971 = vmatpush1.msra.mxu0 %v1924
      %1972 = vmatprep.subr.mxu0 0.0
      %1973 = vmatpush2.msra.mxu0 0.0
      %1974 = vmatprep.subr.mxu0 0.0
      %1975 = vmatpush2.msra.mxu0 0.0
      %1976 = vmatprep.subr.mxu0 0.0
      %1977 = vmatpush2.msra.mxu0 0.0
      %1978 = vmatprep.subr.mxu0 0.0
      %1979 = vmatpush2.msra.mxu0 0.0
      %1980 = vmatprep.subr.mxu0 0.0
      %1981 = vmatpush2.msra.mxu0 0.0
      %1982 = vmatprep.subr.mxu0 0.0
      %1983 = vmatpush2.msra.mxu0 0.0
      %1984 = vmatprep.subr.mxu0 0.0
      %1985 = vmatpush2.msra.mxu0 0.0
      %1986 = vmatprep.subr.mxu0 0.0
      %1987 = vmatpush2.msra.mxu0 0.0
      %1988 = vmatprep.subr.mxu0 0.0
      %1989 = vmatpush2.msra.mxu0 0.0
      %1990 = vmatprep.subr.mxu0 0.0
      %1991 = vmatpush2.msra.mxu0 0.0
      %1992 = vmatprep.subr.mxu0 0.0
      %1993 = vmatpush2.msra.mxu0 0.0
      %1994 = vmatprep.subr.mxu0 0.0
      %1995 = vmatpush2.msra.mxu0 0.0
      %1996 = vmatprep.subr.mxu0 0.0
      %1997 = vmatpush2.msra.mxu0 0.0
      %1998 = vmatprep.subr.mxu0 0.0
      %1999 = vmatpush2.msra.mxu0 0.0
      %2000 = vmatprep.subr.mxu0 0.0
      %2001 = vmatpush2.msra.mxu0 0.0
      %2002 = vmatprep.subr.mxu0 0.0
      %2003 = vmatpush2.msra.mxu0 0.0
      %2004 = vmatprep.mubr.f32.mxu0 0.0
      %2005 = vmatmul.mubr.f32.gmra.mxu0 %v1915
      %v2006 = vpop.f32.mrf.mxu0
      %v2007 = vadd.f32 0.0, %v2006
      %v2008 = vpop.f32.mrf.mxu0
      %2009 = vmatprep.mubr.f32.mxu0 0.0
      %2010 = vmatmul.mubr.f32.gmra.mxu0 %v1916
      %v2011 = vpop.f32.mrf.mxu0
      %v2012 = vadd.f32 0.0, %v2011
      %v2013 = vpop.f32.mrf.mxu0
      %2014 = vmatprep.mubr.f32.mxu0 0.0
      %2015 = vmatmul.mubr.f32.gmra.mxu0 %v1917
      %v2016 = vpop.f32.mrf.mxu0
      %v2017 = vadd.f32 0.0, %v2016
      %v2018 = vpop.f32.mrf.mxu0
      %2019 = vmatprep.mubr.f32.mxu0 0.0
      %2020 = vmatmul.mubr.f32.gmra.mxu0 %v1918
      %v2021 = vpop.f32.mrf.mxu0
      %v2022 = vadd.f32 0.0, %v2021
      %v2023 = vpop.f32.mrf.mxu0
      %2024 = vmatprep.mubr.f32.mxu0 0.0
      %2025 = vmatmul.mubr.f32.gmra.mxu0 %v1919
      %v2026 = vpop.f32.mrf.mxu0
      %v2027 = vadd.f32 0.0, %v2026
      %v2028 = vpop.f32.mrf.mxu0
      %2029 = vmatprep.mubr.f32.mxu0 0.0
      %2030 = vmatmul.mubr.f32.gmra.mxu0 %v1920
      %v2031 = vpop.f32.mrf.mxu0
      %v2032 = vadd.f32 0.0, %v2031
      %v2033 = vpop.f32.mrf.mxu0
      %2034 = vmatprep.mubr.f32.mxu0 0.0
      %2035 = vmatmul.mubr.f32.gmra.mxu0 %v1921
      %v2036 = vpop.f32.mrf.mxu0
      %v2037 = vadd.f32 0.0, %v2036
      %v2038 = vpop.f32.mrf.mxu0
      %2039 = vmatprep.mubr.f32.mxu0 0.0
      %2040 = vmatmul.mubr.f32.gmra.mxu0 %v1922
      %v2041 = vpop.f32.mrf.mxu0
      %v2042 = vadd.f32 0.0, %v2041
      %v2043 = vpop.f32.mrf.mxu0
      %2044 = vdwg.mxu0
      %v2045 = vadd.f32 %v1907, %v2007
      %v2046 = vadd.f32 %v1908, %v2012
      %v2047 = vadd.f32 %v1909, %v2017
      %v2048 = vadd.f32 %v1910, %v2022
      %v2049 = vadd.f32 %v1911, %v2027
      %v2050 = vadd.f32 %v1912, %v2032
      %v2051 = vadd.f32 %v1913, %v2037
      %v2052 = vadd.f32 %v1914, %v2042
      %v2053 = vld [vmem:[%s409 + $0x1] sm:$0xff]
      %v2054 = vld [vmem:[%s409 + $0x11] sm:$0xff]
      %v2055 = vld [vmem:[%s409 + $0x21] sm:$0xff]
      %v2056 = vld [vmem:[%s409 + $0x31] sm:$0xff]
      %v2057 = vld [vmem:[%s409 + $0x41] sm:$0xff]
      %v2058 = vld [vmem:[%s409 + $0x51] sm:$0xff]
      %v2059 = vld [vmem:[%s409 + $0x61] sm:$0xff]
      %v2060 = vld [vmem:[%s409 + $0x71] sm:$0xff]
      %s2061 = scalar_lea.vmem %s3, 768
      %v2062 = vld [vmem:[%s2061] sm:$0xff]
      %v2063 = vld [vmem:[%s2061 + $0x8] sm:$0xff]
      %v2064 = vld [vmem:[%s2061 + $0x10] sm:$0xff]
      %v2065 = vld [vmem:[%s2061 + $0x18] sm:$0xff]
      %v2066 = vld [vmem:[%s2061 + $0x20] sm:$0xff]
      %v2067 = vld [vmem:[%s2061 + $0x28] sm:$0xff]
      %v2068 = vld [vmem:[%s2061 + $0x30] sm:$0xff]
      %v2069 = vld [vmem:[%s2061 + $0x38] sm:$0xff]
      %v2070 = vld [vmem:[%s2061 + $0x40] sm:$0xff]
      %v2071 = vld [vmem:[%s2061 + $0x48] sm:$0xff]
      %v2072 = vld [vmem:[%s2061 + $0x50] sm:$0xff]
      %v2073 = vld [vmem:[%s2061 + $0x58] sm:$0xff]
      %v2074 = vld [vmem:[%s2061 + $0x60] sm:$0xff]
      %v2075 = vld [vmem:[%s2061 + $0x68] sm:$0xff]
      %v2076 = vld [vmem:[%s2061 + $0x70] sm:$0xff]
      %v2077 = vld [vmem:[%s2061 + $0x78] sm:$0xff]
      %2078 = vmatprep.subr.mxu0 0.0
      %2079 = vmatpush1.msra.mxu0 %v2077
      %2080 = vmatprep.subr.mxu0 0.0
      %2081 = vmatpush1.msra.mxu0 %v2076
      %2082 = vmatprep.subr.mxu0 0.0
      %2083 = vmatpush1.msra.mxu0 %v2075
      %2084 = vmatprep.subr.mxu0 0.0
      %2085 = vmatpush1.msra.mxu0 %v2074
      %2086 = vmatprep.subr.mxu0 0.0
      %2087 = vmatpush1.msra.mxu0 %v2073
      %2088 = vmatprep.subr.mxu0 0.0
      %2089 = vmatpush1.msra.mxu0 %v2072
      %2090 = vmatprep.subr.mxu0 0.0
      %2091 = vmatpush1.msra.mxu0 %v2071
      %2092 = vmatprep.subr.mxu0 0.0
      %2093 = vmatpush1.msra.mxu0 %v2070
      %2094 = vmatprep.subr.mxu0 0.0
      %2095 = vmatpush1.msra.mxu0 %v2069
      %2096 = vmatprep.subr.mxu0 0.0
      %2097 = vmatpush1.msra.mxu0 %v2068
      %2098 = vmatprep.subr.mxu0 0.0
      %2099 = vmatpush1.msra.mxu0 %v2067
      %2100 = vmatprep.subr.mxu0 0.0
      %2101 = vmatpush1.msra.mxu0 %v2066
      %2102 = vmatprep.subr.mxu0 0.0
      %2103 = vmatpush1.msra.mxu0 %v2065
      %2104 = vmatprep.subr.mxu0 0.0
      %2105 = vmatpush1.msra.mxu0 %v2064
      %2106 = vmatprep.subr.mxu0 0.0
      %2107 = vmatpush1.msra.mxu0 %v2063
      %2108 = vmatprep.subr.mxu0 0.0
      %2109 = vmatpush1.msra.mxu0 %v2062
      %2110 = vmatprep.subr.mxu0 0.0
      %2111 = vmatpush2.msra.mxu0 0.0
      %2112 = vmatprep.subr.mxu0 0.0
      %2113 = vmatpush2.msra.mxu0 0.0
      %2114 = vmatprep.subr.mxu0 0.0
      %2115 = vmatpush2.msra.mxu0 0.0
      %2116 = vmatprep.subr.mxu0 0.0
      %2117 = vmatpush2.msra.mxu0 0.0
      %2118 = vmatprep.subr.mxu0 0.0
      %2119 = vmatpush2.msra.mxu0 0.0
      %2120 = vmatprep.subr.mxu0 0.0
      %2121 = vmatpush2.msra.mxu0 0.0
      %2122 = vmatprep.subr.mxu0 0.0
      %2123 = vmatpush2.msra.mxu0 0.0
      %2124 = vmatprep.subr.mxu0 0.0
      %2125 = vmatpush2.msra.mxu0 0.0
      %2126 = vmatprep.subr.mxu0 0.0
      %2127 = vmatpush2.msra.mxu0 0.0
      %2128 = vmatprep.subr.mxu0 0.0
      %2129 = vmatpush2.msra.mxu0 0.0
      %2130 = vmatprep.subr.mxu0 0.0
      %2131 = vmatpush2.msra.mxu0 0.0
      %2132 = vmatprep.subr.mxu0 0.0
      %2133 = vmatpush2.msra.mxu0 0.0
      %2134 = vmatprep.subr.mxu0 0.0
      %2135 = vmatpush2.msra.mxu0 0.0
      %2136 = vmatprep.subr.mxu0 0.0
      %2137 = vmatpush2.msra.mxu0 0.0
      %2138 = vmatprep.subr.mxu0 0.0
      %2139 = vmatpush2.msra.mxu0 0.0
      %2140 = vmatprep.subr.mxu0 0.0
      %2141 = vmatpush2.msra.mxu0 0.0
      %2142 = vmatprep.mubr.f32.mxu0 0.0
      %2143 = vmatmul.mubr.f32.gmra.mxu0 %v2053
      %v2144 = vpop.f32.mrf.mxu0
      %v2145 = vadd.f32 0.0, %v2144
      %v2146 = vpop.f32.mrf.mxu0
      %2147 = vmatprep.mubr.f32.mxu0 0.0
      %2148 = vmatmul.mubr.f32.gmra.mxu0 %v2054
      %v2149 = vpop.f32.mrf.mxu0
      %v2150 = vadd.f32 0.0, %v2149
      %v2151 = vpop.f32.mrf.mxu0
      %2152 = vmatprep.mubr.f32.mxu0 0.0
      %2153 = vmatmul.mubr.f32.gmra.mxu0 %v2055
      %v2154 = vpop.f32.mrf.mxu0
      %v2155 = vadd.f32 0.0, %v2154
      %v2156 = vpop.f32.mrf.mxu0
      %2157 = vmatprep.mubr.f32.mxu0 0.0
      %2158 = vmatmul.mubr.f32.gmra.mxu0 %v2056
      %v2159 = vpop.f32.mrf.mxu0
      %v2160 = vadd.f32 0.0, %v2159
      %v2161 = vpop.f32.mrf.mxu0
      %2162 = vmatprep.mubr.f32.mxu0 0.0
      %2163 = vmatmul.mubr.f32.gmra.mxu0 %v2057
      %v2164 = vpop.f32.mrf.mxu0
      %v2165 = vadd.f32 0.0, %v2164
      %v2166 = vpop.f32.mrf.mxu0
      %2167 = vmatprep.mubr.f32.mxu0 0.0
      %2168 = vmatmul.mubr.f32.gmra.mxu0 %v2058
      %v2169 = vpop.f32.mrf.mxu0
      %v2170 = vadd.f32 0.0, %v2169
      %v2171 = vpop.f32.mrf.mxu0
      %2172 = vmatprep.mubr.f32.mxu0 0.0
      %2173 = vmatmul.mubr.f32.gmra.mxu0 %v2059
      %v2174 = vpop.f32.mrf.mxu0
      %v2175 = vadd.f32 0.0, %v2174
      %v2176 = vpop.f32.mrf.mxu0
      %2177 = vmatprep.mubr.f32.mxu0 0.0
      %2178 = vmatmul.mubr.f32.gmra.mxu0 %v2060
      %v2179 = vpop.f32.mrf.mxu0
      %v2180 = vadd.f32 0.0, %v2179
      %v2181 = vpop.f32.mrf.mxu0
      %2182 = vdwg.mxu0
      %v2183 = vadd.f32 %v2045, %v2145
      %v2184 = vadd.f32 %v2046, %v2150
      %v2185 = vadd.f32 %v2047, %v2155
      %v2186 = vadd.f32 %v2048, %v2160
      %v2187 = vadd.f32 %v2049, %v2165
      %v2188 = vadd.f32 %v2050, %v2170
      %v2189 = vadd.f32 %v2051, %v2175
      %v2190 = vadd.f32 %v2052, %v2180
      %v2191 = vld [vmem:[%s409 + $0x2] sm:$0xff]
      %v2192 = vld [vmem:[%s409 + $0x12] sm:$0xff]
      %v2193 = vld [vmem:[%s409 + $0x22] sm:$0xff]
      %v2194 = vld [vmem:[%s409 + $0x32] sm:$0xff]
      %v2195 = vld [vmem:[%s409 + $0x42] sm:$0xff]
      %v2196 = vld [vmem:[%s409 + $0x52] sm:$0xff]
      %v2197 = vld [vmem:[%s409 + $0x62] sm:$0xff]
      %v2198 = vld [vmem:[%s409 + $0x72] sm:$0xff]
      %s2199 = scalar_lea.vmem %s3, 896
      %v2200 = vld [vmem:[%s2199] sm:$0xff]
      %v2201 = vld [vmem:[%s2199 + $0x8] sm:$0xff]
      %v2202 = vld [vmem:[%s2199 + $0x10] sm:$0xff]
      %v2203 = vld [vmem:[%s2199 + $0x18] sm:$0xff]
      %v2204 = vld [vmem:[%s2199 + $0x20] sm:$0xff]
      %v2205 = vld [vmem:[%s2199 + $0x28] sm:$0xff]
      %v2206 = vld [vmem:[%s2199 + $0x30] sm:$0xff]
      %v2207 = vld [vmem:[%s2199 + $0x38] sm:$0xff]
      %v2208 = vld [vmem:[%s2199 + $0x40] sm:$0xff]
      %v2209 = vld [vmem:[%s2199 + $0x48] sm:$0xff]
      %v2210 = vld [vmem:[%s2199 + $0x50] sm:$0xff]
      %v2211 = vld [vmem:[%s2199 + $0x58] sm:$0xff]
      %v2212 = vld [vmem:[%s2199 + $0x60] sm:$0xff]
      %v2213 = vld [vmem:[%s2199 + $0x68] sm:$0xff]
      %v2214 = vld [vmem:[%s2199 + $0x70] sm:$0xff]
      %v2215 = vld [vmem:[%s2199 + $0x78] sm:$0xff]
      %2216 = vmatprep.subr.mxu0 0.0
      %2217 = vmatpush1.msra.mxu0 %v2215
      %2218 = vmatprep.subr.mxu0 0.0
      %2219 = vmatpush1.msra.mxu0 %v2214
      %2220 = vmatprep.subr.mxu0 0.0
      %2221 = vmatpush1.msra.mxu0 %v2213
      %2222 = vmatprep.subr.mxu0 0.0
      %2223 = vmatpush1.msra.mxu0 %v2212
      %2224 = vmatprep.subr.mxu0 0.0
      %2225 = vmatpush1.msra.mxu0 %v2211
      %2226 = vmatprep.subr.mxu0 0.0
      %2227 = vmatpush1.msra.mxu0 %v2210
      %2228 = vmatprep.subr.mxu0 0.0
      %2229 = vmatpush1.msra.mxu0 %v2209
      %2230 = vmatprep.subr.mxu0 0.0
      %2231 = vmatpush1.msra.mxu0 %v2208
      %2232 = vmatprep.subr.mxu0 0.0
      %2233 = vmatpush1.msra.mxu0 %v2207
      %2234 = vmatprep.subr.mxu0 0.0
      %2235 = vmatpush1.msra.mxu0 %v2206
      %2236 = vmatprep.subr.mxu0 0.0
      %2237 = vmatpush1.msra.mxu0 %v2205
      %2238 = vmatprep.subr.mxu0 0.0
      %2239 = vmatpush1.msra.mxu0 %v2204
      %2240 = vmatprep.subr.mxu0 0.0
      %2241 = vmatpush1.msra.mxu0 %v2203
      %2242 = vmatprep.subr.mxu0 0.0
      %2243 = vmatpush1.msra.mxu0 %v2202
      %2244 = vmatprep.subr.mxu0 0.0
      %2245 = vmatpush1.msra.mxu0 %v2201
      %2246 = vmatprep.subr.mxu0 0.0
      %2247 = vmatpush1.msra.mxu0 %v2200
      %2248 = vmatprep.subr.mxu0 0.0
      %2249 = vmatpush2.msra.mxu0 0.0
      %2250 = vmatprep.subr.mxu0 0.0
      %2251 = vmatpush2.msra.mxu0 0.0
      %2252 = vmatprep.subr.mxu0 0.0
      %2253 = vmatpush2.msra.mxu0 0.0
      %2254 = vmatprep.subr.mxu0 0.0
      %2255 = vmatpush2.msra.mxu0 0.0
      %2256 = vmatprep.subr.mxu0 0.0
      %2257 = vmatpush2.msra.mxu0 0.0
      %2258 = vmatprep.subr.mxu0 0.0
      %2259 = vmatpush2.msra.mxu0 0.0
      %2260 = vmatprep.subr.mxu0 0.0
      %2261 = vmatpush2.msra.mxu0 0.0
      %2262 = vmatprep.subr.mxu0 0.0
      %2263 = vmatpush2.msra.mxu0 0.0
      %2264 = vmatprep.subr.mxu0 0.0
      %2265 = vmatpush2.msra.mxu0 0.0
      %2266 = vmatprep.subr.mxu0 0.0
      %2267 = vmatpush2.msra.mxu0 0.0
      %2268 = vmatprep.subr.mxu0 0.0
      %2269 = vmatpush2.msra.mxu0 0.0
      %2270 = vmatprep.subr.mxu0 0.0
      %2271 = vmatpush2.msra.mxu0 0.0
      %2272 = vmatprep.subr.mxu0 0.0
      %2273 = vmatpush2.msra.mxu0 0.0
      %2274 = vmatprep.subr.mxu0 0.0
      %2275 = vmatpush2.msra.mxu0 0.0
      %2276 = vmatprep.subr.mxu0 0.0
      %2277 = vmatpush2.msra.mxu0 0.0
      %2278 = vmatprep.subr.mxu0 0.0
      %2279 = vmatpush2.msra.mxu0 0.0
      %2280 = vmatprep.mubr.f32.mxu0 0.0
      %2281 = vmatmul.mubr.f32.gmra.mxu0 %v2191
      %v2282 = vpop.f32.mrf.mxu0
      %v2283 = vadd.f32 0.0, %v2282
      %v2284 = vpop.f32.mrf.mxu0
      %2285 = vmatprep.mubr.f32.mxu0 0.0
      %2286 = vmatmul.mubr.f32.gmra.mxu0 %v2192
      %v2287 = vpop.f32.mrf.mxu0
      %v2288 = vadd.f32 0.0, %v2287
      %v2289 = vpop.f32.mrf.mxu0
      %2290 = vmatprep.mubr.f32.mxu0 0.0
      %2291 = vmatmul.mubr.f32.gmra.mxu0 %v2193
      %v2292 = vpop.f32.mrf.mxu0
      %v2293 = vadd.f32 0.0, %v2292
      %v2294 = vpop.f32.mrf.mxu0
      %2295 = vmatprep.mubr.f32.mxu0 0.0
      %2296 = vmatmul.mubr.f32.gmra.mxu0 %v2194
      %v2297 = vpop.f32.mrf.mxu0
      %v2298 = vadd.f32 0.0, %v2297
      %v2299 = vpop.f32.mrf.mxu0
      %2300 = vmatprep.mubr.f32.mxu0 0.0
      %2301 = vmatmul.mubr.f32.gmra.mxu0 %v2195
      %v2302 = vpop.f32.mrf.mxu0
      %v2303 = vadd.f32 0.0, %v2302
      %v2304 = vpop.f32.mrf.mxu0
      %2305 = vmatprep.mubr.f32.mxu0 0.0
      %2306 = vmatmul.mubr.f32.gmra.mxu0 %v2196
      %v2307 = vpop.f32.mrf.mxu0
      %v2308 = vadd.f32 0.0, %v2307
      %v2309 = vpop.f32.mrf.mxu0
      %2310 = vmatprep.mubr.f32.mxu0 0.0
      %2311 = vmatmul.mubr.f32.gmra.mxu0 %v2197
      %v2312 = vpop.f32.mrf.mxu0
      %v2313 = vadd.f32 0.0, %v2312
      %v2314 = vpop.f32.mrf.mxu0
      %2315 = vmatprep.mubr.f32.mxu0 0.0
      %2316 = vmatmul.mubr.f32.gmra.mxu0 %v2198
      %v2317 = vpop.f32.mrf.mxu0
      %v2318 = vadd.f32 0.0, %v2317
      %v2319 = vpop.f32.mrf.mxu0
      %2320 = vdwg.mxu0
      %v2321 = vadd.f32 %v2183, %v2283
      %v2322 = vadd.f32 %v2184, %v2288
      %v2323 = vadd.f32 %v2185, %v2293
      %v2324 = vadd.f32 %v2186, %v2298
      %v2325 = vadd.f32 %v2187, %v2303
      %v2326 = vadd.f32 %v2188, %v2308
      %v2327 = vadd.f32 %v2189, %v2313
      %v2328 = vadd.f32 %v2190, %v2318
      %v2329 = vld [vmem:[%s409 + $0x3] sm:$0xff]
      %v2330 = vld [vmem:[%s409 + $0x13] sm:$0xff]
      %v2331 = vld [vmem:[%s409 + $0x23] sm:$0xff]
      %v2332 = vld [vmem:[%s409 + $0x33] sm:$0xff]
      %v2333 = vld [vmem:[%s409 + $0x43] sm:$0xff]
      %v2334 = vld [vmem:[%s409 + $0x53] sm:$0xff]
      %v2335 = vld [vmem:[%s409 + $0x63] sm:$0xff]
      %v2336 = vld [vmem:[%s409 + $0x73] sm:$0xff]
      %s2337 = scalar_lea.vmem %s3, 1024
      %v2338 = vld [vmem:[%s2337] sm:$0xff]
      %v2339 = vld [vmem:[%s2337 + $0x8] sm:$0xff]
      %v2340 = vld [vmem:[%s2337 + $0x10] sm:$0xff]
      %v2341 = vld [vmem:[%s2337 + $0x18] sm:$0xff]
      %v2342 = vld [vmem:[%s2337 + $0x20] sm:$0xff]
      %v2343 = vld [vmem:[%s2337 + $0x28] sm:$0xff]
      %v2344 = vld [vmem:[%s2337 + $0x30] sm:$0xff]
      %v2345 = vld [vmem:[%s2337 + $0x38] sm:$0xff]
      %v2346 = vld [vmem:[%s2337 + $0x40] sm:$0xff]
      %v2347 = vld [vmem:[%s2337 + $0x48] sm:$0xff]
      %v2348 = vld [vmem:[%s2337 + $0x50] sm:$0xff]
      %v2349 = vld [vmem:[%s2337 + $0x58] sm:$0xff]
      %v2350 = vld [vmem:[%s2337 + $0x60] sm:$0xff]
      %v2351 = vld [vmem:[%s2337 + $0x68] sm:$0xff]
      %v2352 = vld [vmem:[%s2337 + $0x70] sm:$0xff]
      %v2353 = vld [vmem:[%s2337 + $0x78] sm:$0xff]
      %2354 = vmatprep.subr.mxu0 0.0
      %2355 = vmatpush1.msra.mxu0 %v2353
      %2356 = vmatprep.subr.mxu0 0.0
      %2357 = vmatpush1.msra.mxu0 %v2352
      %2358 = vmatprep.subr.mxu0 0.0
      %2359 = vmatpush1.msra.mxu0 %v2351
      %2360 = vmatprep.subr.mxu0 0.0
      %2361 = vmatpush1.msra.mxu0 %v2350
      %2362 = vmatprep.subr.mxu0 0.0
      %2363 = vmatpush1.msra.mxu0 %v2349
      %2364 = vmatprep.subr.mxu0 0.0
      %2365 = vmatpush1.msra.mxu0 %v2348
      %2366 = vmatprep.subr.mxu0 0.0
      %2367 = vmatpush1.msra.mxu0 %v2347
      %2368 = vmatprep.subr.mxu0 0.0
      %2369 = vmatpush1.msra.mxu0 %v2346
      %2370 = vmatprep.subr.mxu0 0.0
      %2371 = vmatpush1.msra.mxu0 %v2345
      %2372 = vmatprep.subr.mxu0 0.0
      %2373 = vmatpush1.msra.mxu0 %v2344
      %2374 = vmatprep.subr.mxu0 0.0
      %2375 = vmatpush1.msra.mxu0 %v2343
      %2376 = vmatprep.subr.mxu0 0.0
      %2377 = vmatpush1.msra.mxu0 %v2342
      %2378 = vmatprep.subr.mxu0 0.0
      %2379 = vmatpush1.msra.mxu0 %v2341
      %2380 = vmatprep.subr.mxu0 0.0
      %2381 = vmatpush1.msra.mxu0 %v2340
      %2382 = vmatprep.subr.mxu0 0.0
      %2383 = vmatpush1.msra.mxu0 %v2339
      %2384 = vmatprep.subr.mxu0 0.0
      %2385 = vmatpush1.msra.mxu0 %v2338
      %2386 = vmatprep.subr.mxu0 0.0
      %2387 = vmatpush2.msra.mxu0 0.0
      %2388 = vmatprep.subr.mxu0 0.0
      %2389 = vmatpush2.msra.mxu0 0.0
      %2390 = vmatprep.subr.mxu0 0.0
      %2391 = vmatpush2.msra.mxu0 0.0
      %2392 = vmatprep.subr.mxu0 0.0
      %2393 = vmatpush2.msra.mxu0 0.0
      %2394 = vmatprep.subr.mxu0 0.0
      %2395 = vmatpush2.msra.mxu0 0.0
      %2396 = vmatprep.subr.mxu0 0.0
      %2397 = vmatpush2.msra.mxu0 0.0
      %2398 = vmatprep.subr.mxu0 0.0
      %2399 = vmatpush2.msra.mxu0 0.0
      %2400 = vmatprep.subr.mxu0 0.0
      %2401 = vmatpush2.msra.mxu0 0.0
      %2402 = vmatprep.subr.mxu0 0.0
      %2403 = vmatpush2.msra.mxu0 0.0
      %2404 = vmatprep.subr.mxu0 0.0
      %2405 = vmatpush2.msra.mxu0 0.0
      %2406 = vmatprep.subr.mxu0 0.0
      %2407 = vmatpush2.msra.mxu0 0.0
      %2408 = vmatprep.subr.mxu0 0.0
      %2409 = vmatpush2.msra.mxu0 0.0
      %2410 = vmatprep.subr.mxu0 0.0
      %2411 = vmatpush2.msra.mxu0 0.0
      %2412 = vmatprep.subr.mxu0 0.0
      %2413 = vmatpush2.msra.mxu0 0.0
      %2414 = vmatprep.subr.mxu0 0.0
      %2415 = vmatpush2.msra.mxu0 0.0
      %2416 = vmatprep.subr.mxu0 0.0
      %2417 = vmatpush2.msra.mxu0 0.0
      %2418 = vmatprep.mubr.f32.mxu0 0.0
      %2419 = vmatmul.mubr.f32.gmra.mxu0 %v2329
      %v2420 = vpop.f32.mrf.mxu0
      %v2421 = vadd.f32 0.0, %v2420
      %v2422 = vpop.f32.mrf.mxu0
      %2423 = vmatprep.mubr.f32.mxu0 0.0
      %2424 = vmatmul.mubr.f32.gmra.mxu0 %v2330
      %v2425 = vpop.f32.mrf.mxu0
      %v2426 = vadd.f32 0.0, %v2425
      %v2427 = vpop.f32.mrf.mxu0
      %2428 = vmatprep.mubr.f32.mxu0 0.0
      %2429 = vmatmul.mubr.f32.gmra.mxu0 %v2331
      %v2430 = vpop.f32.mrf.mxu0
      %v2431 = vadd.f32 0.0, %v2430
      %v2432 = vpop.f32.mrf.mxu0
      %2433 = vmatprep.mubr.f32.mxu0 0.0
      %2434 = vmatmul.mubr.f32.gmra.mxu0 %v2332
      %v2435 = vpop.f32.mrf.mxu0
      %v2436 = vadd.f32 0.0, %v2435
      %v2437 = vpop.f32.mrf.mxu0
      %2438 = vmatprep.mubr.f32.mxu0 0.0
      %2439 = vmatmul.mubr.f32.gmra.mxu0 %v2333
      %v2440 = vpop.f32.mrf.mxu0
      %v2441 = vadd.f32 0.0, %v2440
      %v2442 = vpop.f32.mrf.mxu0
      %2443 = vmatprep.mubr.f32.mxu0 0.0
      %2444 = vmatmul.mubr.f32.gmra.mxu0 %v2334
      %v2445 = vpop.f32.mrf.mxu0
      %v2446 = vadd.f32 0.0, %v2445
      %v2447 = vpop.f32.mrf.mxu0
      %2448 = vmatprep.mubr.f32.mxu0 0.0
      %2449 = vmatmul.mubr.f32.gmra.mxu0 %v2335
      %v2450 = vpop.f32.mrf.mxu0
      %v2451 = vadd.f32 0.0, %v2450
      %v2452 = vpop.f32.mrf.mxu0
      %2453 = vmatprep.mubr.f32.mxu0 0.0
      %2454 = vmatmul.mubr.f32.gmra.mxu0 %v2336
      %v2455 = vpop.f32.mrf.mxu0
      %v2456 = vadd.f32 0.0, %v2455
      %v2457 = vpop.f32.mrf.mxu0
      %2458 = vdwg.mxu0
      %v2459 = vadd.f32 %v2321, %v2421
      %v2460 = vadd.f32 %v2322, %v2426
      %v2461 = vadd.f32 %v2323, %v2431
      %v2462 = vadd.f32 %v2324, %v2436
      %v2463 = vadd.f32 %v2325, %v2441
      %v2464 = vadd.f32 %v2326, %v2446
      %v2465 = vadd.f32 %v2327, %v2451
      %v2466 = vadd.f32 %v2328, %v2456
      %v2467 = vld [vmem:[%s409 + $0x4] sm:$0xff]
      %v2468 = vld [vmem:[%s409 + $0x14] sm:$0xff]
      %v2469 = vld [vmem:[%s409 + $0x24] sm:$0xff]
      %v2470 = vld [vmem:[%s409 + $0x34] sm:$0xff]
      %v2471 = vld [vmem:[%s409 + $0x44] sm:$0xff]
      %v2472 = vld [vmem:[%s409 + $0x54] sm:$0xff]
      %v2473 = vld [vmem:[%s409 + $0x64] sm:$0xff]
      %v2474 = vld [vmem:[%s409 + $0x74] sm:$0xff]
      %s2475 = scalar_lea.vmem %s3, 1152
      %v2476 = vld [vmem:[%s2475] sm:$0xff]
      %v2477 = vld [vmem:[%s2475 + $0x8] sm:$0xff]
      %v2478 = vld [vmem:[%s2475 + $0x10] sm:$0xff]
      %v2479 = vld [vmem:[%s2475 + $0x18] sm:$0xff]
      %v2480 = vld [vmem:[%s2475 + $0x20] sm:$0xff]
      %v2481 = vld [vmem:[%s2475 + $0x28] sm:$0xff]
      %v2482 = vld [vmem:[%s2475 + $0x30] sm:$0xff]
      %v2483 = vld [vmem:[%s2475 + $0x38] sm:$0xff]
      %v2484 = vld [vmem:[%s2475 + $0x40] sm:$0xff]
      %v2485 = vld [vmem:[%s2475 + $0x48] sm:$0xff]
      %v2486 = vld [vmem:[%s2475 + $0x50] sm:$0xff]
      %v2487 = vld [vmem:[%s2475 + $0x58] sm:$0xff]
      %v2488 = vld [vmem:[%s2475 + $0x60] sm:$0xff]
      %v2489 = vld [vmem:[%s2475 + $0x68] sm:$0xff]
      %v2490 = vld [vmem:[%s2475 + $0x70] sm:$0xff]
      %v2491 = vld [vmem:[%s2475 + $0x78] sm:$0xff]
      %2492 = vmatprep.subr.mxu0 0.0
      %2493 = vmatpush1.msra.mxu0 %v2491
      %2494 = vmatprep.subr.mxu0 0.0
      %2495 = vmatpush1.msra.mxu0 %v2490
      %2496 = vmatprep.subr.mxu0 0.0
      %2497 = vmatpush1.msra.mxu0 %v2489
      %2498 = vmatprep.subr.mxu0 0.0
      %2499 = vmatpush1.msra.mxu0 %v2488
      %2500 = vmatprep.subr.mxu0 0.0
      %2501 = vmatpush1.msra.mxu0 %v2487
      %2502 = vmatprep.subr.mxu0 0.0
      %2503 = vmatpush1.msra.mxu0 %v2486
      %2504 = vmatprep.subr.mxu0 0.0
      %2505 = vmatpush1.msra.mxu0 %v2485
      %2506 = vmatprep.subr.mxu0 0.0
      %2507 = vmatpush1.msra.mxu0 %v2484
      %2508 = vmatprep.subr.mxu0 0.0
      %2509 = vmatpush1.msra.mxu0 %v2483
      %2510 = vmatprep.subr.mxu0 0.0
      %2511 = vmatpush1.msra.mxu0 %v2482
      %2512 = vmatprep.subr.mxu0 0.0
      %2513 = vmatpush1.msra.mxu0 %v2481
      %2514 = vmatprep.subr.mxu0 0.0
      %2515 = vmatpush1.msra.mxu0 %v2480
      %2516 = vmatprep.subr.mxu0 0.0
      %2517 = vmatpush1.msra.mxu0 %v2479
      %2518 = vmatprep.subr.mxu0 0.0
      %2519 = vmatpush1.msra.mxu0 %v2478
      %2520 = vmatprep.subr.mxu0 0.0
      %2521 = vmatpush1.msra.mxu0 %v2477
      %2522 = vmatprep.subr.mxu0 0.0
      %2523 = vmatpush1.msra.mxu0 %v2476
      %2524 = vmatprep.subr.mxu0 0.0
      %2525 = vmatpush2.msra.mxu0 0.0
      %2526 = vmatprep.subr.mxu0 0.0
      %2527 = vmatpush2.msra.mxu0 0.0
      %2528 = vmatprep.subr.mxu0 0.0
      %2529 = vmatpush2.msra.mxu0 0.0
      %2530 = vmatprep.subr.mxu0 0.0
      %2531 = vmatpush2.msra.mxu0 0.0
      %2532 = vmatprep.subr.mxu0 0.0
      %2533 = vmatpush2.msra.mxu0 0.0
      %2534 = vmatprep.subr.mxu0 0.0
      %2535 = vmatpush2.msra.mxu0 0.0
      %2536 = vmatprep.subr.mxu0 0.0
      %2537 = vmatpush2.msra.mxu0 0.0
      %2538 = vmatprep.subr.mxu0 0.0
      %2539 = vmatpush2.msra.mxu0 0.0
      %2540 = vmatprep.subr.mxu0 0.0
      %2541 = vmatpush2.msra.mxu0 0.0
      %2542 = vmatprep.subr.mxu0 0.0
      %2543 = vmatpush2.msra.mxu0 0.0
      %2544 = vmatprep.subr.mxu0 0.0
      %2545 = vmatpush2.msra.mxu0 0.0
      %2546 = vmatprep.subr.mxu0 0.0
      %2547 = vmatpush2.msra.mxu0 0.0
      %2548 = vmatprep.subr.mxu0 0.0
      %2549 = vmatpush2.msra.mxu0 0.0
      %2550 = vmatprep.subr.mxu0 0.0
      %2551 = vmatpush2.msra.mxu0 0.0
      %2552 = vmatprep.subr.mxu0 0.0
      %2553 = vmatpush2.msra.mxu0 0.0
      %2554 = vmatprep.subr.mxu0 0.0
      %2555 = vmatpush2.msra.mxu0 0.0
      %2556 = vmatprep.mubr.f32.mxu0 0.0
      %2557 = vmatmul.mubr.f32.gmra.mxu0 %v2467
      %v2558 = vpop.f32.mrf.mxu0
      %v2559 = vadd.f32 0.0, %v2558
      %v2560 = vpop.f32.mrf.mxu0
      %2561 = vmatprep.mubr.f32.mxu0 0.0
      %2562 = vmatmul.mubr.f32.gmra.mxu0 %v2468
      %v2563 = vpop.f32.mrf.mxu0
      %v2564 = vadd.f32 0.0, %v2563
      %v2565 = vpop.f32.mrf.mxu0
      %2566 = vmatprep.mubr.f32.mxu0 0.0
      %2567 = vmatmul.mubr.f32.gmra.mxu0 %v2469
      %v2568 = vpop.f32.mrf.mxu0
      %v2569 = vadd.f32 0.0, %v2568
      %v2570 = vpop.f32.mrf.mxu0
      %2571 = vmatprep.mubr.f32.mxu0 0.0
      %2572 = vmatmul.mubr.f32.gmra.mxu0 %v2470
      %v2573 = vpop.f32.mrf.mxu0
      %v2574 = vadd.f32 0.0, %v2573
      %v2575 = vpop.f32.mrf.mxu0
      %2576 = vmatprep.mubr.f32.mxu0 0.0
      %2577 = vmatmul.mubr.f32.gmra.mxu0 %v2471
      %v2578 = vpop.f32.mrf.mxu0
      %v2579 = vadd.f32 0.0, %v2578
      %v2580 = vpop.f32.mrf.mxu0
      %2581 = vmatprep.mubr.f32.mxu0 0.0
      %2582 = vmatmul.mubr.f32.gmra.mxu0 %v2472
      %v2583 = vpop.f32.mrf.mxu0
      %v2584 = vadd.f32 0.0, %v2583
      %v2585 = vpop.f32.mrf.mxu0
      %2586 = vmatprep.mubr.f32.mxu0 0.0
      %2587 = vmatmul.mubr.f32.gmra.mxu0 %v2473
      %v2588 = vpop.f32.mrf.mxu0
      %v2589 = vadd.f32 0.0, %v2588
      %v2590 = vpop.f32.mrf.mxu0
      %2591 = vmatprep.mubr.f32.mxu0 0.0
      %2592 = vmatmul.mubr.f32.gmra.mxu0 %v2474
      %v2593 = vpop.f32.mrf.mxu0
      %v2594 = vadd.f32 0.0, %v2593
      %v2595 = vpop.f32.mrf.mxu0
      %2596 = vdwg.mxu0
      %v2597 = vadd.f32 %v2459, %v2559
      %v2598 = vadd.f32 %v2460, %v2564
      %v2599 = vadd.f32 %v2461, %v2569
      %v2600 = vadd.f32 %v2462, %v2574
      %v2601 = vadd.f32 %v2463, %v2579
      %v2602 = vadd.f32 %v2464, %v2584
      %v2603 = vadd.f32 %v2465, %v2589
      %v2604 = vadd.f32 %v2466, %v2594
      %v2605 = vld [vmem:[%s492] sm:$0xff]
      %v2606 = vld [vmem:[%s492 + $0x10] sm:$0xff]
      %v2607 = vld [vmem:[%s492 + $0x20] sm:$0xff]
      %v2608 = vld [vmem:[%s492 + $0x30] sm:$0xff]
      %v2609 = vld [vmem:[%s492 + $0x40] sm:$0xff]
      %v2610 = vld [vmem:[%s492 + $0x50] sm:$0xff]
      %v2611 = vld [vmem:[%s492 + $0x60] sm:$0xff]
      %v2612 = vld [vmem:[%s492 + $0x70] sm:$0xff]
      %s2613 = scalar_lea.vmem %s3, 1280
      %v2614 = vld [vmem:[%s2613] sm:$0xff]
      %v2615 = vld [vmem:[%s2613 + $0x8] sm:$0xff]
      %v2616 = vld [vmem:[%s2613 + $0x10] sm:$0xff]
      %v2617 = vld [vmem:[%s2613 + $0x18] sm:$0xff]
      %v2618 = vld [vmem:[%s2613 + $0x20] sm:$0xff]
      %v2619 = vld [vmem:[%s2613 + $0x28] sm:$0xff]
      %v2620 = vld [vmem:[%s2613 + $0x30] sm:$0xff]
      %v2621 = vld [vmem:[%s2613 + $0x38] sm:$0xff]
      %v2622 = vld [vmem:[%s2613 + $0x40] sm:$0xff]
      %v2623 = vld [vmem:[%s2613 + $0x48] sm:$0xff]
      %v2624 = vld [vmem:[%s2613 + $0x50] sm:$0xff]
      %v2625 = vld [vmem:[%s2613 + $0x58] sm:$0xff]
      %v2626 = vld [vmem:[%s2613 + $0x60] sm:$0xff]
      %v2627 = vld [vmem:[%s2613 + $0x68] sm:$0xff]
      %v2628 = vld [vmem:[%s2613 + $0x70] sm:$0xff]
      %v2629 = vld [vmem:[%s2613 + $0x78] sm:$0xff]
      %2630 = vmatprep.subr.mxu0 0.0
      %2631 = vmatpush1.msra.mxu0 %v2629
      %2632 = vmatprep.subr.mxu0 0.0
      %2633 = vmatpush1.msra.mxu0 %v2628
      %2634 = vmatprep.subr.mxu0 0.0
      %2635 = vmatpush1.msra.mxu0 %v2627
      %2636 = vmatprep.subr.mxu0 0.0
      %2637 = vmatpush1.msra.mxu0 %v2626
      %2638 = vmatprep.subr.mxu0 0.0
      %2639 = vmatpush1.msra.mxu0 %v2625
      %2640 = vmatprep.subr.mxu0 0.0
      %2641 = vmatpush1.msra.mxu0 %v2624
      %2642 = vmatprep.subr.mxu0 0.0
      %2643 = vmatpush1.msra.mxu0 %v2623
      %2644 = vmatprep.subr.mxu0 0.0
      %2645 = vmatpush1.msra.mxu0 %v2622
      %2646 = vmatprep.subr.mxu0 0.0
      %2647 = vmatpush1.msra.mxu0 %v2621
      %2648 = vmatprep.subr.mxu0 0.0
      %2649 = vmatpush1.msra.mxu0 %v2620
      %2650 = vmatprep.subr.mxu0 0.0
      %2651 = vmatpush1.msra.mxu0 %v2619
      %2652 = vmatprep.subr.mxu0 0.0
      %2653 = vmatpush1.msra.mxu0 %v2618
      %2654 = vmatprep.subr.mxu0 0.0
      %2655 = vmatpush1.msra.mxu0 %v2617
      %2656 = vmatprep.subr.mxu0 0.0
      %2657 = vmatpush1.msra.mxu0 %v2616
      %2658 = vmatprep.subr.mxu0 0.0
      %2659 = vmatpush1.msra.mxu0 %v2615
      %2660 = vmatprep.subr.mxu0 0.0
      %2661 = vmatpush1.msra.mxu0 %v2614
      %2662 = vmatprep.subr.mxu0 0.0
      %2663 = vmatpush2.msra.mxu0 0.0
      %2664 = vmatprep.subr.mxu0 0.0
      %2665 = vmatpush2.msra.mxu0 0.0
      %2666 = vmatprep.subr.mxu0 0.0
      %2667 = vmatpush2.msra.mxu0 0.0
      %2668 = vmatprep.subr.mxu0 0.0
      %2669 = vmatpush2.msra.mxu0 0.0
      %2670 = vmatprep.subr.mxu0 0.0
      %2671 = vmatpush2.msra.mxu0 0.0
      %2672 = vmatprep.subr.mxu0 0.0
      %2673 = vmatpush2.msra.mxu0 0.0
      %2674 = vmatprep.subr.mxu0 0.0
      %2675 = vmatpush2.msra.mxu0 0.0
      %2676 = vmatprep.subr.mxu0 0.0
      %2677 = vmatpush2.msra.mxu0 0.0
      %2678 = vmatprep.subr.mxu0 0.0
      %2679 = vmatpush2.msra.mxu0 0.0
      %2680 = vmatprep.subr.mxu0 0.0
      %2681 = vmatpush2.msra.mxu0 0.0
      %2682 = vmatprep.subr.mxu0 0.0
      %2683 = vmatpush2.msra.mxu0 0.0
      %2684 = vmatprep.subr.mxu0 0.0
      %2685 = vmatpush2.msra.mxu0 0.0
      %2686 = vmatprep.subr.mxu0 0.0
      %2687 = vmatpush2.msra.mxu0 0.0
      %2688 = vmatprep.subr.mxu0 0.0
      %2689 = vmatpush2.msra.mxu0 0.0
      %2690 = vmatprep.subr.mxu0 0.0
      %2691 = vmatpush2.msra.mxu0 0.0
      %2692 = vmatprep.subr.mxu0 0.0
      %2693 = vmatpush2.msra.mxu0 0.0
      %2694 = vmatprep.mubr.f32.mxu0 0.0
      %2695 = vmatmul.mubr.f32.gmra.mxu0 %v2605
      %v2696 = vpop.f32.mrf.mxu0
      %v2697 = vadd.f32 0.0, %v2696
      %v2698 = vpop.f32.mrf.mxu0
      %2699 = vmatprep.mubr.f32.mxu0 0.0
      %2700 = vmatmul.mubr.f32.gmra.mxu0 %v2606
      %v2701 = vpop.f32.mrf.mxu0
      %v2702 = vadd.f32 0.0, %v2701
      %v2703 = vpop.f32.mrf.mxu0
      %2704 = vmatprep.mubr.f32.mxu0 0.0
      %2705 = vmatmul.mubr.f32.gmra.mxu0 %v2607
      %v2706 = vpop.f32.mrf.mxu0
      %v2707 = vadd.f32 0.0, %v2706
      %v2708 = vpop.f32.mrf.mxu0
      %2709 = vmatprep.mubr.f32.mxu0 0.0
      %2710 = vmatmul.mubr.f32.gmra.mxu0 %v2608
      %v2711 = vpop.f32.mrf.mxu0
      %v2712 = vadd.f32 0.0, %v2711
      %v2713 = vpop.f32.mrf.mxu0
      %2714 = vmatprep.mubr.f32.mxu0 0.0
      %2715 = vmatmul.mubr.f32.gmra.mxu0 %v2609
      %v2716 = vpop.f32.mrf.mxu0
      %v2717 = vadd.f32 0.0, %v2716
      %v2718 = vpop.f32.mrf.mxu0
      %2719 = vmatprep.mubr.f32.mxu0 0.0
      %2720 = vmatmul.mubr.f32.gmra.mxu0 %v2610
      %v2721 = vpop.f32.mrf.mxu0
      %v2722 = vadd.f32 0.0, %v2721
      %v2723 = vpop.f32.mrf.mxu0
      %2724 = vmatprep.mubr.f32.mxu0 0.0
      %2725 = vmatmul.mubr.f32.gmra.mxu0 %v2611
      %v2726 = vpop.f32.mrf.mxu0
      %v2727 = vadd.f32 0.0, %v2726
      %v2728 = vpop.f32.mrf.mxu0
      %2729 = vmatprep.mubr.f32.mxu0 0.0
      %2730 = vmatmul.mubr.f32.gmra.mxu0 %v2612
      %v2731 = vpop.f32.mrf.mxu0
      %v2732 = vadd.f32 0.0, %v2731
      %v2733 = vpop.f32.mrf.mxu0
      %2734 = vdwg.mxu0
      %v2735 = vadd.f32 %v2597, %v2697
      %v2736 = vadd.f32 %v2598, %v2702
      %v2737 = vadd.f32 %v2599, %v2707
      %v2738 = vadd.f32 %v2600, %v2712
      %v2739 = vadd.f32 %v2601, %v2717
      %v2740 = vadd.f32 %v2602, %v2722
      %v2741 = vadd.f32 %v2603, %v2727
      %v2742 = vadd.f32 %v2604, %v2732
      %v2743 = vld [vmem:[%s492 + $0x1] sm:$0xff]
      %v2744 = vld [vmem:[%s492 + $0x11] sm:$0xff]
      %v2745 = vld [vmem:[%s492 + $0x21] sm:$0xff]
      %v2746 = vld [vmem:[%s492 + $0x31] sm:$0xff]
      %v2747 = vld [vmem:[%s492 + $0x41] sm:$0xff]
      %v2748 = vld [vmem:[%s492 + $0x51] sm:$0xff]
      %v2749 = vld [vmem:[%s492 + $0x61] sm:$0xff]
      %v2750 = vld [vmem:[%s492 + $0x71] sm:$0xff]
      %s2751 = scalar_lea.vmem %s3, 1408
      %v2752 = vld [vmem:[%s2751] sm:$0xff]
      %v2753 = vld [vmem:[%s2751 + $0x8] sm:$0xff]
      %v2754 = vld [vmem:[%s2751 + $0x10] sm:$0xff]
      %v2755 = vld [vmem:[%s2751 + $0x18] sm:$0xff]
      %v2756 = vld [vmem:[%s2751 + $0x20] sm:$0xff]
      %v2757 = vld [vmem:[%s2751 + $0x28] sm:$0xff]
      %v2758 = vld [vmem:[%s2751 + $0x30] sm:$0xff]
      %v2759 = vld [vmem:[%s2751 + $0x38] sm:$0xff]
      %v2760 = vld [vmem:[%s2751 + $0x40] sm:$0xff]
      %v2761 = vld [vmem:[%s2751 + $0x48] sm:$0xff]
      %v2762 = vld [vmem:[%s2751 + $0x50] sm:$0xff]
      %v2763 = vld [vmem:[%s2751 + $0x58] sm:$0xff]
      %v2764 = vld [vmem:[%s2751 + $0x60] sm:$0xff]
      %v2765 = vld [vmem:[%s2751 + $0x68] sm:$0xff]
      %v2766 = vld [vmem:[%s2751 + $0x70] sm:$0xff]
      %v2767 = vld [vmem:[%s2751 + $0x78] sm:$0xff]
      %2768 = vmatprep.subr.mxu0 0.0
      %2769 = vmatpush1.msra.mxu0 %v2767
      %2770 = vmatprep.subr.mxu0 0.0
      %2771 = vmatpush1.msra.mxu0 %v2766
      %2772 = vmatprep.subr.mxu0 0.0
      %2773 = vmatpush1.msra.mxu0 %v2765
      %2774 = vmatprep.subr.mxu0 0.0
      %2775 = vmatpush1.msra.mxu0 %v2764
      %2776 = vmatprep.subr.mxu0 0.0
      %2777 = vmatpush1.msra.mxu0 %v2763
      %2778 = vmatprep.subr.mxu0 0.0
      %2779 = vmatpush1.msra.mxu0 %v2762
      %2780 = vmatprep.subr.mxu0 0.0
      %2781 = vmatpush1.msra.mxu0 %v2761
      %2782 = vmatprep.subr.mxu0 0.0
      %2783 = vmatpush1.msra.mxu0 %v2760
      %2784 = vmatprep.subr.mxu0 0.0
      %2785 = vmatpush1.msra.mxu0 %v2759
      %2786 = vmatprep.subr.mxu0 0.0
      %2787 = vmatpush1.msra.mxu0 %v2758
      %2788 = vmatprep.subr.mxu0 0.0
      %2789 = vmatpush1.msra.mxu0 %v2757
      %2790 = vmatprep.subr.mxu0 0.0
      %2791 = vmatpush1.msra.mxu0 %v2756
      %2792 = vmatprep.subr.mxu0 0.0
      %2793 = vmatpush1.msra.mxu0 %v2755
      %2794 = vmatprep.subr.mxu0 0.0
      %2795 = vmatpush1.msra.mxu0 %v2754
      %2796 = vmatprep.subr.mxu0 0.0
      %2797 = vmatpush1.msra.mxu0 %v2753
      %2798 = vmatprep.subr.mxu0 0.0
      %2799 = vmatpush1.msra.mxu0 %v2752
      %2800 = vmatprep.subr.mxu0 0.0
      %2801 = vmatpush2.msra.mxu0 0.0
      %2802 = vmatprep.subr.mxu0 0.0
      %2803 = vmatpush2.msra.mxu0 0.0
      %2804 = vmatprep.subr.mxu0 0.0
      %2805 = vmatpush2.msra.mxu0 0.0
      %2806 = vmatprep.subr.mxu0 0.0
      %2807 = vmatpush2.msra.mxu0 0.0
      %2808 = vmatprep.subr.mxu0 0.0
      %2809 = vmatpush2.msra.mxu0 0.0
      %2810 = vmatprep.subr.mxu0 0.0
      %2811 = vmatpush2.msra.mxu0 0.0
      %2812 = vmatprep.subr.mxu0 0.0
      %2813 = vmatpush2.msra.mxu0 0.0
      %2814 = vmatprep.subr.mxu0 0.0
      %2815 = vmatpush2.msra.mxu0 0.0
      %2816 = vmatprep.subr.mxu0 0.0
      %2817 = vmatpush2.msra.mxu0 0.0
      %2818 = vmatprep.subr.mxu0 0.0
      %2819 = vmatpush2.msra.mxu0 0.0
      %2820 = vmatprep.subr.mxu0 0.0
      %2821 = vmatpush2.msra.mxu0 0.0
      %2822 = vmatprep.subr.mxu0 0.0
      %2823 = vmatpush2.msra.mxu0 0.0
      %2824 = vmatprep.subr.mxu0 0.0
      %2825 = vmatpush2.msra.mxu0 0.0
      %2826 = vmatprep.subr.mxu0 0.0
      %2827 = vmatpush2.msra.mxu0 0.0
      %2828 = vmatprep.subr.mxu0 0.0
      %2829 = vmatpush2.msra.mxu0 0.0
      %2830 = vmatprep.subr.mxu0 0.0
      %2831 = vmatpush2.msra.mxu0 0.0
      %2832 = vmatprep.mubr.f32.mxu0 0.0
      %2833 = vmatmul.mubr.f32.gmra.mxu0 %v2743
      %v2834 = vpop.f32.mrf.mxu0
      %v2835 = vadd.f32 0.0, %v2834
      %v2836 = vpop.f32.mrf.mxu0
      %2837 = vmatprep.mubr.f32.mxu0 0.0
      %2838 = vmatmul.mubr.f32.gmra.mxu0 %v2744
      %v2839 = vpop.f32.mrf.mxu0
      %v2840 = vadd.f32 0.0, %v2839
      %v2841 = vpop.f32.mrf.mxu0
      %2842 = vmatprep.mubr.f32.mxu0 0.0
      %2843 = vmatmul.mubr.f32.gmra.mxu0 %v2745
      %v2844 = vpop.f32.mrf.mxu0
      %v2845 = vadd.f32 0.0, %v2844
      %v2846 = vpop.f32.mrf.mxu0
      %2847 = vmatprep.mubr.f32.mxu0 0.0
      %2848 = vmatmul.mubr.f32.gmra.mxu0 %v2746
      %v2849 = vpop.f32.mrf.mxu0
      %v2850 = vadd.f32 0.0, %v2849
      %v2851 = vpop.f32.mrf.mxu0
      %2852 = vmatprep.mubr.f32.mxu0 0.0
      %2853 = vmatmul.mubr.f32.gmra.mxu0 %v2747
      %v2854 = vpop.f32.mrf.mxu0
      %v2855 = vadd.f32 0.0, %v2854
      %v2856 = vpop.f32.mrf.mxu0
      %2857 = vmatprep.mubr.f32.mxu0 0.0
      %2858 = vmatmul.mubr.f32.gmra.mxu0 %v2748
      %v2859 = vpop.f32.mrf.mxu0
      %v2860 = vadd.f32 0.0, %v2859
      %v2861 = vpop.f32.mrf.mxu0
      %2862 = vmatprep.mubr.f32.mxu0 0.0
      %2863 = vmatmul.mubr.f32.gmra.mxu0 %v2749
      %v2864 = vpop.f32.mrf.mxu0
      %v2865 = vadd.f32 0.0, %v2864
      %v2866 = vpop.f32.mrf.mxu0
      %2867 = vmatprep.mubr.f32.mxu0 0.0
      %2868 = vmatmul.mubr.f32.gmra.mxu0 %v2750
      %v2869 = vpop.f32.mrf.mxu0
      %v2870 = vadd.f32 0.0, %v2869
      %v2871 = vpop.f32.mrf.mxu0
      %2872 = vdwg.mxu0
      %v2873 = vadd.f32 %v2735, %v2835
      %v2874 = vadd.f32 %v2736, %v2840
      %v2875 = vadd.f32 %v2737, %v2845
      %v2876 = vadd.f32 %v2738, %v2850
      %v2877 = vadd.f32 %v2739, %v2855
      %v2878 = vadd.f32 %v2740, %v2860
      %v2879 = vadd.f32 %v2741, %v2865
      %v2880 = vadd.f32 %v2742, %v2870
      %v2881 = vld [vmem:[%s492 + $0x2] sm:$0xff]
      %v2882 = vld [vmem:[%s492 + $0x12] sm:$0xff]
      %v2883 = vld [vmem:[%s492 + $0x22] sm:$0xff]
      %v2884 = vld [vmem:[%s492 + $0x32] sm:$0xff]
      %v2885 = vld [vmem:[%s492 + $0x42] sm:$0xff]
      %v2886 = vld [vmem:[%s492 + $0x52] sm:$0xff]
      %v2887 = vld [vmem:[%s492 + $0x62] sm:$0xff]
      %v2888 = vld [vmem:[%s492 + $0x72] sm:$0xff]
      %s2889 = scalar_lea.vmem %s3, 1536
      %v2890 = vld [vmem:[%s2889] sm:$0xff]
      %v2891 = vld [vmem:[%s2889 + $0x8] sm:$0xff]
      %v2892 = vld [vmem:[%s2889 + $0x10] sm:$0xff]
      %v2893 = vld [vmem:[%s2889 + $0x18] sm:$0xff]
      %v2894 = vld [vmem:[%s2889 + $0x20] sm:$0xff]
      %v2895 = vld [vmem:[%s2889 + $0x28] sm:$0xff]
      %v2896 = vld [vmem:[%s2889 + $0x30] sm:$0xff]
      %v2897 = vld [vmem:[%s2889 + $0x38] sm:$0xff]
      %v2898 = vld [vmem:[%s2889 + $0x40] sm:$0xff]
      %v2899 = vld [vmem:[%s2889 + $0x48] sm:$0xff]
      %v2900 = vld [vmem:[%s2889 + $0x50] sm:$0xff]
      %v2901 = vld [vmem:[%s2889 + $0x58] sm:$0xff]
      %v2902 = vld [vmem:[%s2889 + $0x60] sm:$0xff]
      %v2903 = vld [vmem:[%s2889 + $0x68] sm:$0xff]
      %v2904 = vld [vmem:[%s2889 + $0x70] sm:$0xff]
      %v2905 = vld [vmem:[%s2889 + $0x78] sm:$0xff]
      %2906 = vmatprep.subr.mxu0 0.0
      %2907 = vmatpush1.msra.mxu0 %v2905
      %2908 = vmatprep.subr.mxu0 0.0
      %2909 = vmatpush1.msra.mxu0 %v2904
      %2910 = vmatprep.subr.mxu0 0.0
      %2911 = vmatpush1.msra.mxu0 %v2903
      %2912 = vmatprep.subr.mxu0 0.0
      %2913 = vmatpush1.msra.mxu0 %v2902
      %2914 = vmatprep.subr.mxu0 0.0
      %2915 = vmatpush1.msra.mxu0 %v2901
      %2916 = vmatprep.subr.mxu0 0.0
      %2917 = vmatpush1.msra.mxu0 %v2900
      %2918 = vmatprep.subr.mxu0 0.0
      %2919 = vmatpush1.msra.mxu0 %v2899
      %2920 = vmatprep.subr.mxu0 0.0
      %2921 = vmatpush1.msra.mxu0 %v2898
      %2922 = vmatprep.subr.mxu0 0.0
      %2923 = vmatpush1.msra.mxu0 %v2897
      %2924 = vmatprep.subr.mxu0 0.0
      %2925 = vmatpush1.msra.mxu0 %v2896
      %2926 = vmatprep.subr.mxu0 0.0
      %2927 = vmatpush1.msra.mxu0 %v2895
      %2928 = vmatprep.subr.mxu0 0.0
      %2929 = vmatpush1.msra.mxu0 %v2894
      %2930 = vmatprep.subr.mxu0 0.0
      %2931 = vmatpush1.msra.mxu0 %v2893
      %2932 = vmatprep.subr.mxu0 0.0
      %2933 = vmatpush1.msra.mxu0 %v2892
      %2934 = vmatprep.subr.mxu0 0.0
      %2935 = vmatpush1.msra.mxu0 %v2891
      %2936 = vmatprep.subr.mxu0 0.0
      %2937 = vmatpush1.msra.mxu0 %v2890
      %2938 = vmatprep.subr.mxu0 0.0
      %2939 = vmatpush2.msra.mxu0 0.0
      %2940 = vmatprep.subr.mxu0 0.0
      %2941 = vmatpush2.msra.mxu0 0.0
      %2942 = vmatprep.subr.mxu0 0.0
      %2943 = vmatpush2.msra.mxu0 0.0
      %2944 = vmatprep.subr.mxu0 0.0
      %2945 = vmatpush2.msra.mxu0 0.0
      %2946 = vmatprep.subr.mxu0 0.0
      %2947 = vmatpush2.msra.mxu0 0.0
      %2948 = vmatprep.subr.mxu0 0.0
      %2949 = vmatpush2.msra.mxu0 0.0
      %2950 = vmatprep.subr.mxu0 0.0
      %2951 = vmatpush2.msra.mxu0 0.0
      %2952 = vmatprep.subr.mxu0 0.0
      %2953 = vmatpush2.msra.mxu0 0.0
      %2954 = vmatprep.subr.mxu0 0.0
      %2955 = vmatpush2.msra.mxu0 0.0
      %2956 = vmatprep.subr.mxu0 0.0
      %2957 = vmatpush2.msra.mxu0 0.0
      %2958 = vmatprep.subr.mxu0 0.0
      %2959 = vmatpush2.msra.mxu0 0.0
      %2960 = vmatprep.subr.mxu0 0.0
      %2961 = vmatpush2.msra.mxu0 0.0
      %2962 = vmatprep.subr.mxu0 0.0
      %2963 = vmatpush2.msra.mxu0 0.0
      %2964 = vmatprep.subr.mxu0 0.0
      %2965 = vmatpush2.msra.mxu0 0.0
      %2966 = vmatprep.subr.mxu0 0.0
      %2967 = vmatpush2.msra.mxu0 0.0
      %2968 = vmatprep.subr.mxu0 0.0
      %2969 = vmatpush2.msra.mxu0 0.0
      %2970 = vmatprep.mubr.f32.mxu0 0.0
      %2971 = vmatmul.mubr.f32.gmra.mxu0 %v2881
      %v2972 = vpop.f32.mrf.mxu0
      %v2973 = vadd.f32 0.0, %v2972
      %v2974 = vpop.f32.mrf.mxu0
      %2975 = vmatprep.mubr.f32.mxu0 0.0
      %2976 = vmatmul.mubr.f32.gmra.mxu0 %v2882
      %v2977 = vpop.f32.mrf.mxu0
      %v2978 = vadd.f32 0.0, %v2977
      %v2979 = vpop.f32.mrf.mxu0
      %2980 = vmatprep.mubr.f32.mxu0 0.0
      %2981 = vmatmul.mubr.f32.gmra.mxu0 %v2883
      %v2982 = vpop.f32.mrf.mxu0
      %v2983 = vadd.f32 0.0, %v2982
      %v2984 = vpop.f32.mrf.mxu0
      %2985 = vmatprep.mubr.f32.mxu0 0.0
      %2986 = vmatmul.mubr.f32.gmra.mxu0 %v2884
      %v2987 = vpop.f32.mrf.mxu0
      %v2988 = vadd.f32 0.0, %v2987
      %v2989 = vpop.f32.mrf.mxu0
      %2990 = vmatprep.mubr.f32.mxu0 0.0
      %2991 = vmatmul.mubr.f32.gmra.mxu0 %v2885
      %v2992 = vpop.f32.mrf.mxu0
      %v2993 = vadd.f32 0.0, %v2992
      %v2994 = vpop.f32.mrf.mxu0
      %2995 = vmatprep.mubr.f32.mxu0 0.0
      %2996 = vmatmul.mubr.f32.gmra.mxu0 %v2886
      %v2997 = vpop.f32.mrf.mxu0
      %v2998 = vadd.f32 0.0, %v2997
      %v2999 = vpop.f32.mrf.mxu0
      %3000 = vmatprep.mubr.f32.mxu0 0.0
      %3001 = vmatmul.mubr.f32.gmra.mxu0 %v2887
      %v3002 = vpop.f32.mrf.mxu0
      %v3003 = vadd.f32 0.0, %v3002
      %v3004 = vpop.f32.mrf.mxu0
      %3005 = vmatprep.mubr.f32.mxu0 0.0
      %3006 = vmatmul.mubr.f32.gmra.mxu0 %v2888
      %v3007 = vpop.f32.mrf.mxu0
      %v3008 = vadd.f32 0.0, %v3007
      %v3009 = vpop.f32.mrf.mxu0
      %3010 = vdwg.mxu0
      %v3011 = vadd.f32 %v2873, %v2973
      %v3012 = vadd.f32 %v2874, %v2978
      %v3013 = vadd.f32 %v2875, %v2983
      %v3014 = vadd.f32 %v2876, %v2988
      %v3015 = vadd.f32 %v2877, %v2993
      %v3016 = vadd.f32 %v2878, %v2998
      %v3017 = vadd.f32 %v2879, %v3003
      %v3018 = vadd.f32 %v2880, %v3008
      %v3019 = vld [vmem:[%s492 + $0x3] sm:$0xff]
      %v3020 = vld [vmem:[%s492 + $0x13] sm:$0xff]
      %v3021 = vld [vmem:[%s492 + $0x23] sm:$0xff]
      %v3022 = vld [vmem:[%s492 + $0x33] sm:$0xff]
      %v3023 = vld [vmem:[%s492 + $0x43] sm:$0xff]
      %v3024 = vld [vmem:[%s492 + $0x53] sm:$0xff]
      %v3025 = vld [vmem:[%s492 + $0x63] sm:$0xff]
      %v3026 = vld [vmem:[%s492 + $0x73] sm:$0xff]
      %s3027 = scalar_lea.vmem %s3, 1664
      %v3028 = vld [vmem:[%s3027] sm:$0xff]
      %v3029 = vld [vmem:[%s3027 + $0x8] sm:$0xff]
      %v3030 = vld [vmem:[%s3027 + $0x10] sm:$0xff]
      %v3031 = vld [vmem:[%s3027 + $0x18] sm:$0xff]
      %v3032 = vld [vmem:[%s3027 + $0x20] sm:$0xff]
      %v3033 = vld [vmem:[%s3027 + $0x28] sm:$0xff]
      %v3034 = vld [vmem:[%s3027 + $0x30] sm:$0xff]
      %v3035 = vld [vmem:[%s3027 + $0x38] sm:$0xff]
      %v3036 = vld [vmem:[%s3027 + $0x40] sm:$0xff]
      %v3037 = vld [vmem:[%s3027 + $0x48] sm:$0xff]
      %v3038 = vld [vmem:[%s3027 + $0x50] sm:$0xff]
      %v3039 = vld [vmem:[%s3027 + $0x58] sm:$0xff]
      %v3040 = vld [vmem:[%s3027 + $0x60] sm:$0xff]
      %v3041 = vld [vmem:[%s3027 + $0x68] sm:$0xff]
      %v3042 = vld [vmem:[%s3027 + $0x70] sm:$0xff]
      %v3043 = vld [vmem:[%s3027 + $0x78] sm:$0xff]
      %3044 = vmatprep.subr.mxu0 0.0
      %3045 = vmatpush1.msra.mxu0 %v3043
      %3046 = vmatprep.subr.mxu0 0.0
      %3047 = vmatpush1.msra.mxu0 %v3042
      %3048 = vmatprep.subr.mxu0 0.0
      %3049 = vmatpush1.msra.mxu0 %v3041
      %3050 = vmatprep.subr.mxu0 0.0
      %3051 = vmatpush1.msra.mxu0 %v3040
      %3052 = vmatprep.subr.mxu0 0.0
      %3053 = vmatpush1.msra.mxu0 %v3039
      %3054 = vmatprep.subr.mxu0 0.0
      %3055 = vmatpush1.msra.mxu0 %v3038
      %3056 = vmatprep.subr.mxu0 0.0
      %3057 = vmatpush1.msra.mxu0 %v3037
      %3058 = vmatprep.subr.mxu0 0.0
      %3059 = vmatpush1.msra.mxu0 %v3036
      %3060 = vmatprep.subr.mxu0 0.0
      %3061 = vmatpush1.msra.mxu0 %v3035
      %3062 = vmatprep.subr.mxu0 0.0
      %3063 = vmatpush1.msra.mxu0 %v3034
      %3064 = vmatprep.subr.mxu0 0.0
      %3065 = vmatpush1.msra.mxu0 %v3033
      %3066 = vmatprep.subr.mxu0 0.0
      %3067 = vmatpush1.msra.mxu0 %v3032
      %3068 = vmatprep.subr.mxu0 0.0
      %3069 = vmatpush1.msra.mxu0 %v3031
      %3070 = vmatprep.subr.mxu0 0.0
      %3071 = vmatpush1.msra.mxu0 %v3030
      %3072 = vmatprep.subr.mxu0 0.0
      %3073 = vmatpush1.msra.mxu0 %v3029
      %3074 = vmatprep.subr.mxu0 0.0
      %3075 = vmatpush1.msra.mxu0 %v3028
      %3076 = vmatprep.subr.mxu0 0.0
      %3077 = vmatpush2.msra.mxu0 0.0
      %3078 = vmatprep.subr.mxu0 0.0
      %3079 = vmatpush2.msra.mxu0 0.0
      %3080 = vmatprep.subr.mxu0 0.0
      %3081 = vmatpush2.msra.mxu0 0.0
      %3082 = vmatprep.subr.mxu0 0.0
      %3083 = vmatpush2.msra.mxu0 0.0
      %3084 = vmatprep.subr.mxu0 0.0
      %3085 = vmatpush2.msra.mxu0 0.0
      %3086 = vmatprep.subr.mxu0 0.0
      %3087 = vmatpush2.msra.mxu0 0.0
      %3088 = vmatprep.subr.mxu0 0.0
      %3089 = vmatpush2.msra.mxu0 0.0
      %3090 = vmatprep.subr.mxu0 0.0
      %3091 = vmatpush2.msra.mxu0 0.0
      %3092 = vmatprep.subr.mxu0 0.0
      %3093 = vmatpush2.msra.mxu0 0.0
      %3094 = vmatprep.subr.mxu0 0.0
      %3095 = vmatpush2.msra.mxu0 0.0
      %3096 = vmatprep.subr.mxu0 0.0
      %3097 = vmatpush2.msra.mxu0 0.0
      %3098 = vmatprep.subr.mxu0 0.0
      %3099 = vmatpush2.msra.mxu0 0.0
      %3100 = vmatprep.subr.mxu0 0.0
      %3101 = vmatpush2.msra.mxu0 0.0
      %3102 = vmatprep.subr.mxu0 0.0
      %3103 = vmatpush2.msra.mxu0 0.0
      %3104 = vmatprep.subr.mxu0 0.0
      %3105 = vmatpush2.msra.mxu0 0.0
      %3106 = vmatprep.subr.mxu0 0.0
      %3107 = vmatpush2.msra.mxu0 0.0
      %3108 = vmatprep.mubr.f32.mxu0 0.0
      %3109 = vmatmul.mubr.f32.gmra.mxu0 %v3019
      %v3110 = vpop.f32.mrf.mxu0
      %v3111 = vadd.f32 0.0, %v3110
      %v3112 = vpop.f32.mrf.mxu0
      %3113 = vmatprep.mubr.f32.mxu0 0.0
      %3114 = vmatmul.mubr.f32.gmra.mxu0 %v3020
      %v3115 = vpop.f32.mrf.mxu0
      %v3116 = vadd.f32 0.0, %v3115
      %v3117 = vpop.f32.mrf.mxu0
      %3118 = vmatprep.mubr.f32.mxu0 0.0
      %3119 = vmatmul.mubr.f32.gmra.mxu0 %v3021
      %v3120 = vpop.f32.mrf.mxu0
      %v3121 = vadd.f32 0.0, %v3120
      %v3122 = vpop.f32.mrf.mxu0
      %3123 = vmatprep.mubr.f32.mxu0 0.0
      %3124 = vmatmul.mubr.f32.gmra.mxu0 %v3022
      %v3125 = vpop.f32.mrf.mxu0
      %v3126 = vadd.f32 0.0, %v3125
      %v3127 = vpop.f32.mrf.mxu0
      %3128 = vmatprep.mubr.f32.mxu0 0.0
      %3129 = vmatmul.mubr.f32.gmra.mxu0 %v3023
      %v3130 = vpop.f32.mrf.mxu0
      %v3131 = vadd.f32 0.0, %v3130
      %v3132 = vpop.f32.mrf.mxu0
      %3133 = vmatprep.mubr.f32.mxu0 0.0
      %3134 = vmatmul.mubr.f32.gmra.mxu0 %v3024
      %v3135 = vpop.f32.mrf.mxu0
      %v3136 = vadd.f32 0.0, %v3135
      %v3137 = vpop.f32.mrf.mxu0
      %3138 = vmatprep.mubr.f32.mxu0 0.0
      %3139 = vmatmul.mubr.f32.gmra.mxu0 %v3025
      %v3140 = vpop.f32.mrf.mxu0
      %v3141 = vadd.f32 0.0, %v3140
      %v3142 = vpop.f32.mrf.mxu0
      %3143 = vmatprep.mubr.f32.mxu0 0.0
      %3144 = vmatmul.mubr.f32.gmra.mxu0 %v3026
      %v3145 = vpop.f32.mrf.mxu0
      %v3146 = vadd.f32 0.0, %v3145
      %v3147 = vpop.f32.mrf.mxu0
      %3148 = vdwg.mxu0
      %v3149 = vadd.f32 %v3011, %v3111
      %v3150 = vadd.f32 %v3012, %v3116
      %v3151 = vadd.f32 %v3013, %v3121
      %v3152 = vadd.f32 %v3014, %v3126
      %v3153 = vadd.f32 %v3015, %v3131
      %v3154 = vadd.f32 %v3016, %v3136
      %v3155 = vadd.f32 %v3017, %v3141
      %v3156 = vadd.f32 %v3018, %v3146
      %v3157 = vld [vmem:[%s492 + $0x4] sm:$0xff]
      %v3158 = vld [vmem:[%s492 + $0x14] sm:$0xff]
      %v3159 = vld [vmem:[%s492 + $0x24] sm:$0xff]
      %v3160 = vld [vmem:[%s492 + $0x34] sm:$0xff]
      %v3161 = vld [vmem:[%s492 + $0x44] sm:$0xff]
      %v3162 = vld [vmem:[%s492 + $0x54] sm:$0xff]
      %v3163 = vld [vmem:[%s492 + $0x64] sm:$0xff]
      %v3164 = vld [vmem:[%s492 + $0x74] sm:$0xff]
      %s3165 = scalar_lea.vmem %s3, 1792
      %v3166 = vld [vmem:[%s3165] sm:$0xff]
      %v3167 = vld [vmem:[%s3165 + $0x8] sm:$0xff]
      %v3168 = vld [vmem:[%s3165 + $0x10] sm:$0xff]
      %v3169 = vld [vmem:[%s3165 + $0x18] sm:$0xff]
      %v3170 = vld [vmem:[%s3165 + $0x20] sm:$0xff]
      %v3171 = vld [vmem:[%s3165 + $0x28] sm:$0xff]
      %v3172 = vld [vmem:[%s3165 + $0x30] sm:$0xff]
      %v3173 = vld [vmem:[%s3165 + $0x38] sm:$0xff]
      %v3174 = vld [vmem:[%s3165 + $0x40] sm:$0xff]
      %v3175 = vld [vmem:[%s3165 + $0x48] sm:$0xff]
      %v3176 = vld [vmem:[%s3165 + $0x50] sm:$0xff]
      %v3177 = vld [vmem:[%s3165 + $0x58] sm:$0xff]
      %v3178 = vld [vmem:[%s3165 + $0x60] sm:$0xff]
      %v3179 = vld [vmem:[%s3165 + $0x68] sm:$0xff]
      %v3180 = vld [vmem:[%s3165 + $0x70] sm:$0xff]
      %v3181 = vld [vmem:[%s3165 + $0x78] sm:$0xff]
      %3182 = vmatprep.subr.mxu0 0.0
      %3183 = vmatpush1.msra.mxu0 %v3181
      %3184 = vmatprep.subr.mxu0 0.0
      %3185 = vmatpush1.msra.mxu0 %v3180
      %3186 = vmatprep.subr.mxu0 0.0
      %3187 = vmatpush1.msra.mxu0 %v3179
      %3188 = vmatprep.subr.mxu0 0.0
      %3189 = vmatpush1.msra.mxu0 %v3178
      %3190 = vmatprep.subr.mxu0 0.0
      %3191 = vmatpush1.msra.mxu0 %v3177
      %3192 = vmatprep.subr.mxu0 0.0
      %3193 = vmatpush1.msra.mxu0 %v3176
      %3194 = vmatprep.subr.mxu0 0.0
      %3195 = vmatpush1.msra.mxu0 %v3175
      %3196 = vmatprep.subr.mxu0 0.0
      %3197 = vmatpush1.msra.mxu0 %v3174
      %3198 = vmatprep.subr.mxu0 0.0
      %3199 = vmatpush1.msra.mxu0 %v3173
      %3200 = vmatprep.subr.mxu0 0.0
      %3201 = vmatpush1.msra.mxu0 %v3172
      %3202 = vmatprep.subr.mxu0 0.0
      %3203 = vmatpush1.msra.mxu0 %v3171
      %3204 = vmatprep.subr.mxu0 0.0
      %3205 = vmatpush1.msra.mxu0 %v3170
      %3206 = vmatprep.subr.mxu0 0.0
      %3207 = vmatpush1.msra.mxu0 %v3169
      %3208 = vmatprep.subr.mxu0 0.0
      %3209 = vmatpush1.msra.mxu0 %v3168
      %3210 = vmatprep.subr.mxu0 0.0
      %3211 = vmatpush1.msra.mxu0 %v3167
      %3212 = vmatprep.subr.mxu0 0.0
      %3213 = vmatpush1.msra.mxu0 %v3166
      %3214 = vmatprep.subr.mxu0 0.0
      %3215 = vmatpush2.msra.mxu0 0.0
      %3216 = vmatprep.subr.mxu0 0.0
      %3217 = vmatpush2.msra.mxu0 0.0
      %3218 = vmatprep.subr.mxu0 0.0
      %3219 = vmatpush2.msra.mxu0 0.0
      %3220 = vmatprep.subr.mxu0 0.0
      %3221 = vmatpush2.msra.mxu0 0.0
      %3222 = vmatprep.subr.mxu0 0.0
      %3223 = vmatpush2.msra.mxu0 0.0
      %3224 = vmatprep.subr.mxu0 0.0
      %3225 = vmatpush2.msra.mxu0 0.0
      %3226 = vmatprep.subr.mxu0 0.0
      %3227 = vmatpush2.msra.mxu0 0.0
      %3228 = vmatprep.subr.mxu0 0.0
      %3229 = vmatpush2.msra.mxu0 0.0
      %3230 = vmatprep.subr.mxu0 0.0
      %3231 = vmatpush2.msra.mxu0 0.0
      %3232 = vmatprep.subr.mxu0 0.0
      %3233 = vmatpush2.msra.mxu0 0.0
      %3234 = vmatprep.subr.mxu0 0.0
      %3235 = vmatpush2.msra.mxu0 0.0
      %3236 = vmatprep.subr.mxu0 0.0
      %3237 = vmatpush2.msra.mxu0 0.0
      %3238 = vmatprep.subr.mxu0 0.0
      %3239 = vmatpush2.msra.mxu0 0.0
      %3240 = vmatprep.subr.mxu0 0.0
      %3241 = vmatpush2.msra.mxu0 0.0
      %3242 = vmatprep.subr.mxu0 0.0
      %3243 = vmatpush2.msra.mxu0 0.0
      %3244 = vmatprep.subr.mxu0 0.0
      %3245 = vmatpush2.msra.mxu0 0.0
      %3246 = vmatprep.mubr.f32.mxu0 0.0
      %3247 = vmatmul.mubr.f32.gmra.mxu0 %v3157
      %v3248 = vpop.f32.mrf.mxu0
      %v3249 = vadd.f32 0.0, %v3248
      %v3250 = vpop.f32.mrf.mxu0
      %3251 = vmatprep.mubr.f32.mxu0 0.0
      %3252 = vmatmul.mubr.f32.gmra.mxu0 %v3158
      %v3253 = vpop.f32.mrf.mxu0
      %v3254 = vadd.f32 0.0, %v3253
      %v3255 = vpop.f32.mrf.mxu0
      %3256 = vmatprep.mubr.f32.mxu0 0.0
      %3257 = vmatmul.mubr.f32.gmra.mxu0 %v3159
      %v3258 = vpop.f32.mrf.mxu0
      %v3259 = vadd.f32 0.0, %v3258
      %v3260 = vpop.f32.mrf.mxu0
      %3261 = vmatprep.mubr.f32.mxu0 0.0
      %3262 = vmatmul.mubr.f32.gmra.mxu0 %v3160
      %v3263 = vpop.f32.mrf.mxu0
      %v3264 = vadd.f32 0.0, %v3263
      %v3265 = vpop.f32.mrf.mxu0
      %3266 = vmatprep.mubr.f32.mxu0 0.0
      %3267 = vmatmul.mubr.f32.gmra.mxu0 %v3161
      %v3268 = vpop.f32.mrf.mxu0
      %v3269 = vadd.f32 0.0, %v3268
      %v3270 = vpop.f32.mrf.mxu0
      %3271 = vmatprep.mubr.f32.mxu0 0.0
      %3272 = vmatmul.mubr.f32.gmra.mxu0 %v3162
      %v3273 = vpop.f32.mrf.mxu0
      %v3274 = vadd.f32 0.0, %v3273
      %v3275 = vpop.f32.mrf.mxu0
      %3276 = vmatprep.mubr.f32.mxu0 0.0
      %3277 = vmatmul.mubr.f32.gmra.mxu0 %v3163
      %v3278 = vpop.f32.mrf.mxu0
      %v3279 = vadd.f32 0.0, %v3278
      %v3280 = vpop.f32.mrf.mxu0
      %3281 = vmatprep.mubr.f32.mxu0 0.0
      %3282 = vmatmul.mubr.f32.gmra.mxu0 %v3164
      %v3283 = vpop.f32.mrf.mxu0
      %v3284 = vadd.f32 0.0, %v3283
      %v3285 = vpop.f32.mrf.mxu0
      %3286 = vdwg.mxu0
      %v3287 = vadd.f32 %v3149, %v3249
      %v3288 = vadd.f32 %v3150, %v3254
      %v3289 = vadd.f32 %v3151, %v3259
      %v3290 = vadd.f32 %v3152, %v3264
      %v3291 = vadd.f32 %v3153, %v3269
      %v3292 = vadd.f32 %v3154, %v3274
      %v3293 = vadd.f32 %v3155, %v3279
      %v3294 = vadd.f32 %v3156, %v3284
      %v3295 = vld [vmem:[%s575] sm:$0xff]
      %v3296 = vld [vmem:[%s575 + $0x10] sm:$0xff]
      %v3297 = vld [vmem:[%s575 + $0x20] sm:$0xff]
      %v3298 = vld [vmem:[%s575 + $0x30] sm:$0xff]
      %v3299 = vld [vmem:[%s575 + $0x40] sm:$0xff]
      %v3300 = vld [vmem:[%s575 + $0x50] sm:$0xff]
      %v3301 = vld [vmem:[%s575 + $0x60] sm:$0xff]
      %v3302 = vld [vmem:[%s575 + $0x70] sm:$0xff]
      %s3303 = scalar_lea.vmem %s3, 1920
      %v3304 = vld [vmem:[%s3303] sm:$0xff]
      %v3305 = vld [vmem:[%s3303 + $0x8] sm:$0xff]
      %v3306 = vld [vmem:[%s3303 + $0x10] sm:$0xff]
      %v3307 = vld [vmem:[%s3303 + $0x18] sm:$0xff]
      %v3308 = vld [vmem:[%s3303 + $0x20] sm:$0xff]
      %v3309 = vld [vmem:[%s3303 + $0x28] sm:$0xff]
      %v3310 = vld [vmem:[%s3303 + $0x30] sm:$0xff]
      %v3311 = vld [vmem:[%s3303 + $0x38] sm:$0xff]
      %v3312 = vld [vmem:[%s3303 + $0x40] sm:$0xff]
      %v3313 = vld [vmem:[%s3303 + $0x48] sm:$0xff]
      %v3314 = vld [vmem:[%s3303 + $0x50] sm:$0xff]
      %v3315 = vld [vmem:[%s3303 + $0x58] sm:$0xff]
      %v3316 = vld [vmem:[%s3303 + $0x60] sm:$0xff]
      %v3317 = vld [vmem:[%s3303 + $0x68] sm:$0xff]
      %v3318 = vld [vmem:[%s3303 + $0x70] sm:$0xff]
      %v3319 = vld [vmem:[%s3303 + $0x78] sm:$0xff]
      %3320 = vmatprep.subr.mxu0 0.0
      %3321 = vmatpush1.msra.mxu0 %v3319
      %3322 = vmatprep.subr.mxu0 0.0
      %3323 = vmatpush1.msra.mxu0 %v3318
      %3324 = vmatprep.subr.mxu0 0.0
      %3325 = vmatpush1.msra.mxu0 %v3317
      %3326 = vmatprep.subr.mxu0 0.0
      %3327 = vmatpush1.msra.mxu0 %v3316
      %3328 = vmatprep.subr.mxu0 0.0
      %3329 = vmatpush1.msra.mxu0 %v3315
      %3330 = vmatprep.subr.mxu0 0.0
      %3331 = vmatpush1.msra.mxu0 %v3314
      %3332 = vmatprep.subr.mxu0 0.0
      %3333 = vmatpush1.msra.mxu0 %v3313
      %3334 = vmatprep.subr.mxu0 0.0
      %3335 = vmatpush1.msra.mxu0 %v3312
      %3336 = vmatprep.subr.mxu0 0.0
      %3337 = vmatpush1.msra.mxu0 %v3311
      %3338 = vmatprep.subr.mxu0 0.0
      %3339 = vmatpush1.msra.mxu0 %v3310
      %3340 = vmatprep.subr.mxu0 0.0
      %3341 = vmatpush1.msra.mxu0 %v3309
      %3342 = vmatprep.subr.mxu0 0.0
      %3343 = vmatpush1.msra.mxu0 %v3308
      %3344 = vmatprep.subr.mxu0 0.0
      %3345 = vmatpush1.msra.mxu0 %v3307
      %3346 = vmatprep.subr.mxu0 0.0
      %3347 = vmatpush1.msra.mxu0 %v3306
      %3348 = vmatprep.subr.mxu0 0.0
      %3349 = vmatpush1.msra.mxu0 %v3305
      %3350 = vmatprep.subr.mxu0 0.0
      %3351 = vmatpush1.msra.mxu0 %v3304
      %3352 = vmatprep.subr.mxu0 0.0
      %3353 = vmatpush2.msra.mxu0 0.0
      %3354 = vmatprep.subr.mxu0 0.0
      %3355 = vmatpush2.msra.mxu0 0.0
      %3356 = vmatprep.subr.mxu0 0.0
      %3357 = vmatpush2.msra.mxu0 0.0
      %3358 = vmatprep.subr.mxu0 0.0
      %3359 = vmatpush2.msra.mxu0 0.0
      %3360 = vmatprep.subr.mxu0 0.0
      %3361 = vmatpush2.msra.mxu0 0.0
      %3362 = vmatprep.subr.mxu0 0.0
      %3363 = vmatpush2.msra.mxu0 0.0
      %3364 = vmatprep.subr.mxu0 0.0
      %3365 = vmatpush2.msra.mxu0 0.0
      %3366 = vmatprep.subr.mxu0 0.0
      %3367 = vmatpush2.msra.mxu0 0.0
      %3368 = vmatprep.subr.mxu0 0.0
      %3369 = vmatpush2.msra.mxu0 0.0
      %3370 = vmatprep.subr.mxu0 0.0
      %3371 = vmatpush2.msra.mxu0 0.0
      %3372 = vmatprep.subr.mxu0 0.0
      %3373 = vmatpush2.msra.mxu0 0.0
      %3374 = vmatprep.subr.mxu0 0.0
      %3375 = vmatpush2.msra.mxu0 0.0
      %3376 = vmatprep.subr.mxu0 0.0
      %3377 = vmatpush2.msra.mxu0 0.0
      %3378 = vmatprep.subr.mxu0 0.0
      %3379 = vmatpush2.msra.mxu0 0.0
      %3380 = vmatprep.subr.mxu0 0.0
      %3381 = vmatpush2.msra.mxu0 0.0
      %3382 = vmatprep.subr.mxu0 0.0
      %3383 = vmatpush2.msra.mxu0 0.0
      %3384 = vmatprep.mubr.f32.mxu0 0.0
      %3385 = vmatmul.mubr.f32.gmra.mxu0 %v3295
      %v3386 = vpop.f32.mrf.mxu0
      %v3387 = vadd.f32 0.0, %v3386
      %v3388 = vpop.f32.mrf.mxu0
      %3389 = vmatprep.mubr.f32.mxu0 0.0
      %3390 = vmatmul.mubr.f32.gmra.mxu0 %v3296
      %v3391 = vpop.f32.mrf.mxu0
      %v3392 = vadd.f32 0.0, %v3391
      %v3393 = vpop.f32.mrf.mxu0
      %3394 = vmatprep.mubr.f32.mxu0 0.0
      %3395 = vmatmul.mubr.f32.gmra.mxu0 %v3297
      %v3396 = vpop.f32.mrf.mxu0
      %v3397 = vadd.f32 0.0, %v3396
      %v3398 = vpop.f32.mrf.mxu0
      %3399 = vmatprep.mubr.f32.mxu0 0.0
      %3400 = vmatmul.mubr.f32.gmra.mxu0 %v3298
      %v3401 = vpop.f32.mrf.mxu0
      %v3402 = vadd.f32 0.0, %v3401
      %v3403 = vpop.f32.mrf.mxu0
      %3404 = vmatprep.mubr.f32.mxu0 0.0
      %3405 = vmatmul.mubr.f32.gmra.mxu0 %v3299
      %v3406 = vpop.f32.mrf.mxu0
      %v3407 = vadd.f32 0.0, %v3406
      %v3408 = vpop.f32.mrf.mxu0
      %3409 = vmatprep.mubr.f32.mxu0 0.0
      %3410 = vmatmul.mubr.f32.gmra.mxu0 %v3300
      %v3411 = vpop.f32.mrf.mxu0
      %v3412 = vadd.f32 0.0, %v3411
      %v3413 = vpop.f32.mrf.mxu0
      %3414 = vmatprep.mubr.f32.mxu0 0.0
      %3415 = vmatmul.mubr.f32.gmra.mxu0 %v3301
      %v3416 = vpop.f32.mrf.mxu0
      %v3417 = vadd.f32 0.0, %v3416
      %v3418 = vpop.f32.mrf.mxu0
      %3419 = vmatprep.mubr.f32.mxu0 0.0
      %3420 = vmatmul.mubr.f32.gmra.mxu0 %v3302
      %v3421 = vpop.f32.mrf.mxu0
      %v3422 = vadd.f32 0.0, %v3421
      %v3423 = vpop.f32.mrf.mxu0
      %3424 = vdwg.mxu0
      %v3425 = vadd.f32 %v3287, %v3387
      %v3426 = vadd.f32 %v3288, %v3392
      %v3427 = vadd.f32 %v3289, %v3397
      %v3428 = vadd.f32 %v3290, %v3402
      %v3429 = vadd.f32 %v3291, %v3407
      %v3430 = vadd.f32 %v3292, %v3412
      %v3431 = vadd.f32 %v3293, %v3417
      %v3432 = vadd.f32 %v3294, %v3422
      %v3433 = vld [vmem:[%s575 + $0x1] sm:$0xff]
      %v3434 = vld [vmem:[%s575 + $0x11] sm:$0xff]
      %v3435 = vld [vmem:[%s575 + $0x21] sm:$0xff]
      %v3436 = vld [vmem:[%s575 + $0x31] sm:$0xff]
      %v3437 = vld [vmem:[%s575 + $0x41] sm:$0xff]
      %v3438 = vld [vmem:[%s575 + $0x51] sm:$0xff]
      %v3439 = vld [vmem:[%s575 + $0x61] sm:$0xff]
      %v3440 = vld [vmem:[%s575 + $0x71] sm:$0xff]
      %s3441 = scalar_lea.vmem %s3, 2048
      %v3442 = vld [vmem:[%s3441] sm:$0xff]
      %v3443 = vld [vmem:[%s3441 + $0x8] sm:$0xff]
      %v3444 = vld [vmem:[%s3441 + $0x10] sm:$0xff]
      %v3445 = vld [vmem:[%s3441 + $0x18] sm:$0xff]
      %v3446 = vld [vmem:[%s3441 + $0x20] sm:$0xff]
      %v3447 = vld [vmem:[%s3441 + $0x28] sm:$0xff]
      %v3448 = vld [vmem:[%s3441 + $0x30] sm:$0xff]
      %v3449 = vld [vmem:[%s3441 + $0x38] sm:$0xff]
      %v3450 = vld [vmem:[%s3441 + $0x40] sm:$0xff]
      %v3451 = vld [vmem:[%s3441 + $0x48] sm:$0xff]
      %v3452 = vld [vmem:[%s3441 + $0x50] sm:$0xff]
      %v3453 = vld [vmem:[%s3441 + $0x58] sm:$0xff]
      %v3454 = vld [vmem:[%s3441 + $0x60] sm:$0xff]
      %v3455 = vld [vmem:[%s3441 + $0x68] sm:$0xff]
      %v3456 = vld [vmem:[%s3441 + $0x70] sm:$0xff]
      %v3457 = vld [vmem:[%s3441 + $0x78] sm:$0xff]
      %3458 = vmatprep.subr.mxu0 0.0
      %3459 = vmatpush1.msra.mxu0 %v3457
      %3460 = vmatprep.subr.mxu0 0.0
      %3461 = vmatpush1.msra.mxu0 %v3456
      %3462 = vmatprep.subr.mxu0 0.0
      %3463 = vmatpush1.msra.mxu0 %v3455
      %3464 = vmatprep.subr.mxu0 0.0
      %3465 = vmatpush1.msra.mxu0 %v3454
      %3466 = vmatprep.subr.mxu0 0.0
      %3467 = vmatpush1.msra.mxu0 %v3453
      %3468 = vmatprep.subr.mxu0 0.0
      %3469 = vmatpush1.msra.mxu0 %v3452
      %3470 = vmatprep.subr.mxu0 0.0
      %3471 = vmatpush1.msra.mxu0 %v3451
      %3472 = vmatprep.subr.mxu0 0.0
      %3473 = vmatpush1.msra.mxu0 %v3450
      %3474 = vmatprep.subr.mxu0 0.0
      %3475 = vmatpush1.msra.mxu0 %v3449
      %3476 = vmatprep.subr.mxu0 0.0
      %3477 = vmatpush1.msra.mxu0 %v3448
      %3478 = vmatprep.subr.mxu0 0.0
      %3479 = vmatpush1.msra.mxu0 %v3447
      %3480 = vmatprep.subr.mxu0 0.0
      %3481 = vmatpush1.msra.mxu0 %v3446
      %3482 = vmatprep.subr.mxu0 0.0
      %3483 = vmatpush1.msra.mxu0 %v3445
      %3484 = vmatprep.subr.mxu0 0.0
      %3485 = vmatpush1.msra.mxu0 %v3444
      %3486 = vmatprep.subr.mxu0 0.0
      %3487 = vmatpush1.msra.mxu0 %v3443
      %3488 = vmatprep.subr.mxu0 0.0
      %3489 = vmatpush1.msra.mxu0 %v3442
      %3490 = vmatprep.subr.mxu0 0.0
      %3491 = vmatpush2.msra.mxu0 0.0
      %3492 = vmatprep.subr.mxu0 0.0
      %3493 = vmatpush2.msra.mxu0 0.0
      %3494 = vmatprep.subr.mxu0 0.0
      %3495 = vmatpush2.msra.mxu0 0.0
      %3496 = vmatprep.subr.mxu0 0.0
      %3497 = vmatpush2.msra.mxu0 0.0
      %3498 = vmatprep.subr.mxu0 0.0
      %3499 = vmatpush2.msra.mxu0 0.0
      %3500 = vmatprep.subr.mxu0 0.0
      %3501 = vmatpush2.msra.mxu0 0.0
      %3502 = vmatprep.subr.mxu0 0.0
      %3503 = vmatpush2.msra.mxu0 0.0
      %3504 = vmatprep.subr.mxu0 0.0
      %3505 = vmatpush2.msra.mxu0 0.0
      %3506 = vmatprep.subr.mxu0 0.0
      %3507 = vmatpush2.msra.mxu0 0.0
      %3508 = vmatprep.subr.mxu0 0.0
      %3509 = vmatpush2.msra.mxu0 0.0
      %3510 = vmatprep.subr.mxu0 0.0
      %3511 = vmatpush2.msra.mxu0 0.0
      %3512 = vmatprep.subr.mxu0 0.0
      %3513 = vmatpush2.msra.mxu0 0.0
      %3514 = vmatprep.subr.mxu0 0.0
      %3515 = vmatpush2.msra.mxu0 0.0
      %3516 = vmatprep.subr.mxu0 0.0
      %3517 = vmatpush2.msra.mxu0 0.0
      %3518 = vmatprep.subr.mxu0 0.0
      %3519 = vmatpush2.msra.mxu0 0.0
      %3520 = vmatprep.subr.mxu0 0.0
      %3521 = vmatpush2.msra.mxu0 0.0
      %3522 = vmatprep.mubr.f32.mxu0 0.0
      %3523 = vmatmul.mubr.f32.gmra.mxu0 %v3433
      %v3524 = vpop.f32.mrf.mxu0
      %v3525 = vadd.f32 0.0, %v3524
      %v3526 = vpop.f32.mrf.mxu0
      %3527 = vmatprep.mubr.f32.mxu0 0.0
      %3528 = vmatmul.mubr.f32.gmra.mxu0 %v3434
      %v3529 = vpop.f32.mrf.mxu0
      %v3530 = vadd.f32 0.0, %v3529
      %v3531 = vpop.f32.mrf.mxu0
      %3532 = vmatprep.mubr.f32.mxu0 0.0
      %3533 = vmatmul.mubr.f32.gmra.mxu0 %v3435
      %v3534 = vpop.f32.mrf.mxu0
      %v3535 = vadd.f32 0.0, %v3534
      %v3536 = vpop.f32.mrf.mxu0
      %3537 = vmatprep.mubr.f32.mxu0 0.0
      %3538 = vmatmul.mubr.f32.gmra.mxu0 %v3436
      %v3539 = vpop.f32.mrf.mxu0
      %v3540 = vadd.f32 0.0, %v3539
      %v3541 = vpop.f32.mrf.mxu0
      %3542 = vmatprep.mubr.f32.mxu0 0.0
      %3543 = vmatmul.mubr.f32.gmra.mxu0 %v3437
      %v3544 = vpop.f32.mrf.mxu0
      %v3545 = vadd.f32 0.0, %v3544
      %v3546 = vpop.f32.mrf.mxu0
      %3547 = vmatprep.mubr.f32.mxu0 0.0
      %3548 = vmatmul.mubr.f32.gmra.mxu0 %v3438
      %v3549 = vpop.f32.mrf.mxu0
      %v3550 = vadd.f32 0.0, %v3549
      %v3551 = vpop.f32.mrf.mxu0
      %3552 = vmatprep.mubr.f32.mxu0 0.0
      %3553 = vmatmul.mubr.f32.gmra.mxu0 %v3439
      %v3554 = vpop.f32.mrf.mxu0
      %v3555 = vadd.f32 0.0, %v3554
      %v3556 = vpop.f32.mrf.mxu0
      %3557 = vmatprep.mubr.f32.mxu0 0.0
      %3558 = vmatmul.mubr.f32.gmra.mxu0 %v3440
      %v3559 = vpop.f32.mrf.mxu0
      %v3560 = vadd.f32 0.0, %v3559
      %v3561 = vpop.f32.mrf.mxu0
      %3562 = vdwg.mxu0
      %v3563 = vadd.f32 %v3425, %v3525
      %v3564 = vadd.f32 %v3426, %v3530
      %v3565 = vadd.f32 %v3427, %v3535
      %v3566 = vadd.f32 %v3428, %v3540
      %v3567 = vadd.f32 %v3429, %v3545
      %v3568 = vadd.f32 %v3430, %v3550
      %v3569 = vadd.f32 %v3431, %v3555
      %v3570 = vadd.f32 %v3432, %v3560
      %v3571 = vld [vmem:[%s575 + $0x2] sm:$0xff]
      %v3572 = vld [vmem:[%s575 + $0x12] sm:$0xff]
      %v3573 = vld [vmem:[%s575 + $0x22] sm:$0xff]
      %v3574 = vld [vmem:[%s575 + $0x32] sm:$0xff]
      %v3575 = vld [vmem:[%s575 + $0x42] sm:$0xff]
      %v3576 = vld [vmem:[%s575 + $0x52] sm:$0xff]
      %v3577 = vld [vmem:[%s575 + $0x62] sm:$0xff]
      %v3578 = vld [vmem:[%s575 + $0x72] sm:$0xff]
      %s3579 = scalar_lea.vmem %s3, 2176
      %v3580 = vld [vmem:[%s3579] sm:$0xff]
      %v3581 = vld [vmem:[%s3579 + $0x8] sm:$0xff]
      %v3582 = vld [vmem:[%s3579 + $0x10] sm:$0xff]
      %v3583 = vld [vmem:[%s3579 + $0x18] sm:$0xff]
      %v3584 = vld [vmem:[%s3579 + $0x20] sm:$0xff]
      %v3585 = vld [vmem:[%s3579 + $0x28] sm:$0xff]
      %v3586 = vld [vmem:[%s3579 + $0x30] sm:$0xff]
      %v3587 = vld [vmem:[%s3579 + $0x38] sm:$0xff]
      %v3588 = vld [vmem:[%s3579 + $0x40] sm:$0xff]
      %v3589 = vld [vmem:[%s3579 + $0x48] sm:$0xff]
      %v3590 = vld [vmem:[%s3579 + $0x50] sm:$0xff]
      %v3591 = vld [vmem:[%s3579 + $0x58] sm:$0xff]
      %v3592 = vld [vmem:[%s3579 + $0x60] sm:$0xff]
      %v3593 = vld [vmem:[%s3579 + $0x68] sm:$0xff]
      %v3594 = vld [vmem:[%s3579 + $0x70] sm:$0xff]
      %v3595 = vld [vmem:[%s3579 + $0x78] sm:$0xff]
      %3596 = vmatprep.subr.mxu0 0.0
      %3597 = vmatpush1.msra.mxu0 %v3595
      %3598 = vmatprep.subr.mxu0 0.0
      %3599 = vmatpush1.msra.mxu0 %v3594
      %3600 = vmatprep.subr.mxu0 0.0
      %3601 = vmatpush1.msra.mxu0 %v3593
      %3602 = vmatprep.subr.mxu0 0.0
      %3603 = vmatpush1.msra.mxu0 %v3592
      %3604 = vmatprep.subr.mxu0 0.0
      %3605 = vmatpush1.msra.mxu0 %v3591
      %3606 = vmatprep.subr.mxu0 0.0
      %3607 = vmatpush1.msra.mxu0 %v3590
      %3608 = vmatprep.subr.mxu0 0.0
      %3609 = vmatpush1.msra.mxu0 %v3589
      %3610 = vmatprep.subr.mxu0 0.0
      %3611 = vmatpush1.msra.mxu0 %v3588
      %3612 = vmatprep.subr.mxu0 0.0
      %3613 = vmatpush1.msra.mxu0 %v3587
      %3614 = vmatprep.subr.mxu0 0.0
      %3615 = vmatpush1.msra.mxu0 %v3586
      %3616 = vmatprep.subr.mxu0 0.0
      %3617 = vmatpush1.msra.mxu0 %v3585
      %3618 = vmatprep.subr.mxu0 0.0
      %3619 = vmatpush1.msra.mxu0 %v3584
      %3620 = vmatprep.subr.mxu0 0.0
      %3621 = vmatpush1.msra.mxu0 %v3583
      %3622 = vmatprep.subr.mxu0 0.0
      %3623 = vmatpush1.msra.mxu0 %v3582
      %3624 = vmatprep.subr.mxu0 0.0
      %3625 = vmatpush1.msra.mxu0 %v3581
      %3626 = vmatprep.subr.mxu0 0.0
      %3627 = vmatpush1.msra.mxu0 %v3580
      %3628 = vmatprep.subr.mxu0 0.0
      %3629 = vmatpush2.msra.mxu0 0.0
      %3630 = vmatprep.subr.mxu0 0.0
      %3631 = vmatpush2.msra.mxu0 0.0
      %3632 = vmatprep.subr.mxu0 0.0
      %3633 = vmatpush2.msra.mxu0 0.0
      %3634 = vmatprep.subr.mxu0 0.0
      %3635 = vmatpush2.msra.mxu0 0.0
      %3636 = vmatprep.subr.mxu0 0.0
      %3637 = vmatpush2.msra.mxu0 0.0
      %3638 = vmatprep.subr.mxu0 0.0
      %3639 = vmatpush2.msra.mxu0 0.0
      %3640 = vmatprep.subr.mxu0 0.0
      %3641 = vmatpush2.msra.mxu0 0.0
      %3642 = vmatprep.subr.mxu0 0.0
      %3643 = vmatpush2.msra.mxu0 0.0
      %3644 = vmatprep.subr.mxu0 0.0
      %3645 = vmatpush2.msra.mxu0 0.0
      %3646 = vmatprep.subr.mxu0 0.0
      %3647 = vmatpush2.msra.mxu0 0.0
      %3648 = vmatprep.subr.mxu0 0.0
      %3649 = vmatpush2.msra.mxu0 0.0
      %3650 = vmatprep.subr.mxu0 0.0
      %3651 = vmatpush2.msra.mxu0 0.0
      %3652 = vmatprep.subr.mxu0 0.0
      %3653 = vmatpush2.msra.mxu0 0.0
      %3654 = vmatprep.subr.mxu0 0.0
      %3655 = vmatpush2.msra.mxu0 0.0
      %3656 = vmatprep.subr.mxu0 0.0
      %3657 = vmatpush2.msra.mxu0 0.0
      %3658 = vmatprep.subr.mxu0 0.0
      %3659 = vmatpush2.msra.mxu0 0.0
      %3660 = vmatprep.mubr.f32.mxu0 0.0
      %3661 = vmatmul.mubr.f32.gmra.mxu0 %v3571
      %v3662 = vpop.f32.mrf.mxu0
      %v3663 = vadd.f32 0.0, %v3662
      %v3664 = vpop.f32.mrf.mxu0
      %3665 = vmatprep.mubr.f32.mxu0 0.0
      %3666 = vmatmul.mubr.f32.gmra.mxu0 %v3572
      %v3667 = vpop.f32.mrf.mxu0
      %v3668 = vadd.f32 0.0, %v3667
      %v3669 = vpop.f32.mrf.mxu0
      %3670 = vmatprep.mubr.f32.mxu0 0.0
      %3671 = vmatmul.mubr.f32.gmra.mxu0 %v3573
      %v3672 = vpop.f32.mrf.mxu0
      %v3673 = vadd.f32 0.0, %v3672
      %v3674 = vpop.f32.mrf.mxu0
      %3675 = vmatprep.mubr.f32.mxu0 0.0
      %3676 = vmatmul.mubr.f32.gmra.mxu0 %v3574
      %v3677 = vpop.f32.mrf.mxu0
      %v3678 = vadd.f32 0.0, %v3677
      %v3679 = vpop.f32.mrf.mxu0
      %3680 = vmatprep.mubr.f32.mxu0 0.0
      %3681 = vmatmul.mubr.f32.gmra.mxu0 %v3575
      %v3682 = vpop.f32.mrf.mxu0
      %v3683 = vadd.f32 0.0, %v3682
      %v3684 = vpop.f32.mrf.mxu0
      %3685 = vmatprep.mubr.f32.mxu0 0.0
      %3686 = vmatmul.mubr.f32.gmra.mxu0 %v3576
      %v3687 = vpop.f32.mrf.mxu0
      %v3688 = vadd.f32 0.0, %v3687
      %v3689 = vpop.f32.mrf.mxu0
      %3690 = vmatprep.mubr.f32.mxu0 0.0
      %3691 = vmatmul.mubr.f32.gmra.mxu0 %v3577
      %v3692 = vpop.f32.mrf.mxu0
      %v3693 = vadd.f32 0.0, %v3692
      %v3694 = vpop.f32.mrf.mxu0
      %3695 = vmatprep.mubr.f32.mxu0 0.0
      %3696 = vmatmul.mubr.f32.gmra.mxu0 %v3578
      %v3697 = vpop.f32.mrf.mxu0
      %v3698 = vadd.f32 0.0, %v3697
      %v3699 = vpop.f32.mrf.mxu0
      %3700 = vdwg.mxu0
      %v3701 = vadd.f32 %v3563, %v3663
      %v3702 = vadd.f32 %v3564, %v3668
      %v3703 = vadd.f32 %v3565, %v3673
      %v3704 = vadd.f32 %v3566, %v3678
      %v3705 = vadd.f32 %v3567, %v3683
      %v3706 = vadd.f32 %v3568, %v3688
      %v3707 = vadd.f32 %v3569, %v3693
      %v3708 = vadd.f32 %v3570, %v3698
      %v3709 = vld [vmem:[%s575 + $0x3] sm:$0xff]
      %v3710 = vld [vmem:[%s575 + $0x13] sm:$0xff]
      %v3711 = vld [vmem:[%s575 + $0x23] sm:$0xff]
      %v3712 = vld [vmem:[%s575 + $0x33] sm:$0xff]
      %v3713 = vld [vmem:[%s575 + $0x43] sm:$0xff]
      %v3714 = vld [vmem:[%s575 + $0x53] sm:$0xff]
      %v3715 = vld [vmem:[%s575 + $0x63] sm:$0xff]
      %v3716 = vld [vmem:[%s575 + $0x73] sm:$0xff]
      %s3717 = scalar_lea.vmem %s3, 2304
      %v3718 = vld [vmem:[%s3717] sm:$0xff]
      %v3719 = vld [vmem:[%s3717 + $0x8] sm:$0xff]
      %v3720 = vld [vmem:[%s3717 + $0x10] sm:$0xff]
      %v3721 = vld [vmem:[%s3717 + $0x18] sm:$0xff]
      %v3722 = vld [vmem:[%s3717 + $0x20] sm:$0xff]
      %v3723 = vld [vmem:[%s3717 + $0x28] sm:$0xff]
      %v3724 = vld [vmem:[%s3717 + $0x30] sm:$0xff]
      %v3725 = vld [vmem:[%s3717 + $0x38] sm:$0xff]
      %v3726 = vld [vmem:[%s3717 + $0x40] sm:$0xff]
      %v3727 = vld [vmem:[%s3717 + $0x48] sm:$0xff]
      %v3728 = vld [vmem:[%s3717 + $0x50] sm:$0xff]
      %v3729 = vld [vmem:[%s3717 + $0x58] sm:$0xff]
      %v3730 = vld [vmem:[%s3717 + $0x60] sm:$0xff]
      %v3731 = vld [vmem:[%s3717 + $0x68] sm:$0xff]
      %v3732 = vld [vmem:[%s3717 + $0x70] sm:$0xff]
      %v3733 = vld [vmem:[%s3717 + $0x78] sm:$0xff]
      %3734 = vmatprep.subr.mxu0 0.0
      %3735 = vmatpush1.msra.mxu0 %v3733
      %3736 = vmatprep.subr.mxu0 0.0
      %3737 = vmatpush1.msra.mxu0 %v3732
      %3738 = vmatprep.subr.mxu0 0.0
      %3739 = vmatpush1.msra.mxu0 %v3731
      %3740 = vmatprep.subr.mxu0 0.0
      %3741 = vmatpush1.msra.mxu0 %v3730
      %3742 = vmatprep.subr.mxu0 0.0
      %3743 = vmatpush1.msra.mxu0 %v3729
      %3744 = vmatprep.subr.mxu0 0.0
      %3745 = vmatpush1.msra.mxu0 %v3728
      %3746 = vmatprep.subr.mxu0 0.0
      %3747 = vmatpush1.msra.mxu0 %v3727
      %3748 = vmatprep.subr.mxu0 0.0
      %3749 = vmatpush1.msra.mxu0 %v3726
      %3750 = vmatprep.subr.mxu0 0.0
      %3751 = vmatpush1.msra.mxu0 %v3725
      %3752 = vmatprep.subr.mxu0 0.0
      %3753 = vmatpush1.msra.mxu0 %v3724
      %3754 = vmatprep.subr.mxu0 0.0
      %3755 = vmatpush1.msra.mxu0 %v3723
      %3756 = vmatprep.subr.mxu0 0.0
      %3757 = vmatpush1.msra.mxu0 %v3722
      %3758 = vmatprep.subr.mxu0 0.0
      %3759 = vmatpush1.msra.mxu0 %v3721
      %3760 = vmatprep.subr.mxu0 0.0
      %3761 = vmatpush1.msra.mxu0 %v3720
      %3762 = vmatprep.subr.mxu0 0.0
      %3763 = vmatpush1.msra.mxu0 %v3719
      %3764 = vmatprep.subr.mxu0 0.0
      %3765 = vmatpush1.msra.mxu0 %v3718
      %3766 = vmatprep.subr.mxu0 0.0
      %3767 = vmatpush2.msra.mxu0 0.0
      %3768 = vmatprep.subr.mxu0 0.0
      %3769 = vmatpush2.msra.mxu0 0.0
      %3770 = vmatprep.subr.mxu0 0.0
      %3771 = vmatpush2.msra.mxu0 0.0
      %3772 = vmatprep.subr.mxu0 0.0
      %3773 = vmatpush2.msra.mxu0 0.0
      %3774 = vmatprep.subr.mxu0 0.0
      %3775 = vmatpush2.msra.mxu0 0.0
      %3776 = vmatprep.subr.mxu0 0.0
      %3777 = vmatpush2.msra.mxu0 0.0
      %3778 = vmatprep.subr.mxu0 0.0
      %3779 = vmatpush2.msra.mxu0 0.0
      %3780 = vmatprep.subr.mxu0 0.0
      %3781 = vmatpush2.msra.mxu0 0.0
      %3782 = vmatprep.subr.mxu0 0.0
      %3783 = vmatpush2.msra.mxu0 0.0
      %3784 = vmatprep.subr.mxu0 0.0
      %3785 = vmatpush2.msra.mxu0 0.0
      %3786 = vmatprep.subr.mxu0 0.0
      %3787 = vmatpush2.msra.mxu0 0.0
      %3788 = vmatprep.subr.mxu0 0.0
      %3789 = vmatpush2.msra.mxu0 0.0
      %3790 = vmatprep.subr.mxu0 0.0
      %3791 = vmatpush2.msra.mxu0 0.0
      %3792 = vmatprep.subr.mxu0 0.0
      %3793 = vmatpush2.msra.mxu0 0.0
      %3794 = vmatprep.subr.mxu0 0.0
      %3795 = vmatpush2.msra.mxu0 0.0
      %3796 = vmatprep.subr.mxu0 0.0
      %3797 = vmatpush2.msra.mxu0 0.0
      %3798 = vmatprep.mubr.f32.mxu0 0.0
      %3799 = vmatmul.mubr.f32.gmra.mxu0 %v3709
      %v3800 = vpop.f32.mrf.mxu0
      %v3801 = vadd.f32 0.0, %v3800
      %v3802 = vpop.f32.mrf.mxu0
      %3803 = vmatprep.mubr.f32.mxu0 0.0
      %3804 = vmatmul.mubr.f32.gmra.mxu0 %v3710
      %v3805 = vpop.f32.mrf.mxu0
      %v3806 = vadd.f32 0.0, %v3805
      %v3807 = vpop.f32.mrf.mxu0
      %3808 = vmatprep.mubr.f32.mxu0 0.0
      %3809 = vmatmul.mubr.f32.gmra.mxu0 %v3711
      %v3810 = vpop.f32.mrf.mxu0
      %v3811 = vadd.f32 0.0, %v3810
      %v3812 = vpop.f32.mrf.mxu0
      %3813 = vmatprep.mubr.f32.mxu0 0.0
      %3814 = vmatmul.mubr.f32.gmra.mxu0 %v3712
      %v3815 = vpop.f32.mrf.mxu0
      %v3816 = vadd.f32 0.0, %v3815
      %v3817 = vpop.f32.mrf.mxu0
      %3818 = vmatprep.mubr.f32.mxu0 0.0
      %3819 = vmatmul.mubr.f32.gmra.mxu0 %v3713
      %v3820 = vpop.f32.mrf.mxu0
      %v3821 = vadd.f32 0.0, %v3820
      %v3822 = vpop.f32.mrf.mxu0
      %3823 = vmatprep.mubr.f32.mxu0 0.0
      %3824 = vmatmul.mubr.f32.gmra.mxu0 %v3714
      %v3825 = vpop.f32.mrf.mxu0
      %v3826 = vadd.f32 0.0, %v3825
      %v3827 = vpop.f32.mrf.mxu0
      %3828 = vmatprep.mubr.f32.mxu0 0.0
      %3829 = vmatmul.mubr.f32.gmra.mxu0 %v3715
      %v3830 = vpop.f32.mrf.mxu0
      %v3831 = vadd.f32 0.0, %v3830
      %v3832 = vpop.f32.mrf.mxu0
      %3833 = vmatprep.mubr.f32.mxu0 0.0
      %3834 = vmatmul.mubr.f32.gmra.mxu0 %v3716
      %v3835 = vpop.f32.mrf.mxu0
      %v3836 = vadd.f32 0.0, %v3835
      %v3837 = vpop.f32.mrf.mxu0
      %3838 = vdwg.mxu0
      %v3839 = vadd.f32 %v3701, %v3801
      %v3840 = vadd.f32 %v3702, %v3806
      %v3841 = vadd.f32 %v3703, %v3811
      %v3842 = vadd.f32 %v3704, %v3816
      %v3843 = vadd.f32 %v3705, %v3821
      %v3844 = vadd.f32 %v3706, %v3826
      %v3845 = vadd.f32 %v3707, %v3831
      %v3846 = vadd.f32 %v3708, %v3836
      %v3847 = vld [vmem:[%s575 + $0x4] sm:$0xff]
      %v3848 = vld [vmem:[%s575 + $0x14] sm:$0xff]
      %v3849 = vld [vmem:[%s575 + $0x24] sm:$0xff]
      %v3850 = vld [vmem:[%s575 + $0x34] sm:$0xff]
      %v3851 = vld [vmem:[%s575 + $0x44] sm:$0xff]
      %v3852 = vld [vmem:[%s575 + $0x54] sm:$0xff]
      %v3853 = vld [vmem:[%s575 + $0x64] sm:$0xff]
      %v3854 = vld [vmem:[%s575 + $0x74] sm:$0xff]
      %s3855 = scalar_lea.vmem %s3, 2432
      %v3856 = vld [vmem:[%s3855] sm:$0xff]
      %v3857 = vld [vmem:[%s3855 + $0x8] sm:$0xff]
      %v3858 = vld [vmem:[%s3855 + $0x10] sm:$0xff]
      %v3859 = vld [vmem:[%s3855 + $0x18] sm:$0xff]
      %v3860 = vld [vmem:[%s3855 + $0x20] sm:$0xff]
      %v3861 = vld [vmem:[%s3855 + $0x28] sm:$0xff]
      %v3862 = vld [vmem:[%s3855 + $0x30] sm:$0xff]
      %v3863 = vld [vmem:[%s3855 + $0x38] sm:$0xff]
      %v3864 = vld [vmem:[%s3855 + $0x40] sm:$0xff]
      %v3865 = vld [vmem:[%s3855 + $0x48] sm:$0xff]
      %v3866 = vld [vmem:[%s3855 + $0x50] sm:$0xff]
      %v3867 = vld [vmem:[%s3855 + $0x58] sm:$0xff]
      %v3868 = vld [vmem:[%s3855 + $0x60] sm:$0xff]
      %v3869 = vld [vmem:[%s3855 + $0x68] sm:$0xff]
      %v3870 = vld [vmem:[%s3855 + $0x70] sm:$0xff]
      %v3871 = vld [vmem:[%s3855 + $0x78] sm:$0xff]
      %3872 = vmatprep.subr.mxu0 0.0
      %3873 = vmatpush1.msra.mxu0 %v3871
      %3874 = vmatprep.subr.mxu0 0.0
      %3875 = vmatpush1.msra.mxu0 %v3870
      %3876 = vmatprep.subr.mxu0 0.0
      %3877 = vmatpush1.msra.mxu0 %v3869
      %3878 = vmatprep.subr.mxu0 0.0
      %3879 = vmatpush1.msra.mxu0 %v3868
      %3880 = vmatprep.subr.mxu0 0.0
      %3881 = vmatpush1.msra.mxu0 %v3867
      %3882 = vmatprep.subr.mxu0 0.0
      %3883 = vmatpush1.msra.mxu0 %v3866
      %3884 = vmatprep.subr.mxu0 0.0
      %3885 = vmatpush1.msra.mxu0 %v3865
      %3886 = vmatprep.subr.mxu0 0.0
      %3887 = vmatpush1.msra.mxu0 %v3864
      %3888 = vmatprep.subr.mxu0 0.0
      %3889 = vmatpush1.msra.mxu0 %v3863
      %3890 = vmatprep.subr.mxu0 0.0
      %3891 = vmatpush1.msra.mxu0 %v3862
      %3892 = vmatprep.subr.mxu0 0.0
      %3893 = vmatpush1.msra.mxu0 %v3861
      %3894 = vmatprep.subr.mxu0 0.0
      %3895 = vmatpush1.msra.mxu0 %v3860
      %3896 = vmatprep.subr.mxu0 0.0
      %3897 = vmatpush1.msra.mxu0 %v3859
      %3898 = vmatprep.subr.mxu0 0.0
      %3899 = vmatpush1.msra.mxu0 %v3858
      %3900 = vmatprep.subr.mxu0 0.0
      %3901 = vmatpush1.msra.mxu0 %v3857
      %3902 = vmatprep.subr.mxu0 0.0
      %3903 = vmatpush1.msra.mxu0 %v3856
      %3904 = vmatprep.subr.mxu0 0.0
      %3905 = vmatpush2.msra.mxu0 0.0
      %3906 = vmatprep.subr.mxu0 0.0
      %3907 = vmatpush2.msra.mxu0 0.0
      %3908 = vmatprep.subr.mxu0 0.0
      %3909 = vmatpush2.msra.mxu0 0.0
      %3910 = vmatprep.subr.mxu0 0.0
      %3911 = vmatpush2.msra.mxu0 0.0
      %3912 = vmatprep.subr.mxu0 0.0
      %3913 = vmatpush2.msra.mxu0 0.0
      %3914 = vmatprep.subr.mxu0 0.0
      %3915 = vmatpush2.msra.mxu0 0.0
      %3916 = vmatprep.subr.mxu0 0.0
      %3917 = vmatpush2.msra.mxu0 0.0
      %3918 = vmatprep.subr.mxu0 0.0
      %3919 = vmatpush2.msra.mxu0 0.0
      %3920 = vmatprep.subr.mxu0 0.0
      %3921 = vmatpush2.msra.mxu0 0.0
      %3922 = vmatprep.subr.mxu0 0.0
      %3923 = vmatpush2.msra.mxu0 0.0
      %3924 = vmatprep.subr.mxu0 0.0
      %3925 = vmatpush2.msra.mxu0 0.0
      %3926 = vmatprep.subr.mxu0 0.0
      %3927 = vmatpush2.msra.mxu0 0.0
      %3928 = vmatprep.subr.mxu0 0.0
      %3929 = vmatpush2.msra.mxu0 0.0
      %3930 = vmatprep.subr.mxu0 0.0
      %3931 = vmatpush2.msra.mxu0 0.0
      %3932 = vmatprep.subr.mxu0 0.0
      %3933 = vmatpush2.msra.mxu0 0.0
      %3934 = vmatprep.subr.mxu0 0.0
      %3935 = vmatpush2.msra.mxu0 0.0
      %3936 = vmatprep.mubr.f32.mxu0 0.0
      %3937 = vmatmul.mubr.f32.gmra.mxu0 %v3847
      %v3938 = vpop.f32.mrf.mxu0
      %v3939 = vadd.f32 0.0, %v3938
      %v3940 = vpop.f32.mrf.mxu0
      %3941 = vmatprep.mubr.f32.mxu0 0.0
      %3942 = vmatmul.mubr.f32.gmra.mxu0 %v3848
      %v3943 = vpop.f32.mrf.mxu0
      %v3944 = vadd.f32 0.0, %v3943
      %v3945 = vpop.f32.mrf.mxu0
      %3946 = vmatprep.mubr.f32.mxu0 0.0
      %3947 = vmatmul.mubr.f32.gmra.mxu0 %v3849
      %v3948 = vpop.f32.mrf.mxu0
      %v3949 = vadd.f32 0.0, %v3948
      %v3950 = vpop.f32.mrf.mxu0
      %3951 = vmatprep.mubr.f32.mxu0 0.0
      %3952 = vmatmul.mubr.f32.gmra.mxu0 %v3850
      %v3953 = vpop.f32.mrf.mxu0
      %v3954 = vadd.f32 0.0, %v3953
      %v3955 = vpop.f32.mrf.mxu0
      %3956 = vmatprep.mubr.f32.mxu0 0.0
      %3957 = vmatmul.mubr.f32.gmra.mxu0 %v3851
      %v3958 = vpop.f32.mrf.mxu0
      %v3959 = vadd.f32 0.0, %v3958
      %v3960 = vpop.f32.mrf.mxu0
      %3961 = vmatprep.mubr.f32.mxu0 0.0
      %3962 = vmatmul.mubr.f32.gmra.mxu0 %v3852
      %v3963 = vpop.f32.mrf.mxu0
      %v3964 = vadd.f32 0.0, %v3963
      %v3965 = vpop.f32.mrf.mxu0
      %3966 = vmatprep.mubr.f32.mxu0 0.0
      %3967 = vmatmul.mubr.f32.gmra.mxu0 %v3853
      %v3968 = vpop.f32.mrf.mxu0
      %v3969 = vadd.f32 0.0, %v3968
      %v3970 = vpop.f32.mrf.mxu0
      %3971 = vmatprep.mubr.f32.mxu0 0.0
      %3972 = vmatmul.mubr.f32.gmra.mxu0 %v3854
      %v3973 = vpop.f32.mrf.mxu0
      %v3974 = vadd.f32 0.0, %v3973
      %v3975 = vpop.f32.mrf.mxu0
      %3976 = vdwg.mxu0
      %v3977 = vadd.f32 %v3839, %v3939
      %v3978 = vadd.f32 %v3840, %v3944
      %v3979 = vadd.f32 %v3841, %v3949
      %v3980 = vadd.f32 %v3842, %v3954
      %v3981 = vadd.f32 %v3843, %v3959
      %v3982 = vadd.f32 %v3844, %v3964
      %v3983 = vadd.f32 %v3845, %v3969
      %v3984 = vadd.f32 %v3846, %v3974
      %v3985 = vld [vmem:[%s658] sm:$0xff]
      %v3986 = vld [vmem:[%s658 + $0x10] sm:$0xff]
      %v3987 = vld [vmem:[%s658 + $0x20] sm:$0xff]
      %v3988 = vld [vmem:[%s658 + $0x30] sm:$0xff]
      %v3989 = vld [vmem:[%s658 + $0x40] sm:$0xff]
      %v3990 = vld [vmem:[%s658 + $0x50] sm:$0xff]
      %v3991 = vld [vmem:[%s658 + $0x60] sm:$0xff]
      %v3992 = vld [vmem:[%s658 + $0x70] sm:$0xff]
      %s3993 = scalar_lea.vmem %s3, 2560
      %v3994 = vld [vmem:[%s3993] sm:$0xff]
      %v3995 = vld [vmem:[%s3993 + $0x8] sm:$0xff]
      %v3996 = vld [vmem:[%s3993 + $0x10] sm:$0xff]
      %v3997 = vld [vmem:[%s3993 + $0x18] sm:$0xff]
      %v3998 = vld [vmem:[%s3993 + $0x20] sm:$0xff]
      %v3999 = vld [vmem:[%s3993 + $0x28] sm:$0xff]
      %v4000 = vld [vmem:[%s3993 + $0x30] sm:$0xff]
      %v4001 = vld [vmem:[%s3993 + $0x38] sm:$0xff]
      %v4002 = vld [vmem:[%s3993 + $0x40] sm:$0xff]
      %v4003 = vld [vmem:[%s3993 + $0x48] sm:$0xff]
      %v4004 = vld [vmem:[%s3993 + $0x50] sm:$0xff]
      %v4005 = vld [vmem:[%s3993 + $0x58] sm:$0xff]
      %v4006 = vld [vmem:[%s3993 + $0x60] sm:$0xff]
      %v4007 = vld [vmem:[%s3993 + $0x68] sm:$0xff]
      %v4008 = vld [vmem:[%s3993 + $0x70] sm:$0xff]
      %v4009 = vld [vmem:[%s3993 + $0x78] sm:$0xff]
      %4010 = vmatprep.subr.mxu0 0.0
      %4011 = vmatpush1.msra.mxu0 %v4009
      %4012 = vmatprep.subr.mxu0 0.0
      %4013 = vmatpush1.msra.mxu0 %v4008
      %4014 = vmatprep.subr.mxu0 0.0
      %4015 = vmatpush1.msra.mxu0 %v4007
      %4016 = vmatprep.subr.mxu0 0.0
      %4017 = vmatpush1.msra.mxu0 %v4006
      %4018 = vmatprep.subr.mxu0 0.0
      %4019 = vmatpush1.msra.mxu0 %v4005
      %4020 = vmatprep.subr.mxu0 0.0
      %4021 = vmatpush1.msra.mxu0 %v4004
      %4022 = vmatprep.subr.mxu0 0.0
      %4023 = vmatpush1.msra.mxu0 %v4003
      %4024 = vmatprep.subr.mxu0 0.0
      %4025 = vmatpush1.msra.mxu0 %v4002
      %4026 = vmatprep.subr.mxu0 0.0
      %4027 = vmatpush1.msra.mxu0 %v4001
      %4028 = vmatprep.subr.mxu0 0.0
      %4029 = vmatpush1.msra.mxu0 %v4000
      %4030 = vmatprep.subr.mxu0 0.0
      %4031 = vmatpush1.msra.mxu0 %v3999
      %4032 = vmatprep.subr.mxu0 0.0
      %4033 = vmatpush1.msra.mxu0 %v3998
      %4034 = vmatprep.subr.mxu0 0.0
      %4035 = vmatpush1.msra.mxu0 %v3997
      %4036 = vmatprep.subr.mxu0 0.0
      %4037 = vmatpush1.msra.mxu0 %v3996
      %4038 = vmatprep.subr.mxu0 0.0
      %4039 = vmatpush1.msra.mxu0 %v3995
      %4040 = vmatprep.subr.mxu0 0.0
      %4041 = vmatpush1.msra.mxu0 %v3994
      %4042 = vmatprep.subr.mxu0 0.0
      %4043 = vmatpush2.msra.mxu0 0.0
      %4044 = vmatprep.subr.mxu0 0.0
      %4045 = vmatpush2.msra.mxu0 0.0
      %4046 = vmatprep.subr.mxu0 0.0
      %4047 = vmatpush2.msra.mxu0 0.0
      %4048 = vmatprep.subr.mxu0 0.0
      %4049 = vmatpush2.msra.mxu0 0.0
      %4050 = vmatprep.subr.mxu0 0.0
      %4051 = vmatpush2.msra.mxu0 0.0
      %4052 = vmatprep.subr.mxu0 0.0
      %4053 = vmatpush2.msra.mxu0 0.0
      %4054 = vmatprep.subr.mxu0 0.0
      %4055 = vmatpush2.msra.mxu0 0.0
      %4056 = vmatprep.subr.mxu0 0.0
      %4057 = vmatpush2.msra.mxu0 0.0
      %4058 = vmatprep.subr.mxu0 0.0
      %4059 = vmatpush2.msra.mxu0 0.0
      %4060 = vmatprep.subr.mxu0 0.0
      %4061 = vmatpush2.msra.mxu0 0.0
      %4062 = vmatprep.subr.mxu0 0.0
      %4063 = vmatpush2.msra.mxu0 0.0
      %4064 = vmatprep.subr.mxu0 0.0
      %4065 = vmatpush2.msra.mxu0 0.0
      %4066 = vmatprep.subr.mxu0 0.0
      %4067 = vmatpush2.msra.mxu0 0.0
      %4068 = vmatprep.subr.mxu0 0.0
      %4069 = vmatpush2.msra.mxu0 0.0
      %4070 = vmatprep.subr.mxu0 0.0
      %4071 = vmatpush2.msra.mxu0 0.0
      %4072 = vmatprep.subr.mxu0 0.0
      %4073 = vmatpush2.msra.mxu0 0.0
      %4074 = vmatprep.mubr.f32.mxu0 0.0
      %4075 = vmatmul.mubr.f32.gmra.mxu0 %v3985
      %v4076 = vpop.f32.mrf.mxu0
      %v4077 = vadd.f32 0.0, %v4076
      %v4078 = vpop.f32.mrf.mxu0
      %4079 = vmatprep.mubr.f32.mxu0 0.0
      %4080 = vmatmul.mubr.f32.gmra.mxu0 %v3986
      %v4081 = vpop.f32.mrf.mxu0
      %v4082 = vadd.f32 0.0, %v4081
      %v4083 = vpop.f32.mrf.mxu0
      %4084 = vmatprep.mubr.f32.mxu0 0.0
      %4085 = vmatmul.mubr.f32.gmra.mxu0 %v3987
      %v4086 = vpop.f32.mrf.mxu0
      %v4087 = vadd.f32 0.0, %v4086
      %v4088 = vpop.f32.mrf.mxu0
      %4089 = vmatprep.mubr.f32.mxu0 0.0
      %4090 = vmatmul.mubr.f32.gmra.mxu0 %v3988
      %v4091 = vpop.f32.mrf.mxu0
      %v4092 = vadd.f32 0.0, %v4091
      %v4093 = vpop.f32.mrf.mxu0
      %4094 = vmatprep.mubr.f32.mxu0 0.0
      %4095 = vmatmul.mubr.f32.gmra.mxu0 %v3989
      %v4096 = vpop.f32.mrf.mxu0
      %v4097 = vadd.f32 0.0, %v4096
      %v4098 = vpop.f32.mrf.mxu0
      %4099 = vmatprep.mubr.f32.mxu0 0.0
      %4100 = vmatmul.mubr.f32.gmra.mxu0 %v3990
      %v4101 = vpop.f32.mrf.mxu0
      %v4102 = vadd.f32 0.0, %v4101
      %v4103 = vpop.f32.mrf.mxu0
      %4104 = vmatprep.mubr.f32.mxu0 0.0
      %4105 = vmatmul.mubr.f32.gmra.mxu0 %v3991
      %v4106 = vpop.f32.mrf.mxu0
      %v4107 = vadd.f32 0.0, %v4106
      %v4108 = vpop.f32.mrf.mxu0
      %4109 = vmatprep.mubr.f32.mxu0 0.0
      %4110 = vmatmul.mubr.f32.gmra.mxu0 %v3992
      %v4111 = vpop.f32.mrf.mxu0
      %v4112 = vadd.f32 0.0, %v4111
      %v4113 = vpop.f32.mrf.mxu0
      %4114 = vdwg.mxu0
      %v4115 = vadd.f32 %v3977, %v4077
      %v4116 = vadd.f32 %v3978, %v4082
      %v4117 = vadd.f32 %v3979, %v4087
      %v4118 = vadd.f32 %v3980, %v4092
      %v4119 = vadd.f32 %v3981, %v4097
      %v4120 = vadd.f32 %v3982, %v4102
      %v4121 = vadd.f32 %v3983, %v4107
      %v4122 = vadd.f32 %v3984, %v4112
      %v4123 = vld [vmem:[%s658 + $0x1] sm:$0xff]
      %v4124 = vld [vmem:[%s658 + $0x11] sm:$0xff]
      %v4125 = vld [vmem:[%s658 + $0x21] sm:$0xff]
      %v4126 = vld [vmem:[%s658 + $0x31] sm:$0xff]
      %v4127 = vld [vmem:[%s658 + $0x41] sm:$0xff]
      %v4128 = vld [vmem:[%s658 + $0x51] sm:$0xff]
      %v4129 = vld [vmem:[%s658 + $0x61] sm:$0xff]
      %v4130 = vld [vmem:[%s658 + $0x71] sm:$0xff]
      %s4131 = scalar_lea.vmem %s3, 2688
      %v4132 = vld [vmem:[%s4131] sm:$0xff]
      %v4133 = vld [vmem:[%s4131 + $0x8] sm:$0xff]
      %v4134 = vld [vmem:[%s4131 + $0x10] sm:$0xff]
      %v4135 = vld [vmem:[%s4131 + $0x18] sm:$0xff]
      %v4136 = vld [vmem:[%s4131 + $0x20] sm:$0xff]
      %v4137 = vld [vmem:[%s4131 + $0x28] sm:$0xff]
      %v4138 = vld [vmem:[%s4131 + $0x30] sm:$0xff]
      %v4139 = vld [vmem:[%s4131 + $0x38] sm:$0xff]
      %v4140 = vld [vmem:[%s4131 + $0x40] sm:$0xff]
      %v4141 = vld [vmem:[%s4131 + $0x48] sm:$0xff]
      %v4142 = vld [vmem:[%s4131 + $0x50] sm:$0xff]
      %v4143 = vld [vmem:[%s4131 + $0x58] sm:$0xff]
      %v4144 = vld [vmem:[%s4131 + $0x60] sm:$0xff]
      %v4145 = vld [vmem:[%s4131 + $0x68] sm:$0xff]
      %v4146 = vld [vmem:[%s4131 + $0x70] sm:$0xff]
      %v4147 = vld [vmem:[%s4131 + $0x78] sm:$0xff]
      %4148 = vmatprep.subr.mxu0 0.0
      %4149 = vmatpush1.msra.mxu0 %v4147
      %4150 = vmatprep.subr.mxu0 0.0
      %4151 = vmatpush1.msra.mxu0 %v4146
      %4152 = vmatprep.subr.mxu0 0.0
      %4153 = vmatpush1.msra.mxu0 %v4145
      %4154 = vmatprep.subr.mxu0 0.0
      %4155 = vmatpush1.msra.mxu0 %v4144
      %4156 = vmatprep.subr.mxu0 0.0
      %4157 = vmatpush1.msra.mxu0 %v4143
      %4158 = vmatprep.subr.mxu0 0.0
      %4159 = vmatpush1.msra.mxu0 %v4142
      %4160 = vmatprep.subr.mxu0 0.0
      %4161 = vmatpush1.msra.mxu0 %v4141
      %4162 = vmatprep.subr.mxu0 0.0
      %4163 = vmatpush1.msra.mxu0 %v4140
      %4164 = vmatprep.subr.mxu0 0.0
      %4165 = vmatpush1.msra.mxu0 %v4139
      %4166 = vmatprep.subr.mxu0 0.0
      %4167 = vmatpush1.msra.mxu0 %v4138
      %4168 = vmatprep.subr.mxu0 0.0
      %4169 = vmatpush1.msra.mxu0 %v4137
      %4170 = vmatprep.subr.mxu0 0.0
      %4171 = vmatpush1.msra.mxu0 %v4136
      %4172 = vmatprep.subr.mxu0 0.0
      %4173 = vmatpush1.msra.mxu0 %v4135
      %4174 = vmatprep.subr.mxu0 0.0
      %4175 = vmatpush1.msra.mxu0 %v4134
      %4176 = vmatprep.subr.mxu0 0.0
      %4177 = vmatpush1.msra.mxu0 %v4133
      %4178 = vmatprep.subr.mxu0 0.0
      %4179 = vmatpush1.msra.mxu0 %v4132
      %4180 = vmatprep.subr.mxu0 0.0
      %4181 = vmatpush2.msra.mxu0 0.0
      %4182 = vmatprep.subr.mxu0 0.0
      %4183 = vmatpush2.msra.mxu0 0.0
      %4184 = vmatprep.subr.mxu0 0.0
      %4185 = vmatpush2.msra.mxu0 0.0
      %4186 = vmatprep.subr.mxu0 0.0
      %4187 = vmatpush2.msra.mxu0 0.0
      %4188 = vmatprep.subr.mxu0 0.0
      %4189 = vmatpush2.msra.mxu0 0.0
      %4190 = vmatprep.subr.mxu0 0.0
      %4191 = vmatpush2.msra.mxu0 0.0
      %4192 = vmatprep.subr.mxu0 0.0
      %4193 = vmatpush2.msra.mxu0 0.0
      %4194 = vmatprep.subr.mxu0 0.0
      %4195 = vmatpush2.msra.mxu0 0.0
      %4196 = vmatprep.subr.mxu0 0.0
      %4197 = vmatpush2.msra.mxu0 0.0
      %4198 = vmatprep.subr.mxu0 0.0
      %4199 = vmatpush2.msra.mxu0 0.0
      %4200 = vmatprep.subr.mxu0 0.0
      %4201 = vmatpush2.msra.mxu0 0.0
      %4202 = vmatprep.subr.mxu0 0.0
      %4203 = vmatpush2.msra.mxu0 0.0
      %4204 = vmatprep.subr.mxu0 0.0
      %4205 = vmatpush2.msra.mxu0 0.0
      %4206 = vmatprep.subr.mxu0 0.0
      %4207 = vmatpush2.msra.mxu0 0.0
      %4208 = vmatprep.subr.mxu0 0.0
      %4209 = vmatpush2.msra.mxu0 0.0
      %4210 = vmatprep.subr.mxu0 0.0
      %4211 = vmatpush2.msra.mxu0 0.0
      %4212 = vmatprep.mubr.f32.mxu0 0.0
      %4213 = vmatmul.mubr.f32.gmra.mxu0 %v4123
      %v4214 = vpop.f32.mrf.mxu0
      %v4215 = vadd.f32 0.0, %v4214
      %v4216 = vpop.f32.mrf.mxu0
      %4217 = vmatprep.mubr.f32.mxu0 0.0
      %4218 = vmatmul.mubr.f32.gmra.mxu0 %v4124
      %v4219 = vpop.f32.mrf.mxu0
      %v4220 = vadd.f32 0.0, %v4219
      %v4221 = vpop.f32.mrf.mxu0
      %4222 = vmatprep.mubr.f32.mxu0 0.0
      %4223 = vmatmul.mubr.f32.gmra.mxu0 %v4125
      %v4224 = vpop.f32.mrf.mxu0
      %v4225 = vadd.f32 0.0, %v4224
      %v4226 = vpop.f32.mrf.mxu0
      %4227 = vmatprep.mubr.f32.mxu0 0.0
      %4228 = vmatmul.mubr.f32.gmra.mxu0 %v4126
      %v4229 = vpop.f32.mrf.mxu0
      %v4230 = vadd.f32 0.0, %v4229
      %v4231 = vpop.f32.mrf.mxu0
      %4232 = vmatprep.mubr.f32.mxu0 0.0
      %4233 = vmatmul.mubr.f32.gmra.mxu0 %v4127
      %v4234 = vpop.f32.mrf.mxu0
      %v4235 = vadd.f32 0.0, %v4234
      %v4236 = vpop.f32.mrf.mxu0
      %4237 = vmatprep.mubr.f32.mxu0 0.0
      %4238 = vmatmul.mubr.f32.gmra.mxu0 %v4128
      %v4239 = vpop.f32.mrf.mxu0
      %v4240 = vadd.f32 0.0, %v4239
      %v4241 = vpop.f32.mrf.mxu0
      %4242 = vmatprep.mubr.f32.mxu0 0.0
      %4243 = vmatmul.mubr.f32.gmra.mxu0 %v4129
      %v4244 = vpop.f32.mrf.mxu0
      %v4245 = vadd.f32 0.0, %v4244
      %v4246 = vpop.f32.mrf.mxu0
      %4247 = vmatprep.mubr.f32.mxu0 0.0
      %4248 = vmatmul.mubr.f32.gmra.mxu0 %v4130
      %v4249 = vpop.f32.mrf.mxu0
      %v4250 = vadd.f32 0.0, %v4249
      %v4251 = vpop.f32.mrf.mxu0
      %4252 = vdwg.mxu0
      %v4253 = vadd.f32 %v4115, %v4215
      %v4254 = vadd.f32 %v4116, %v4220
      %v4255 = vadd.f32 %v4117, %v4225
      %v4256 = vadd.f32 %v4118, %v4230
      %v4257 = vadd.f32 %v4119, %v4235
      %v4258 = vadd.f32 %v4120, %v4240
      %v4259 = vadd.f32 %v4121, %v4245
      %v4260 = vadd.f32 %v4122, %v4250
      %v4261 = vld [vmem:[%s658 + $0x2] sm:$0xff]
      %v4262 = vld [vmem:[%s658 + $0x12] sm:$0xff]
      %v4263 = vld [vmem:[%s658 + $0x22] sm:$0xff]
      %v4264 = vld [vmem:[%s658 + $0x32] sm:$0xff]
      %v4265 = vld [vmem:[%s658 + $0x42] sm:$0xff]
      %v4266 = vld [vmem:[%s658 + $0x52] sm:$0xff]
      %v4267 = vld [vmem:[%s658 + $0x62] sm:$0xff]
      %v4268 = vld [vmem:[%s658 + $0x72] sm:$0xff]
      %s4269 = scalar_lea.vmem %s3, 2816
      %v4270 = vld [vmem:[%s4269] sm:$0xff]
      %v4271 = vld [vmem:[%s4269 + $0x8] sm:$0xff]
      %v4272 = vld [vmem:[%s4269 + $0x10] sm:$0xff]
      %v4273 = vld [vmem:[%s4269 + $0x18] sm:$0xff]
      %v4274 = vld [vmem:[%s4269 + $0x20] sm:$0xff]
      %v4275 = vld [vmem:[%s4269 + $0x28] sm:$0xff]
      %v4276 = vld [vmem:[%s4269 + $0x30] sm:$0xff]
      %v4277 = vld [vmem:[%s4269 + $0x38] sm:$0xff]
      %v4278 = vld [vmem:[%s4269 + $0x40] sm:$0xff]
      %v4279 = vld [vmem:[%s4269 + $0x48] sm:$0xff]
      %v4280 = vld [vmem:[%s4269 + $0x50] sm:$0xff]
      %v4281 = vld [vmem:[%s4269 + $0x58] sm:$0xff]
      %v4282 = vld [vmem:[%s4269 + $0x60] sm:$0xff]
      %v4283 = vld [vmem:[%s4269 + $0x68] sm:$0xff]
      %v4284 = vld [vmem:[%s4269 + $0x70] sm:$0xff]
      %v4285 = vld [vmem:[%s4269 + $0x78] sm:$0xff]
      %4286 = vmatprep.subr.mxu0 0.0
      %4287 = vmatpush1.msra.mxu0 %v4285
      %4288 = vmatprep.subr.mxu0 0.0
      %4289 = vmatpush1.msra.mxu0 %v4284
      %4290 = vmatprep.subr.mxu0 0.0
      %4291 = vmatpush1.msra.mxu0 %v4283
      %4292 = vmatprep.subr.mxu0 0.0
      %4293 = vmatpush1.msra.mxu0 %v4282
      %4294 = vmatprep.subr.mxu0 0.0
      %4295 = vmatpush1.msra.mxu0 %v4281
      %4296 = vmatprep.subr.mxu0 0.0
      %4297 = vmatpush1.msra.mxu0 %v4280
      %4298 = vmatprep.subr.mxu0 0.0
      %4299 = vmatpush1.msra.mxu0 %v4279
      %4300 = vmatprep.subr.mxu0 0.0
      %4301 = vmatpush1.msra.mxu0 %v4278
      %4302 = vmatprep.subr.mxu0 0.0
      %4303 = vmatpush1.msra.mxu0 %v4277
      %4304 = vmatprep.subr.mxu0 0.0
      %4305 = vmatpush1.msra.mxu0 %v4276
      %4306 = vmatprep.subr.mxu0 0.0
      %4307 = vmatpush1.msra.mxu0 %v4275
      %4308 = vmatprep.subr.mxu0 0.0
      %4309 = vmatpush1.msra.mxu0 %v4274
      %4310 = vmatprep.subr.mxu0 0.0
      %4311 = vmatpush1.msra.mxu0 %v4273
      %4312 = vmatprep.subr.mxu0 0.0
      %4313 = vmatpush1.msra.mxu0 %v4272
      %4314 = vmatprep.subr.mxu0 0.0
      %4315 = vmatpush1.msra.mxu0 %v4271
      %4316 = vmatprep.subr.mxu0 0.0
      %4317 = vmatpush1.msra.mxu0 %v4270
      %4318 = vmatprep.subr.mxu0 0.0
      %4319 = vmatpush2.msra.mxu0 0.0
      %4320 = vmatprep.subr.mxu0 0.0
      %4321 = vmatpush2.msra.mxu0 0.0
      %4322 = vmatprep.subr.mxu0 0.0
      %4323 = vmatpush2.msra.mxu0 0.0
      %4324 = vmatprep.subr.mxu0 0.0
      %4325 = vmatpush2.msra.mxu0 0.0
      %4326 = vmatprep.subr.mxu0 0.0
      %4327 = vmatpush2.msra.mxu0 0.0
      %4328 = vmatprep.subr.mxu0 0.0
      %4329 = vmatpush2.msra.mxu0 0.0
      %4330 = vmatprep.subr.mxu0 0.0
      %4331 = vmatpush2.msra.mxu0 0.0
      %4332 = vmatprep.subr.mxu0 0.0
      %4333 = vmatpush2.msra.mxu0 0.0
      %4334 = vmatprep.subr.mxu0 0.0
      %4335 = vmatpush2.msra.mxu0 0.0
      %4336 = vmatprep.subr.mxu0 0.0
      %4337 = vmatpush2.msra.mxu0 0.0
      %4338 = vmatprep.subr.mxu0 0.0
      %4339 = vmatpush2.msra.mxu0 0.0
      %4340 = vmatprep.subr.mxu0 0.0
      %4341 = vmatpush2.msra.mxu0 0.0
      %4342 = vmatprep.subr.mxu0 0.0
      %4343 = vmatpush2.msra.mxu0 0.0
      %4344 = vmatprep.subr.mxu0 0.0
      %4345 = vmatpush2.msra.mxu0 0.0
      %4346 = vmatprep.subr.mxu0 0.0
      %4347 = vmatpush2.msra.mxu0 0.0
      %4348 = vmatprep.subr.mxu0 0.0
      %4349 = vmatpush2.msra.mxu0 0.0
      %4350 = vmatprep.mubr.f32.mxu0 0.0
      %4351 = vmatmul.mubr.f32.gmra.mxu0 %v4261
      %v4352 = vpop.f32.mrf.mxu0
      %v4353 = vadd.f32 0.0, %v4352
      %v4354 = vpop.f32.mrf.mxu0
      %4355 = vmatprep.mubr.f32.mxu0 0.0
      %4356 = vmatmul.mubr.f32.gmra.mxu0 %v4262
      %v4357 = vpop.f32.mrf.mxu0
      %v4358 = vadd.f32 0.0, %v4357
      %v4359 = vpop.f32.mrf.mxu0
      %4360 = vmatprep.mubr.f32.mxu0 0.0
      %4361 = vmatmul.mubr.f32.gmra.mxu0 %v4263
      %v4362 = vpop.f32.mrf.mxu0
      %v4363 = vadd.f32 0.0, %v4362
      %v4364 = vpop.f32.mrf.mxu0
      %4365 = vmatprep.mubr.f32.mxu0 0.0
      %4366 = vmatmul.mubr.f32.gmra.mxu0 %v4264
      %v4367 = vpop.f32.mrf.mxu0
      %v4368 = vadd.f32 0.0, %v4367
      %v4369 = vpop.f32.mrf.mxu0
      %4370 = vmatprep.mubr.f32.mxu0 0.0
      %4371 = vmatmul.mubr.f32.gmra.mxu0 %v4265
      %v4372 = vpop.f32.mrf.mxu0
      %v4373 = vadd.f32 0.0, %v4372
      %v4374 = vpop.f32.mrf.mxu0
      %4375 = vmatprep.mubr.f32.mxu0 0.0
      %4376 = vmatmul.mubr.f32.gmra.mxu0 %v4266
      %v4377 = vpop.f32.mrf.mxu0
      %v4378 = vadd.f32 0.0, %v4377
      %v4379 = vpop.f32.mrf.mxu0
      %4380 = vmatprep.mubr.f32.mxu0 0.0
      %4381 = vmatmul.mubr.f32.gmra.mxu0 %v4267
      %v4382 = vpop.f32.mrf.mxu0
      %v4383 = vadd.f32 0.0, %v4382
      %v4384 = vpop.f32.mrf.mxu0
      %4385 = vmatprep.mubr.f32.mxu0 0.0
      %4386 = vmatmul.mubr.f32.gmra.mxu0 %v4268
      %v4387 = vpop.f32.mrf.mxu0
      %v4388 = vadd.f32 0.0, %v4387
      %v4389 = vpop.f32.mrf.mxu0
      %4390 = vdwg.mxu0
      %v4391 = vadd.f32 %v4253, %v4353
      %v4392 = vadd.f32 %v4254, %v4358
      %v4393 = vadd.f32 %v4255, %v4363
      %v4394 = vadd.f32 %v4256, %v4368
      %v4395 = vadd.f32 %v4257, %v4373
      %v4396 = vadd.f32 %v4258, %v4378
      %v4397 = vadd.f32 %v4259, %v4383
      %v4398 = vadd.f32 %v4260, %v4388
      %v4399 = vld [vmem:[%s658 + $0x3] sm:$0xff]
      %v4400 = vld [vmem:[%s658 + $0x13] sm:$0xff]
      %v4401 = vld [vmem:[%s658 + $0x23] sm:$0xff]
      %v4402 = vld [vmem:[%s658 + $0x33] sm:$0xff]
      %v4403 = vld [vmem:[%s658 + $0x43] sm:$0xff]
      %v4404 = vld [vmem:[%s658 + $0x53] sm:$0xff]
      %v4405 = vld [vmem:[%s658 + $0x63] sm:$0xff]
      %v4406 = vld [vmem:[%s658 + $0x73] sm:$0xff]
      %s4407 = scalar_lea.vmem %s3, 2944
      %v4408 = vld [vmem:[%s4407] sm:$0xff]
      %v4409 = vld [vmem:[%s4407 + $0x8] sm:$0xff]
      %v4410 = vld [vmem:[%s4407 + $0x10] sm:$0xff]
      %v4411 = vld [vmem:[%s4407 + $0x18] sm:$0xff]
      %v4412 = vld [vmem:[%s4407 + $0x20] sm:$0xff]
      %v4413 = vld [vmem:[%s4407 + $0x28] sm:$0xff]
      %v4414 = vld [vmem:[%s4407 + $0x30] sm:$0xff]
      %v4415 = vld [vmem:[%s4407 + $0x38] sm:$0xff]
      %v4416 = vld [vmem:[%s4407 + $0x40] sm:$0xff]
      %v4417 = vld [vmem:[%s4407 + $0x48] sm:$0xff]
      %v4418 = vld [vmem:[%s4407 + $0x50] sm:$0xff]
      %v4419 = vld [vmem:[%s4407 + $0x58] sm:$0xff]
      %v4420 = vld [vmem:[%s4407 + $0x60] sm:$0xff]
      %v4421 = vld [vmem:[%s4407 + $0x68] sm:$0xff]
      %v4422 = vld [vmem:[%s4407 + $0x70] sm:$0xff]
      %v4423 = vld [vmem:[%s4407 + $0x78] sm:$0xff]
      %4424 = vmatprep.subr.mxu0 0.0
      %4425 = vmatpush1.msra.mxu0 %v4423
      %4426 = vmatprep.subr.mxu0 0.0
      %4427 = vmatpush1.msra.mxu0 %v4422
      %4428 = vmatprep.subr.mxu0 0.0
      %4429 = vmatpush1.msra.mxu0 %v4421
      %4430 = vmatprep.subr.mxu0 0.0
      %4431 = vmatpush1.msra.mxu0 %v4420
      %4432 = vmatprep.subr.mxu0 0.0
      %4433 = vmatpush1.msra.mxu0 %v4419
      %4434 = vmatprep.subr.mxu0 0.0
      %4435 = vmatpush1.msra.mxu0 %v4418
      %4436 = vmatprep.subr.mxu0 0.0
      %4437 = vmatpush1.msra.mxu0 %v4417
      %4438 = vmatprep.subr.mxu0 0.0
      %4439 = vmatpush1.msra.mxu0 %v4416
      %4440 = vmatprep.subr.mxu0 0.0
      %4441 = vmatpush1.msra.mxu0 %v4415
      %4442 = vmatprep.subr.mxu0 0.0
      %4443 = vmatpush1.msra.mxu0 %v4414
      %4444 = vmatprep.subr.mxu0 0.0
      %4445 = vmatpush1.msra.mxu0 %v4413
      %4446 = vmatprep.subr.mxu0 0.0
      %4447 = vmatpush1.msra.mxu0 %v4412
      %4448 = vmatprep.subr.mxu0 0.0
      %4449 = vmatpush1.msra.mxu0 %v4411
      %4450 = vmatprep.subr.mxu0 0.0
      %4451 = vmatpush1.msra.mxu0 %v4410
      %4452 = vmatprep.subr.mxu0 0.0
      %4453 = vmatpush1.msra.mxu0 %v4409
      %4454 = vmatprep.subr.mxu0 0.0
      %4455 = vmatpush1.msra.mxu0 %v4408
      %4456 = vmatprep.subr.mxu0 0.0
      %4457 = vmatpush2.msra.mxu0 0.0
      %4458 = vmatprep.subr.mxu0 0.0
      %4459 = vmatpush2.msra.mxu0 0.0
      %4460 = vmatprep.subr.mxu0 0.0
      %4461 = vmatpush2.msra.mxu0 0.0
      %4462 = vmatprep.subr.mxu0 0.0
      %4463 = vmatpush2.msra.mxu0 0.0
      %4464 = vmatprep.subr.mxu0 0.0
      %4465 = vmatpush2.msra.mxu0 0.0
      %4466 = vmatprep.subr.mxu0 0.0
      %4467 = vmatpush2.msra.mxu0 0.0
      %4468 = vmatprep.subr.mxu0 0.0
      %4469 = vmatpush2.msra.mxu0 0.0
      %4470 = vmatprep.subr.mxu0 0.0
      %4471 = vmatpush2.msra.mxu0 0.0
      %4472 = vmatprep.subr.mxu0 0.0
      %4473 = vmatpush2.msra.mxu0 0.0
      %4474 = vmatprep.subr.mxu0 0.0
      %4475 = vmatpush2.msra.mxu0 0.0
      %4476 = vmatprep.subr.mxu0 0.0
      %4477 = vmatpush2.msra.mxu0 0.0
      %4478 = vmatprep.subr.mxu0 0.0
      %4479 = vmatpush2.msra.mxu0 0.0
      %4480 = vmatprep.subr.mxu0 0.0
      %4481 = vmatpush2.msra.mxu0 0.0
      %4482 = vmatprep.subr.mxu0 0.0
      %4483 = vmatpush2.msra.mxu0 0.0
      %4484 = vmatprep.subr.mxu0 0.0
      %4485 = vmatpush2.msra.mxu0 0.0
      %4486 = vmatprep.subr.mxu0 0.0
      %4487 = vmatpush2.msra.mxu0 0.0
      %4488 = vmatprep.mubr.f32.mxu0 0.0
      %4489 = vmatmul.mubr.f32.gmra.mxu0 %v4399
      %v4490 = vpop.f32.mrf.mxu0
      %v4491 = vadd.f32 0.0, %v4490
      %v4492 = vpop.f32.mrf.mxu0
      %4493 = vmatprep.mubr.f32.mxu0 0.0
      %4494 = vmatmul.mubr.f32.gmra.mxu0 %v4400
      %v4495 = vpop.f32.mrf.mxu0
      %v4496 = vadd.f32 0.0, %v4495
      %v4497 = vpop.f32.mrf.mxu0
      %4498 = vmatprep.mubr.f32.mxu0 0.0
      %4499 = vmatmul.mubr.f32.gmra.mxu0 %v4401
      %v4500 = vpop.f32.mrf.mxu0
      %v4501 = vadd.f32 0.0, %v4500
      %v4502 = vpop.f32.mrf.mxu0
      %4503 = vmatprep.mubr.f32.mxu0 0.0
      %4504 = vmatmul.mubr.f32.gmra.mxu0 %v4402
      %v4505 = vpop.f32.mrf.mxu0
      %v4506 = vadd.f32 0.0, %v4505
      %v4507 = vpop.f32.mrf.mxu0
      %4508 = vmatprep.mubr.f32.mxu0 0.0
      %4509 = vmatmul.mubr.f32.gmra.mxu0 %v4403
      %v4510 = vpop.f32.mrf.mxu0
      %v4511 = vadd.f32 0.0, %v4510
      %v4512 = vpop.f32.mrf.mxu0
      %4513 = vmatprep.mubr.f32.mxu0 0.0
      %4514 = vmatmul.mubr.f32.gmra.mxu0 %v4404
      %v4515 = vpop.f32.mrf.mxu0
      %v4516 = vadd.f32 0.0, %v4515
      %v4517 = vpop.f32.mrf.mxu0
      %4518 = vmatprep.mubr.f32.mxu0 0.0
      %4519 = vmatmul.mubr.f32.gmra.mxu0 %v4405
      %v4520 = vpop.f32.mrf.mxu0
      %v4521 = vadd.f32 0.0, %v4520
      %v4522 = vpop.f32.mrf.mxu0
      %4523 = vmatprep.mubr.f32.mxu0 0.0
      %4524 = vmatmul.mubr.f32.gmra.mxu0 %v4406
      %v4525 = vpop.f32.mrf.mxu0
      %v4526 = vadd.f32 0.0, %v4525
      %v4527 = vpop.f32.mrf.mxu0
      %4528 = vdwg.mxu0
      %v4529 = vadd.f32 %v4391, %v4491
      %v4530 = vadd.f32 %v4392, %v4496
      %v4531 = vadd.f32 %v4393, %v4501
      %v4532 = vadd.f32 %v4394, %v4506
      %v4533 = vadd.f32 %v4395, %v4511
      %v4534 = vadd.f32 %v4396, %v4516
      %v4535 = vadd.f32 %v4397, %v4521
      %v4536 = vadd.f32 %v4398, %v4526
      %v4537 = vld [vmem:[%s658 + $0x4] sm:$0xff]
      %v4538 = vld [vmem:[%s658 + $0x14] sm:$0xff]
      %v4539 = vld [vmem:[%s658 + $0x24] sm:$0xff]
      %v4540 = vld [vmem:[%s658 + $0x34] sm:$0xff]
      %v4541 = vld [vmem:[%s658 + $0x44] sm:$0xff]
      %v4542 = vld [vmem:[%s658 + $0x54] sm:$0xff]
      %v4543 = vld [vmem:[%s658 + $0x64] sm:$0xff]
      %v4544 = vld [vmem:[%s658 + $0x74] sm:$0xff]
      %s4545 = scalar_lea.vmem %s3, 3072
      %v4546 = vld [vmem:[%s4545] sm:$0xff]
      %v4547 = vld [vmem:[%s4545 + $0x8] sm:$0xff]
      %v4548 = vld [vmem:[%s4545 + $0x10] sm:$0xff]
      %v4549 = vld [vmem:[%s4545 + $0x18] sm:$0xff]
      %v4550 = vld [vmem:[%s4545 + $0x20] sm:$0xff]
      %v4551 = vld [vmem:[%s4545 + $0x28] sm:$0xff]
      %v4552 = vld [vmem:[%s4545 + $0x30] sm:$0xff]
      %v4553 = vld [vmem:[%s4545 + $0x38] sm:$0xff]
      %v4554 = vld [vmem:[%s4545 + $0x40] sm:$0xff]
      %v4555 = vld [vmem:[%s4545 + $0x48] sm:$0xff]
      %v4556 = vld [vmem:[%s4545 + $0x50] sm:$0xff]
      %v4557 = vld [vmem:[%s4545 + $0x58] sm:$0xff]
      %v4558 = vld [vmem:[%s4545 + $0x60] sm:$0xff]
      %v4559 = vld [vmem:[%s4545 + $0x68] sm:$0xff]
      %v4560 = vld [vmem:[%s4545 + $0x70] sm:$0xff]
      %v4561 = vld [vmem:[%s4545 + $0x78] sm:$0xff]
      %4562 = vmatprep.subr.mxu0 0.0
      %4563 = vmatpush1.msra.mxu0 %v4561
      %4564 = vmatprep.subr.mxu0 0.0
      %4565 = vmatpush1.msra.mxu0 %v4560
      %4566 = vmatprep.subr.mxu0 0.0
      %4567 = vmatpush1.msra.mxu0 %v4559
      %4568 = vmatprep.subr.mxu0 0.0
      %4569 = vmatpush1.msra.mxu0 %v4558
      %4570 = vmatprep.subr.mxu0 0.0
      %4571 = vmatpush1.msra.mxu0 %v4557
      %4572 = vmatprep.subr.mxu0 0.0
      %4573 = vmatpush1.msra.mxu0 %v4556
      %4574 = vmatprep.subr.mxu0 0.0
      %4575 = vmatpush1.msra.mxu0 %v4555
      %4576 = vmatprep.subr.mxu0 0.0
      %4577 = vmatpush1.msra.mxu0 %v4554
      %4578 = vmatprep.subr.mxu0 0.0
      %4579 = vmatpush1.msra.mxu0 %v4553
      %4580 = vmatprep.subr.mxu0 0.0
      %4581 = vmatpush1.msra.mxu0 %v4552
      %4582 = vmatprep.subr.mxu0 0.0
      %4583 = vmatpush1.msra.mxu0 %v4551
      %4584 = vmatprep.subr.mxu0 0.0
      %4585 = vmatpush1.msra.mxu0 %v4550
      %4586 = vmatprep.subr.mxu0 0.0
      %4587 = vmatpush1.msra.mxu0 %v4549
      %4588 = vmatprep.subr.mxu0 0.0
      %4589 = vmatpush1.msra.mxu0 %v4548
      %4590 = vmatprep.subr.mxu0 0.0
      %4591 = vmatpush1.msra.mxu0 %v4547
      %4592 = vmatprep.subr.mxu0 0.0
      %4593 = vmatpush1.msra.mxu0 %v4546
      %4594 = vmatprep.subr.mxu0 0.0
      %4595 = vmatpush2.msra.mxu0 0.0
      %4596 = vmatprep.subr.mxu0 0.0
      %4597 = vmatpush2.msra.mxu0 0.0
      %4598 = vmatprep.subr.mxu0 0.0
      %4599 = vmatpush2.msra.mxu0 0.0
      %4600 = vmatprep.subr.mxu0 0.0
      %4601 = vmatpush2.msra.mxu0 0.0
      %4602 = vmatprep.subr.mxu0 0.0
      %4603 = vmatpush2.msra.mxu0 0.0
      %4604 = vmatprep.subr.mxu0 0.0
      %4605 = vmatpush2.msra.mxu0 0.0
      %4606 = vmatprep.subr.mxu0 0.0
      %4607 = vmatpush2.msra.mxu0 0.0
      %4608 = vmatprep.subr.mxu0 0.0
      %4609 = vmatpush2.msra.mxu0 0.0
      %4610 = vmatprep.subr.mxu0 0.0
      %4611 = vmatpush2.msra.mxu0 0.0
      %4612 = vmatprep.subr.mxu0 0.0
      %4613 = vmatpush2.msra.mxu0 0.0
      %4614 = vmatprep.subr.mxu0 0.0
      %4615 = vmatpush2.msra.mxu0 0.0
      %4616 = vmatprep.subr.mxu0 0.0
      %4617 = vmatpush2.msra.mxu0 0.0
      %4618 = vmatprep.subr.mxu0 0.0
      %4619 = vmatpush2.msra.mxu0 0.0
      %4620 = vmatprep.subr.mxu0 0.0
      %4621 = vmatpush2.msra.mxu0 0.0
      %4622 = vmatprep.subr.mxu0 0.0
      %4623 = vmatpush2.msra.mxu0 0.0
      %4624 = vmatprep.subr.mxu0 0.0
      %4625 = vmatpush2.msra.mxu0 0.0
      %4626 = vmatprep.mubr.f32.mxu0 0.0
      %4627 = vmatmul.mubr.f32.gmra.mxu0 %v4537
      %v4628 = vpop.f32.mrf.mxu0
      %v4629 = vadd.f32 0.0, %v4628
      %v4630 = vpop.f32.mrf.mxu0
      %4631 = vmatprep.mubr.f32.mxu0 0.0
      %4632 = vmatmul.mubr.f32.gmra.mxu0 %v4538
      %v4633 = vpop.f32.mrf.mxu0
      %v4634 = vadd.f32 0.0, %v4633
      %v4635 = vpop.f32.mrf.mxu0
      %4636 = vmatprep.mubr.f32.mxu0 0.0
      %4637 = vmatmul.mubr.f32.gmra.mxu0 %v4539
      %v4638 = vpop.f32.mrf.mxu0
      %v4639 = vadd.f32 0.0, %v4638
      %v4640 = vpop.f32.mrf.mxu0
      %4641 = vmatprep.mubr.f32.mxu0 0.0
      %4642 = vmatmul.mubr.f32.gmra.mxu0 %v4540
      %v4643 = vpop.f32.mrf.mxu0
      %v4644 = vadd.f32 0.0, %v4643
      %v4645 = vpop.f32.mrf.mxu0
      %4646 = vmatprep.mubr.f32.mxu0 0.0
      %4647 = vmatmul.mubr.f32.gmra.mxu0 %v4541
      %v4648 = vpop.f32.mrf.mxu0
      %v4649 = vadd.f32 0.0, %v4648
      %v4650 = vpop.f32.mrf.mxu0
      %4651 = vmatprep.mubr.f32.mxu0 0.0
      %4652 = vmatmul.mubr.f32.gmra.mxu0 %v4542
      %v4653 = vpop.f32.mrf.mxu0
      %v4654 = vadd.f32 0.0, %v4653
      %v4655 = vpop.f32.mrf.mxu0
      %4656 = vmatprep.mubr.f32.mxu0 0.0
      %4657 = vmatmul.mubr.f32.gmra.mxu0 %v4543
      %v4658 = vpop.f32.mrf.mxu0
      %v4659 = vadd.f32 0.0, %v4658
      %v4660 = vpop.f32.mrf.mxu0
      %4661 = vmatprep.mubr.f32.mxu0 0.0
      %4662 = vmatmul.mubr.f32.gmra.mxu0 %v4544
      %v4663 = vpop.f32.mrf.mxu0
      %v4664 = vadd.f32 0.0, %v4663
      %v4665 = vpop.f32.mrf.mxu0
      %4666 = vdwg.mxu0
      %v4667 = vadd.f32 %v4529, %v4629
      %v4668 = vadd.f32 %v4530, %v4634
      %v4669 = vadd.f32 %v4531, %v4639
      %v4670 = vadd.f32 %v4532, %v4644
      %v4671 = vadd.f32 %v4533, %v4649
      %v4672 = vadd.f32 %v4534, %v4654
      %v4673 = vadd.f32 %v4535, %v4659
      %v4674 = vadd.f32 %v4536, %v4664
      %v4675 = vld [vmem:[%s4] sm:$0x1]
      %v4677 = vlaneseq
      %v4678 = vshrl.u32 %v4677, 7
      %v4679 = vsub.s32 0, %v4678
      %v4680 = vrot.slane %v4675, %v4679
      %v4682 = vadd.f32 %v4667, %v4680
      %v4683 = vadd.f32 %v4668, %v4680
      %v4684 = vadd.f32 %v4669, %v4680
      %v4685 = vadd.f32 %v4670, %v4680
      %v4686 = vadd.f32 %v4671, %v4680
      %v4687 = vadd.f32 %v4672, %v4680
      %v4688 = vadd.f32 %v4673, %v4680
      %v4689 = vadd.f32 %v4674, %v4680
      %v4690 = vmax.f32 %v4682, 0.0
      %v4691 = vmax.f32 %v4683, 0.0
      %v4692 = vmax.f32 %v4684, 0.0
      %v4693 = vmax.f32 %v4685, 0.0
      %v4694 = vmax.f32 %v4686, 0.0
      %v4695 = vmax.f32 %v4687, 0.0
      %v4696 = vmax.f32 %v4688, 0.0
      %v4697 = vmax.f32 %v4689, 0.0
      %4698 = vst [vmem:[%s224] sm:$0xff] %v4690
      %4699 = vst [vmem:[%s224 + $0x8] sm:$0xff] %v4691
      %4700 = vst [vmem:[%s224 + $0x10] sm:$0xff] %v4692
      %4701 = vst [vmem:[%s224 + $0x18] sm:$0xff] %v4693
      %4702 = vst [vmem:[%s224 + $0x20] sm:$0xff] %v4694
      %4703 = vst [vmem:[%s224 + $0x28] sm:$0xff] %v4695
      %4704 = vst [vmem:[%s224 + $0x30] sm:$0xff] %v4696
      %4705 = vst [vmem:[%s224 + $0x38] sm:$0xff] %v4697
      %p4706 = scmp.lt.s32.totalorder %s16, 1
      %s4707 = scalar_select %p4706, %s16, 1
      %s4708 = smul.addr %s4707, 8
      %s4709 = smul.addr %s4708, 8
      %s4710 = scalar_lea.vmem %s5, %s4709
      // Predicated region
      $region41: #{net_forward.1} parent=39 // pred_check
        %p4711 = pneg %p144
      $region42: #{net_forward.1} parent=39 // pred_check_branch
        %4713 = sbr.rel (%p4711) target = $region44
      $region43: #{net_forward.1} parent=39 // pred_region
        _
      $region44: #{net_forward.1} parent=39 // pred_fallthru
        _
    $region40: #{net_forward.1} parent=5 // pred_fallthru
      _
    %p4714 = scmp.le.s32.totalorder 2, %s11
    // Predicated region
    $region45: #{net_forward.1} parent=5 // pred_check
      %p4715 = pneg %p4714
    $region46: #{net_forward.1} parent=5 // pred_check_branch
      %4717 = sbr.rel (%p4715) target = $region48
    $region47: #{net_forward.1} parent=5 // pred_region
      %s4718 = ssub.s32 %s11, 2
      // Predicated region
      $region49: #{net_forward.1} parent=47 // pred_check
        %p4719 = pneg %p150
      $region50: #{net_forward.1} parent=47 // pred_check_branch
        %4721 = sbr.rel (%p4719) target = $region52
      $region51: #{net_forward.1} parent=47 // pred_region
        %p4722 = scmp.lt.s32.totalorder %s17, 1
        %s4723 = scalar_select %p4722, %s17, 1
        %s4724 = smul.addr %s4723, 8
        %s4725 = smul.addr %s4724, 8
        %s4726 = scalar_lea.vmem %s5, %s4725
      $region52: #{net_forward.1} parent=47 // pred_fallthru
        _
    $region48: #{net_forward.1} parent=5 // pred_fallthru
      _
  $region6: #{net_forward.1} parent=0 // loop_footer
    %s15 = sadd.s32 1, %s11
  $region7: #{net_forward.1} parent=0 // loop_footer_branch
    %10 = sbr.rel target = $region3
  $region8: #{net_forward.1} parent=0 // loop_exit
    _

</llo_original>
